<compile_context>
chip_gen: v7x
topology: tpu7x:2x2x1
jax: 0.10.0
libtpu: 0.0.40
codegen_flags: <defaults>
</compile_context>

<pallas_src>
import functools

import jax
import jax.numpy as jnp
from jax.experimental import pallas as pl
from jax.experimental.pallas import tpu as pltpu


# --------------------------- model configuration ---------------------------

VOCAB = 64
PAD_ID = 1          # RoBERTa pad token id; forward uses input_ids.ne(1) as mask
HIDDEN = 32
NUM_HEADS = 4
HEAD_DIM = HIDDEN // NUM_HEADS
FFN_DIM = 64
NUM_LAYERS = 2
MAX_POS = 32
NUM_LABELS = 2
LN_EPS = 1e-5
VEC_PAD = 128       # lane-padded width of the packed bias/LayerNorm slabs


# ----------------------------- fused encoder kernel -------------------------


def _layernorm(x, g, b, eps):
    mu = jnp.mean(x, axis=-1, keepdims=True)
    var = jnp.mean(jnp.square(x - mu), axis=-1, keepdims=True)
    return (x - mu) * jax.lax.rsqrt(var + eps) * g + b


def _encoder_kernel(
    x_emb_ref, mask_ref, gvec_ref, lvec_ref,
    wqkv_ref, wo_ref, w1_ref, w2_ref,
    cls_w_ref, cls_out_w_ref,
    logits_ref,
    *, B, S, nh, hd, F, L, eps):
    """Whole encoder + classifier head in a single (grid-less) invocation.

    All weights are VMEM-resident; activations (B*S, H) live in vregs across the
    statically unrolled layer loop; the only HBM output is (B, NUM_LABELS).
    """
    H = nh * hd
    M = B * S
    scale = 1.0 / float(hd) ** 0.5

    # Pre-tiled (head-major) additive attention mask: (nh*B, 1, S).
    mask = mask_ref[...]

    # ---- embeddings LayerNorm (gvec rows 0/1 hold gamma/beta).
    x = _layernorm(x_emb_ref[...].astype(jnp.float32),
                   gvec_ref[0:1, :H], gvec_ref[1:2, :H], eps)

    # ---- transformer layers, statically unrolled (L == 2, weights resident).
    for l in range(L):
        bqkv = lvec_ref[l, 0:1, :3 * H]
        bo = lvec_ref[l, 1:2, :H]
        ln1_g = lvec_ref[l, 2:3, :H]
        ln1_b = lvec_ref[l, 3:4, :H]
        b1 = lvec_ref[l, 4:5, :F]
        b2 = lvec_ref[l, 5:6, :H]
        ln2_g = lvec_ref[l, 6:7, :H]
        ln2_b = lvec_ref[l, 7:8, :H]

        # Fused QKV projection: one (M, H) @ (H, 3H) MXU pass.
        qkv = jnp.dot(x, wqkv_ref[l],
                      preferred_element_type=jnp.float32) + bqkv      # (M, 3H)

        # Head-batched attention: fold (head, batch) into one batch dim of size
        # nh*B (head-major) using only lane slices / leading-dim stack+reshape.
        def heads(off):
            blocks = [qkv[:, off + h * hd: off + (h + 1) * hd] for h in range(nh)]
            return jnp.stack(blocks, axis=0).reshape(nh * B, S, hd)

        q = heads(0)          # (nh*B, S, hd), batch index = h*B + b
        k = heads(H)
        v = heads(2 * H)

        s = jnp.einsum("bqd,bkd->bqk", q, k,
                       preferred_element_type=jnp.float32) * scale + mask
        s = s - jnp.max(s, axis=-1, keepdims=True)
        p = jnp.exp(s)
        p = p / jnp.sum(p, axis=-1, keepdims=True)      # exact softmax division
        ctx = jnp.einsum("bqk,bkd->bqd", p, v,
                         preferred_element_type=jnp.float32)          # (nh*B,S,hd)

        # Fold heads back to (M, H): (nh*B,S,hd) -> (nh, M, hd) -> lane concat.
        ctx = ctx.reshape(nh, M, hd)
        ctx = jnp.concatenate([ctx[h] for h in range(nh)], axis=-1)   # (M, H)

        # Attention output projection + residual + LayerNorm.
        attn_out = jnp.dot(ctx, wo_ref[l],
                           preferred_element_type=jnp.float32) + bo
        x = _layernorm(attn_out + x, ln1_g, ln1_b, eps)

        # Feed-forward + residual + LayerNorm.
        h1 = jnp.dot(x, w1_ref[l], preferred_element_type=jnp.float32) + b1
        # TODO(synk): HF RoBERTa uses exact (erf) GELU; tanh approximation kept.
        h1 = jax.nn.gelu(h1, approximate=True)
        ffn_out = jnp.dot(h1, w2_ref[l],
                          preferred_element_type=jnp.float32) + b2
        x = _layernorm(ffn_out + x, ln2_g, ln2_b, eps)

    # ---- classification head on the <s> (first) token per batch.
    cls = x.reshape(B, S, H)[:, 0, :]                                 # (B, H)
    hcls = jnp.tanh(
        jnp.dot(cls, cls_w_ref[...],
                preferred_element_type=jnp.float32) + gvec_ref[2:3, :H])
    logits = jnp.dot(hcls, cls_out_w_ref[...],
                     preferred_element_type=jnp.float32) + gvec_ref[3:4, :NUM_LABELS]
    logits_ref[...] = logits.astype(logits_ref.dtype)


def encoder_forward(packed, x_emb, mask_bh, B, S):
    kernel = functools.partial(
        _encoder_kernel, B=B, S=S, nh=NUM_HEADS, hd=HEAD_DIM,
        F=FFN_DIM, L=NUM_LAYERS, eps=LN_EPS)

    vmem = pl.BlockSpec(memory_space=pltpu.MemorySpace.VMEM)   # whole array in VMEM
    return pl.pallas_call(
        kernel,
        out_shape=jax.ShapeDtypeStruct((B, NUM_LABELS), jnp.float32),
        in_specs=[vmem] * 10,
        out_specs=vmem,
    )(x_emb, mask_bh,
      packed["gvec"], packed["lvec"],
      packed["wqkv"], packed["wo"], packed["w1"], packed["w2"],
      packed["cls_dense_w"], packed["cls_out_w"])


# ------------------------------ parameters ----------------------------------


def init_params(key):
    def nrm(k, shape, scale=0.02):
        return (scale * jax.random.normal(k, shape)).astype(jnp.float32)

    keys = iter(jax.random.split(key, 64))
    params = {
        "word_emb": nrm(next(keys), (VOCAB, HIDDEN)),
        "pos_emb": nrm(next(keys), (MAX_POS + PAD_ID + 1, HIDDEN)),
        "emb_ln_g": jnp.ones((HIDDEN,), jnp.float32),
        "emb_ln_b": jnp.zeros((HIDDEN,), jnp.float32),
        "layers": [],
        "cls_dense_w": nrm(next(keys), (HIDDEN, HIDDEN)),
        "cls_dense_b": jnp.zeros((HIDDEN,), jnp.float32),
        "cls_out_w": nrm(next(keys), (HIDDEN, NUM_LABELS)),
        "cls_out_b": jnp.zeros((NUM_LABELS,), jnp.float32),
    }
    for _ in range(NUM_LAYERS):
        params["layers"].append({
            "wq": nrm(next(keys), (HIDDEN, HIDDEN)),
            "bq": jnp.zeros((HIDDEN,), jnp.float32),
            "wk": nrm(next(keys), (HIDDEN, HIDDEN)),
            "bk": jnp.zeros((HIDDEN,), jnp.float32),
            "wv": nrm(next(keys), (HIDDEN, HIDDEN)),
            "bv": jnp.zeros((HIDDEN,), jnp.float32),
            "wo": nrm(next(keys), (HIDDEN, HIDDEN)),
            "bo": jnp.zeros((HIDDEN,), jnp.float32),
            "ln1_g": jnp.ones((HIDDEN,), jnp.float32),
            "ln1_b": jnp.zeros((HIDDEN,), jnp.float32),
            "w1": nrm(next(keys), (HIDDEN, FFN_DIM)),
            "b1": jnp.zeros((FFN_DIM,), jnp.float32),
            "w2": nrm(next(keys), (FFN_DIM, HIDDEN)),
            "b2": jnp.zeros((HIDDEN,), jnp.float32),
            "ln2_g": jnp.ones((HIDDEN,), jnp.float32),
            "ln2_b": jnp.zeros((HIDDEN,), jnp.float32),
        })
    return params


def pack_params(params):
    """Fuse Q|K|V, stack per-layer matrices along a leading layer axis, and pack
    all tiny bias/LayerNorm vectors into lane-aligned (.., 8, 128) slabs."""
    layers = params["layers"]

    def row(v):                       # 1-D param -> one 128-lane padded row
        v = v.reshape(-1)
        return jnp.pad(v, (0, VEC_PAD - v.shape[0]))

    lvec = jnp.stack([
        jnp.stack([
            row(jnp.concatenate([l["bq"], l["bk"], l["bv"]])),   # row 0: bqkv (3H)
            row(l["bo"]),                                        # row 1
            row(l["ln1_g"]),                                     # row 2
            row(l["ln1_b"]),                                     # row 3
            row(l["b1"]),                                        # row 4 (F)
            row(l["b2"]),                                        # row 5
            row(l["ln2_g"]),                                     # row 6
            row(l["ln2_b"]),                                     # row 7
        ]) for l in layers
    ])                                                           # (L, 8, 128)

    gvec = jnp.stack([
        row(params["emb_ln_g"]),      # row 0
        row(params["emb_ln_b"]),      # row 1
        row(params["cls_dense_b"]),   # row 2
        row(params["cls_out_b"]),     # row 3
    ])                                                           # (4, 128)

    return {
        "gvec": gvec,
        "lvec": lvec,
        "wqkv": jnp.stack([jnp.concatenate([l["wq"], l["wk"], l["wv"]], axis=1)
                           for l in layers]),                    # (L, H, 3H)
        "wo": jnp.stack([l["wo"] for l in layers]),              # (L, H, H)
        "w1": jnp.stack([l["w1"] for l in layers]),              # (L, H, F)
        "w2": jnp.stack([l["w2"] for l in layers]),              # (L, F, H)
        "cls_dense_w": params["cls_dense_w"],                    # (H, H)
        "cls_out_w": params["cls_out_w"],                        # (H, NUM_LABELS)
    }


# ------------------------------ forward pass --------------------------------


def model_forward(packed, word_emb, pos_emb, input_ids):
    """Mirrors Model.forward: encoder(input_ids, attention_mask=input_ids.ne(1))[0]."""
    B, S = input_ids.shape

    attn_mask = input_ids != PAD_ID                       # input_ids.ne(1)
    add_mask = jnp.where(attn_mask, 0.0, -1e9).astype(jnp.float32)
    add_mask = add_mask.reshape(B, 1, S)
    # Head-major tiled mask matching the kernel's fused (head, batch) axis.
    mask_bh = jnp.tile(add_mask, (NUM_HEADS, 1, 1))       # (nh*B, 1, S)

    # RoBERTa embeddings (token/position gathers stay in XLA glue).
    mask_i = attn_mask.astype(jnp.int32)
    pos_ids = jnp.cumsum(mask_i, axis=1) * mask_i + PAD_ID
    x_emb = (word_emb[input_ids] + pos_emb[pos_ids]).reshape(B * S, HIDDEN)

    return encoder_forward(packed, x_emb, mask_bh, B, S)


# ----------------------------------- main ------------------------------------

if __name__ == "__main__":
    key = jax.random.PRNGKey(0)
    k_ids, _ = jax.random.split(key)

    B, S = 2, 8
    input_ids = jax.random.randint(k_ids, (B, S), 2, VOCAB, dtype=jnp.int32)
    input_ids = input_ids.at[:, 0].set(0)          # <s> / CLS token
    input_ids = input_ids.at[:, -2:].set(PAD_ID)   # padding -> masked out

    params = init_params(jax.random.PRNGKey(42))
    packed = pack_params(params)

    fwd = jax.jit(model_forward)
    logits = jax.block_until_ready(
        fwd(packed, params["word_emb"], params["pos_emb"], input_ids))

    assert logits.shape == (B, NUM_LABELS)
    assert bool(jnp.all(jnp.isfinite(logits)))
    print("KERNEL_OK")
</pallas_src>

<mosaic_0001>
module attributes {stable_mosaic.version = 11 : i64} {
  func.func @_encoder_kernel(%arg0: memref<16x32xf32, #tpu.memory_space<vmem>>, %arg1: memref<8x1x8xf32, #tpu.memory_space<vmem>>, %arg2: memref<4x128xf32, #tpu.memory_space<vmem>>, %arg3: memref<2x8x128xf32, #tpu.memory_space<vmem>>, %arg4: memref<2x32x96xf32, #tpu.memory_space<vmem>>, %arg5: memref<2x32x32xf32, #tpu.memory_space<vmem>>, %arg6: memref<2x32x64xf32, #tpu.memory_space<vmem>>, %arg7: memref<2x64x32xf32, #tpu.memory_space<vmem>>, %arg8: memref<32x32xf32, #tpu.memory_space<vmem>>, %arg9: memref<32x2xf32, #tpu.memory_space<vmem>>, %arg10: memref<2x2xf32, #tpu.memory_space<vmem>>) attributes {dimension_semantics = [], scalar_prefetch = 0 : i64, scratch_operands = 0 : i64, tpu.core_type = #tpu.core_type<tc>} {
    %c0 = arith.constant 0 : index
    %c0_0 = arith.constant 0 : index
    %c0_1 = arith.constant 0 : index
    %0 = vector.load %arg1[%c0, %c0_0, %c0_1] : memref<8x1x8xf32, #tpu.memory_space<vmem>>, vector<8x1x8xf32>
    %c0_2 = arith.constant 0 : index
    %c0_3 = arith.constant 0 : index
    %1 = vector.load %arg0[%c0_2, %c0_3] : memref<16x32xf32, #tpu.memory_space<vmem>>, vector<16x32xf32>
    %c0_4 = arith.constant 0 : index
    %c0_5 = arith.constant 0 : index
    %2 = vector.load %arg2[%c0_4, %c0_5] : memref<4x128xf32, #tpu.memory_space<vmem>>, vector<1x32xf32>
    %c1 = arith.constant 1 : index
    %c0_6 = arith.constant 0 : index
    %3 = vector.load %arg2[%c1, %c0_6] : memref<4x128xf32, #tpu.memory_space<vmem>>, vector<1x32xf32>
    %cst = arith.constant dense<0.000000e+00> : vector<16xf32>
    %4 = vector.multi_reduction <add>, %1, %cst [1] : vector<16x32xf32> to vector<16xf32>
    %5 = vector.shape_cast %4 : vector<16xf32> to vector<16x1xf32>
    %cst_7 = arith.constant 3.200000e+01 : f32
    %6 = vector.broadcast %cst_7 : f32 to vector<16x1xf32>
    %7 = arith.divf %5, %6 : vector<16x1xf32>
    %8 = vector.broadcast %7 : vector<16x1xf32> to vector<16x32xf32>
    %9 = arith.subf %1, %8 : vector<16x32xf32>
    %10 = arith.mulf %9, %9 : vector<16x32xf32>
    %cst_8 = arith.constant dense<0.000000e+00> : vector<16xf32>
    %11 = vector.multi_reduction <add>, %10, %cst_8 [1] : vector<16x32xf32> to vector<16xf32>
    %12 = vector.shape_cast %11 : vector<16xf32> to vector<16x1xf32>
    %cst_9 = arith.constant 3.200000e+01 : f32
    %13 = vector.broadcast %cst_9 : f32 to vector<16x1xf32>
    %14 = arith.divf %12, %13 : vector<16x1xf32>
    %15 = vector.broadcast %7 : vector<16x1xf32> to vector<16x32xf32>
    %16 = arith.subf %1, %15 : vector<16x32xf32>
    %cst_10 = arith.constant 9.99999974E-6 : f32
    %17 = vector.broadcast %cst_10 : f32 to vector<16x1xf32>
    %18 = arith.addf %14, %17 : vector<16x1xf32>
    %19 = math.rsqrt %18 : vector<16x1xf32>
    %20 = vector.broadcast %19 : vector<16x1xf32> to vector<16x32xf32>
    %21 = arith.mulf %16, %20 : vector<16x32xf32>
    %22 = vector.broadcast %2 : vector<1x32xf32> to vector<16x32xf32>
    %23 = arith.mulf %21, %22 : vector<16x32xf32>
    %24 = vector.broadcast %3 : vector<1x32xf32> to vector<16x32xf32>
    %25 = arith.addf %23, %24 : vector<16x32xf32>
    %c0_11 = arith.constant 0 : index
    %c0_12 = arith.constant 0 : index
    %c0_13 = arith.constant 0 : index
    %26 = vector.load %arg3[%c0_11, %c0_12, %c0_13] : memref<2x8x128xf32, #tpu.memory_space<vmem>>, vector<1x1x96xf32>
    %27 = vector.shape_cast %26 : vector<1x1x96xf32> to vector<1x96xf32>
    %c0_14 = arith.constant 0 : index
    %c1_15 = arith.constant 1 : index
    %c0_16 = arith.constant 0 : index
    %28 = vector.load %arg3[%c0_14, %c1_15, %c0_16] : memref<2x8x128xf32, #tpu.memory_space<vmem>>, vector<1x1x32xf32>
    %29 = vector.shape_cast %28 : vector<1x1x32xf32> to vector<1x32xf32>
    %c0_17 = arith.constant 0 : index
    %c2 = arith.constant 2 : index
    %c0_18 = arith.constant 0 : index
    %30 = vector.load %arg3[%c0_17, %c2, %c0_18] : memref<2x8x128xf32, #tpu.memory_space<vmem>>, vector<1x1x32xf32>
    %31 = vector.shape_cast %30 : vector<1x1x32xf32> to vector<1x32xf32>
    %c0_19 = arith.constant 0 : index
    %c3 = arith.constant 3 : index
    %c0_20 = arith.constant 0 : index
    %32 = vector.load %arg3[%c0_19, %c3, %c0_20] : memref<2x8x128xf32, #tpu.memory_space<vmem>>, vector<1x1x32xf32>
    %33 = vector.shape_cast %32 : vector<1x1x32xf32> to vector<1x32xf32>
    %c0_21 = arith.constant 0 : index
    %c4 = arith.constant 4 : index
    %c0_22 = arith.constant 0 : index
    %34 = vector.load %arg3[%c0_21, %c4, %c0_22] : memref<2x8x128xf32, #tpu.memory_space<vmem>>, vector<1x1x64xf32>
    %35 = vector.shape_cast %34 : vector<1x1x64xf32> to vector<1x64xf32>
    %c0_23 = arith.constant 0 : index
    %c5 = arith.constant 5 : index
    %c0_24 = arith.constant 0 : index
    %36 = vector.load %arg3[%c0_23, %c5, %c0_24] : memref<2x8x128xf32, #tpu.memory_space<vmem>>, vector<1x1x32xf32>
    %37 = vector.shape_cast %36 : vector<1x1x32xf32> to vector<1x32xf32>
    %c0_25 = arith.constant 0 : index
    %c6 = arith.constant 6 : index
    %c0_26 = arith.constant 0 : index
    %38 = vector.load %arg3[%c0_25, %c6, %c0_26] : memref<2x8x128xf32, #tpu.memory_space<vmem>>, vector<1x1x32xf32>
    %39 = vector.shape_cast %38 : vector<1x1x32xf32> to vector<1x32xf32>
    %c0_27 = arith.constant 0 : index
    %c7 = arith.constant 7 : index
    %c0_28 = arith.constant 0 : index
    %40 = vector.load %arg3[%c0_27, %c7, %c0_28] : memref<2x8x128xf32, #tpu.memory_space<vmem>>, vector<1x1x32xf32>
    %41 = vector.shape_cast %40 : vector<1x1x32xf32> to vector<1x32xf32>
    %c0_29 = arith.constant 0 : index
    %c0_30 = arith.constant 0 : index
    %c0_31 = arith.constant 0 : index
    %42 = vector.load %arg4[%c0_29, %c0_30, %c0_31] : memref<2x32x96xf32, #tpu.memory_space<vmem>>, vector<1x32x96xf32>
    %43 = vector.shape_cast %42 : vector<1x32x96xf32> to vector<32x96xf32>
    %cst_32 = arith.constant dense<0.000000e+00> : vector<16x96xf32>
    %44 = tpu.matmul %25, %43, %cst_32 {dimension_numbers = #tpu.dot_dimension_numbers<[1], [0], [0], [1], [0, 0, 1, 1], [], []>} : vector<16x32xf32>, vector<32x96xf32>, vector<16x96xf32> -> vector<16x96xf32>
    %45 = vector.broadcast %27 : vector<1x96xf32> to vector<16x96xf32>
    %46 = arith.addf %44, %45 : vector<16x96xf32>
    %47 = vector.extract_strided_slice %46 {offsets = [0, 0], sizes = [16, 8], strides = [1, 1]} : vector<16x96xf32> to vector<16x8xf32>
    %48 = vector.extract_strided_slice %46 {offsets = [0, 8], sizes = [16, 8], strides = [1, 1]} : vector<16x96xf32> to vector<16x8xf32>
    %49 = vector.extract_strided_slice %46 {offsets = [0, 16], sizes = [16, 8], strides = [1, 1]} : vector<16x96xf32> to vector<16x8xf32>
    %50 = vector.extract_strided_slice %46 {offsets = [0, 24], sizes = [16, 8], strides = [1, 1]} : vector<16x96xf32> to vector<16x8xf32>
    %51 = vector.shape_cast %47 : vector<16x8xf32> to vector<1x16x8xf32>
    %52 = vector.shape_cast %48 : vector<16x8xf32> to vector<1x16x8xf32>
    %53 = vector.shape_cast %49 : vector<16x8xf32> to vector<1x16x8xf32>
    %54 = vector.shape_cast %50 : vector<16x8xf32> to vector<1x16x8xf32>
    %55 = tpu.concatenate %51, %52, %53, %54 in 0 : vector<1x16x8xf32>, vector<1x16x8xf32>, vector<1x16x8xf32>, vector<1x16x8xf32> -> vector<4x16x8xf32>
    %56 = vector.shape_cast %55 : vector<4x16x8xf32> to vector<8x8x8xf32>
    %57 = vector.extract_strided_slice %46 {offsets = [0, 32], sizes = [16, 8], strides = [1, 1]} : vector<16x96xf32> to vector<16x8xf32>
    %58 = vector.extract_strided_slice %46 {offsets = [0, 40], sizes = [16, 8], strides = [1, 1]} : vector<16x96xf32> to vector<16x8xf32>
    %59 = vector.extract_strided_slice %46 {offsets = [0, 48], sizes = [16, 8], strides = [1, 1]} : vector<16x96xf32> to vector<16x8xf32>
    %60 = vector.extract_strided_slice %46 {offsets = [0, 56], sizes = [16, 8], strides = [1, 1]} : vector<16x96xf32> to vector<16x8xf32>
    %61 = vector.shape_cast %57 : vector<16x8xf32> to vector<1x16x8xf32>
    %62 = vector.shape_cast %58 : vector<16x8xf32> to vector<1x16x8xf32>
    %63 = vector.shape_cast %59 : vector<16x8xf32> to vector<1x16x8xf32>
    %64 = vector.shape_cast %60 : vector<16x8xf32> to vector<1x16x8xf32>
    %65 = tpu.concatenate %61, %62, %63, %64 in 0 : vector<1x16x8xf32>, vector<1x16x8xf32>, vector<1x16x8xf32>, vector<1x16x8xf32> -> vector<4x16x8xf32>
    %66 = vector.shape_cast %65 : vector<4x16x8xf32> to vector<8x8x8xf32>
    %67 = vector.extract_strided_slice %46 {offsets = [0, 64], sizes = [16, 8], strides = [1, 1]} : vector<16x96xf32> to vector<16x8xf32>
    %68 = vector.extract_strided_slice %46 {offsets = [0, 72], sizes = [16, 8], strides = [1, 1]} : vector<16x96xf32> to vector<16x8xf32>
    %69 = vector.extract_strided_slice %46 {offsets = [0, 80], sizes = [16, 8], strides = [1, 1]} : vector<16x96xf32> to vector<16x8xf32>
    %70 = vector.extract_strided_slice %46 {offsets = [0, 88], sizes = [16, 8], strides = [1, 1]} : vector<16x96xf32> to vector<16x8xf32>
    %71 = vector.shape_cast %67 : vector<16x8xf32> to vector<1x16x8xf32>
    %72 = vector.shape_cast %68 : vector<16x8xf32> to vector<1x16x8xf32>
    %73 = vector.shape_cast %69 : vector<16x8xf32> to vector<1x16x8xf32>
    %74 = vector.shape_cast %70 : vector<16x8xf32> to vector<1x16x8xf32>
    %75 = tpu.concatenate %71, %72, %73, %74 in 0 : vector<1x16x8xf32>, vector<1x16x8xf32>, vector<1x16x8xf32>, vector<1x16x8xf32> -> vector<4x16x8xf32>
    %76 = vector.shape_cast %75 : vector<4x16x8xf32> to vector<8x8x8xf32>
    "tpu.trace_start"() <{level = 10 : i32, message = "bqd,bkd->bqk"}> : () -> ()
    %cst_33 = arith.constant dense<0.000000e+00> : vector<8x8x8xf32>
    %77 = tpu.matmul %56, %66, %cst_33 {dimension_numbers = #tpu.dot_dimension_numbers<[2], [2], [1], [1], [0, 0, 0, 1, 1, 1], [0], [0]>} : vector<8x8x8xf32>, vector<8x8x8xf32>, vector<8x8x8xf32> -> vector<8x8x8xf32>
    "tpu.trace_stop"() : () -> ()
    %cst_34 = arith.constant 0.353553385 : f32
    %78 = vector.broadcast %cst_34 : f32 to vector<8x8x8xf32>
    %79 = arith.mulf %77, %78 : vector<8x8x8xf32>
    %80 = vector.broadcast %0 : vector<8x1x8xf32> to vector<8x8x8xf32>
    %81 = arith.addf %79, %80 : vector<8x8x8xf32>
    %cst_35 = arith.constant dense<0xFF800000> : vector<8x8xf32>
    %82 = vector.multi_reduction <maximumf>, %81, %cst_35 [2] : vector<8x8x8xf32> to vector<8x8xf32>
    %83 = vector.shape_cast %82 : vector<8x8xf32> to vector<8x8x1xf32>
    %84 = vector.broadcast %83 : vector<8x8x1xf32> to vector<8x8x8xf32>
    %85 = arith.subf %81, %84 : vector<8x8x8xf32>
    %86 = math.exp %85 : vector<8x8x8xf32>
    %cst_36 = arith.constant dense<0.000000e+00> : vector<8x8xf32>
    %87 = vector.multi_reduction <add>, %86, %cst_36 [2] : vector<8x8x8xf32> to vector<8x8xf32>
    %88 = vector.shape_cast %87 : vector<8x8xf32> to vector<8x8x1xf32>
    %89 = vector.broadcast %88 : vector<8x8x1xf32> to vector<8x8x8xf32>
    %90 = arith.divf %86, %89 : vector<8x8x8xf32>
    "tpu.trace_start"() <{level = 10 : i32, message = "bqk,bkd->bqd"}> : () -> ()
    %cst_37 = arith.constant dense<0.000000e+00> : vector<8x8x8xf32>
    %91 = tpu.matmul %90, %76, %cst_37 {dimension_numbers = #tpu.dot_dimension_numbers<[2], [1], [1], [2], [0, 0, 0, 1, 1, 2], [0], [0]>} : vector<8x8x8xf32>, vector<8x8x8xf32>, vector<8x8x8xf32> -> vector<8x8x8xf32>
    "tpu.trace_stop"() : () -> ()
    %92 = vector.shape_cast %91 : vector<8x8x8xf32> to vector<4x16x8xf32>
    %93 = vector.extract_strided_slice %92 {offsets = [0, 0, 0], sizes = [1, 16, 8], strides = [1, 1, 1]} : vector<4x16x8xf32> to vector<1x16x8xf32>
    %94 = vector.shape_cast %93 : vector<1x16x8xf32> to vector<16x8xf32>
    %95 = vector.extract_strided_slice %92 {offsets = [1, 0, 0], sizes = [1, 16, 8], strides = [1, 1, 1]} : vector<4x16x8xf32> to vector<1x16x8xf32>
    %96 = vector.shape_cast %95 : vector<1x16x8xf32> to vector<16x8xf32>
    %97 = vector.extract_strided_slice %92 {offsets = [2, 0, 0], sizes = [1, 16, 8], strides = [1, 1, 1]} : vector<4x16x8xf32> to vector<1x16x8xf32>
    %98 = vector.shape_cast %97 : vector<1x16x8xf32> to vector<16x8xf32>
    %99 = vector.extract_strided_slice %92 {offsets = [3, 0, 0], sizes = [1, 16, 8], strides = [1, 1, 1]} : vector<4x16x8xf32> to vector<1x16x8xf32>
    %100 = vector.shape_cast %99 : vector<1x16x8xf32> to vector<16x8xf32>
    %101 = tpu.concatenate %94, %96, %98, %100 in 1 : vector<16x8xf32>, vector<16x8xf32>, vector<16x8xf32>, vector<16x8xf32> -> vector<16x32xf32>
    %c0_38 = arith.constant 0 : index
    %c0_39 = arith.constant 0 : index
    %c0_40 = arith.constant 0 : index
    %102 = vector.load %arg5[%c0_38, %c0_39, %c0_40] : memref<2x32x32xf32, #tpu.memory_space<vmem>>, vector<1x32x32xf32>
    %103 = vector.shape_cast %102 : vector<1x32x32xf32> to vector<32x32xf32>
    %cst_41 = arith.constant dense<0.000000e+00> : vector<16x32xf32>
    %104 = tpu.matmul %101, %103, %cst_41 {dimension_numbers = #tpu.dot_dimension_numbers<[1], [0], [0], [1], [0, 0, 1, 1], [], []>} : vector<16x32xf32>, vector<32x32xf32>, vector<16x32xf32> -> vector<16x32xf32>
    %105 = vector.broadcast %29 : vector<1x32xf32> to vector<16x32xf32>
    %106 = arith.addf %104, %105 : vector<16x32xf32>
    %107 = arith.addf %106, %25 : vector<16x32xf32>
    %cst_42 = arith.constant dense<0.000000e+00> : vector<16xf32>
    %108 = vector.multi_reduction <add>, %107, %cst_42 [1] : vector<16x32xf32> to vector<16xf32>
    %109 = vector.shape_cast %108 : vector<16xf32> to vector<16x1xf32>
    %cst_43 = arith.constant 3.200000e+01 : f32
    %110 = vector.broadcast %cst_43 : f32 to vector<16x1xf32>
    %111 = arith.divf %109, %110 : vector<16x1xf32>
    %112 = vector.broadcast %111 : vector<16x1xf32> to vector<16x32xf32>
    %113 = arith.subf %107, %112 : vector<16x32xf32>
    %114 = arith.mulf %113, %113 : vector<16x32xf32>
    %cst_44 = arith.constant dense<0.000000e+00> : vector<16xf32>
    %115 = vector.multi_reduction <add>, %114, %cst_44 [1] : vector<16x32xf32> to vector<16xf32>
    %116 = vector.shape_cast %115 : vector<16xf32> to vector<16x1xf32>
    %cst_45 = arith.constant 3.200000e+01 : f32
    %117 = vector.broadcast %cst_45 : f32 to vector<16x1xf32>
    %118 = arith.divf %116, %117 : vector<16x1xf32>
    %119 = vector.broadcast %111 : vector<16x1xf32> to vector<16x32xf32>
    %120 = arith.subf %107, %119 : vector<16x32xf32>
    %cst_46 = arith.constant 9.99999974E-6 : f32
    %121 = vector.broadcast %cst_46 : f32 to vector<16x1xf32>
    %122 = arith.addf %118, %121 : vector<16x1xf32>
    %123 = math.rsqrt %122 : vector<16x1xf32>
    %124 = vector.broadcast %123 : vector<16x1xf32> to vector<16x32xf32>
    %125 = arith.mulf %120, %124 : vector<16x32xf32>
    %126 = vector.broadcast %31 : vector<1x32xf32> to vector<16x32xf32>
    %127 = arith.mulf %125, %126 : vector<16x32xf32>
    %128 = vector.broadcast %33 : vector<1x32xf32> to vector<16x32xf32>
    %129 = arith.addf %127, %128 : vector<16x32xf32>
    %c0_47 = arith.constant 0 : index
    %c0_48 = arith.constant 0 : index
    %c0_49 = arith.constant 0 : index
    %130 = vector.load %arg6[%c0_47, %c0_48, %c0_49] : memref<2x32x64xf32, #tpu.memory_space<vmem>>, vector<1x32x64xf32>
    %131 = vector.shape_cast %130 : vector<1x32x64xf32> to vector<32x64xf32>
    %cst_50 = arith.constant dense<0.000000e+00> : vector<16x64xf32>
    %132 = tpu.matmul %129, %131, %cst_50 {dimension_numbers = #tpu.dot_dimension_numbers<[1], [0], [0], [1], [0, 0, 1, 1], [], []>} : vector<16x32xf32>, vector<32x64xf32>, vector<16x64xf32> -> vector<16x64xf32>
    %133 = vector.broadcast %35 : vector<1x64xf32> to vector<16x64xf32>
    %134 = arith.addf %132, %133 : vector<16x64xf32>
    %135 = arith.mulf %134, %134 : vector<16x64xf32>
    %136 = arith.mulf %134, %135 : vector<16x64xf32>
    %cst_51 = arith.constant 4.471500e-02 : f32
    %137 = vector.broadcast %cst_51 : f32 to vector<16x64xf32>
    %138 = arith.mulf %137, %136 : vector<16x64xf32>
    %139 = arith.addf %134, %138 : vector<16x64xf32>
    %cst_52 = arith.constant 0.797884583 : f32
    %140 = vector.broadcast %cst_52 : f32 to vector<16x64xf32>
    %141 = arith.mulf %140, %139 : vector<16x64xf32>
    %142 = math.tanh %141 : vector<16x64xf32>
    %cst_53 = arith.constant 1.000000e+00 : f32
    %143 = vector.broadcast %cst_53 : f32 to vector<16x64xf32>
    %144 = arith.addf %143, %142 : vector<16x64xf32>
    %cst_54 = arith.constant 5.000000e-01 : f32
    %145 = vector.broadcast %cst_54 : f32 to vector<16x64xf32>
    %146 = arith.mulf %145, %144 : vector<16x64xf32>
    %147 = arith.mulf %134, %146 : vector<16x64xf32>
    %c0_55 = arith.constant 0 : index
    %c0_56 = arith.constant 0 : index
    %c0_57 = arith.constant 0 : index
    %148 = vector.load %arg7[%c0_55, %c0_56, %c0_57] : memref<2x64x32xf32, #tpu.memory_space<vmem>>, vector<1x64x32xf32>
    %149 = vector.shape_cast %148 : vector<1x64x32xf32> to vector<64x32xf32>
    %cst_58 = arith.constant dense<0.000000e+00> : vector<16x32xf32>
    %150 = tpu.matmul %147, %149, %cst_58 {dimension_numbers = #tpu.dot_dimension_numbers<[1], [0], [0], [1], [0, 0, 1, 1], [], []>} : vector<16x64xf32>, vector<64x32xf32>, vector<16x32xf32> -> vector<16x32xf32>
    %151 = vector.broadcast %37 : vector<1x32xf32> to vector<16x32xf32>
    %152 = arith.addf %150, %151 : vector<16x32xf32>
    %153 = arith.addf %152, %129 : vector<16x32xf32>
    %cst_59 = arith.constant dense<0.000000e+00> : vector<16xf32>
    %154 = vector.multi_reduction <add>, %153, %cst_59 [1] : vector<16x32xf32> to vector<16xf32>
    %155 = vector.shape_cast %154 : vector<16xf32> to vector<16x1xf32>
    %cst_60 = arith.constant 3.200000e+01 : f32
    %156 = vector.broadcast %cst_60 : f32 to vector<16x1xf32>
    %157 = arith.divf %155, %156 : vector<16x1xf32>
    %158 = vector.broadcast %157 : vector<16x1xf32> to vector<16x32xf32>
    %159 = arith.subf %153, %158 : vector<16x32xf32>
    %160 = arith.mulf %159, %159 : vector<16x32xf32>
    %cst_61 = arith.constant dense<0.000000e+00> : vector<16xf32>
    %161 = vector.multi_reduction <add>, %160, %cst_61 [1] : vector<16x32xf32> to vector<16xf32>
    %162 = vector.shape_cast %161 : vector<16xf32> to vector<16x1xf32>
    %cst_62 = arith.constant 3.200000e+01 : f32
    %163 = vector.broadcast %cst_62 : f32 to vector<16x1xf32>
    %164 = arith.divf %162, %163 : vector<16x1xf32>
    %165 = vector.broadcast %157 : vector<16x1xf32> to vector<16x32xf32>
    %166 = arith.subf %153, %165 : vector<16x32xf32>
    %cst_63 = arith.constant 9.99999974E-6 : f32
    %167 = vector.broadcast %cst_63 : f32 to vector<16x1xf32>
    %168 = arith.addf %164, %167 : vector<16x1xf32>
    %169 = math.rsqrt %168 : vector<16x1xf32>
    %170 = vector.broadcast %169 : vector<16x1xf32> to vector<16x32xf32>
    %171 = arith.mulf %166, %170 : vector<16x32xf32>
    %172 = vector.broadcast %39 : vector<1x32xf32> to vector<16x32xf32>
    %173 = arith.mulf %171, %172 : vector<16x32xf32>
    %174 = vector.broadcast %41 : vector<1x32xf32> to vector<16x32xf32>
    %175 = arith.addf %173, %174 : vector<16x32xf32>
    %c1_64 = arith.constant 1 : index
    %c0_65 = arith.constant 0 : index
    %c0_66 = arith.constant 0 : index
    %176 = vector.load %arg3[%c1_64, %c0_65, %c0_66] : memref<2x8x128xf32, #tpu.memory_space<vmem>>, vector<1x1x96xf32>
    %177 = vector.shape_cast %176 : vector<1x1x96xf32> to vector<1x96xf32>
    %c1_67 = arith.constant 1 : index
    %c1_68 = arith.constant 1 : index
    %c0_69 = arith.constant 0 : index
    %178 = vector.load %arg3[%c1_67, %c1_68, %c0_69] : memref<2x8x128xf32, #tpu.memory_space<vmem>>, vector<1x1x32xf32>
    %179 = vector.shape_cast %178 : vector<1x1x32xf32> to vector<1x32xf32>
    %c1_70 = arith.constant 1 : index
    %c2_71 = arith.constant 2 : index
    %c0_72 = arith.constant 0 : index
    %180 = vector.load %arg3[%c1_70, %c2_71, %c0_72] : memref<2x8x128xf32, #tpu.memory_space<vmem>>, vector<1x1x32xf32>
    %181 = vector.shape_cast %180 : vector<1x1x32xf32> to vector<1x32xf32>
    %c1_73 = arith.constant 1 : index
    %c3_74 = arith.constant 3 : index
    %c0_75 = arith.constant 0 : index
    %182 = vector.load %arg3[%c1_73, %c3_74, %c0_75] : memref<2x8x128xf32, #tpu.memory_space<vmem>>, vector<1x1x32xf32>
    %183 = vector.shape_cast %182 : vector<1x1x32xf32> to vector<1x32xf32>
    %c1_76 = arith.constant 1 : index
    %c4_77 = arith.constant 4 : index
    %c0_78 = arith.constant 0 : index
    %184 = vector.load %arg3[%c1_76, %c4_77, %c0_78] : memref<2x8x128xf32, #tpu.memory_space<vmem>>, vector<1x1x64xf32>
    %185 = vector.shape_cast %184 : vector<1x1x64xf32> to vector<1x64xf32>
    %c1_79 = arith.constant 1 : index
    %c5_80 = arith.constant 5 : index
    %c0_81 = arith.constant 0 : index
    %186 = vector.load %arg3[%c1_79, %c5_80, %c0_81] : memref<2x8x128xf32, #tpu.memory_space<vmem>>, vector<1x1x32xf32>
    %187 = vector.shape_cast %186 : vector<1x1x32xf32> to vector<1x32xf32>
    %c1_82 = arith.constant 1 : index
    %c6_83 = arith.constant 6 : index
    %c0_84 = arith.constant 0 : index
    %188 = vector.load %arg3[%c1_82, %c6_83, %c0_84] : memref<2x8x128xf32, #tpu.memory_space<vmem>>, vector<1x1x32xf32>
    %189 = vector.shape_cast %188 : vector<1x1x32xf32> to vector<1x32xf32>
    %c1_85 = arith.constant 1 : index
    %c7_86 = arith.constant 7 : index
    %c0_87 = arith.constant 0 : index
    %190 = vector.load %arg3[%c1_85, %c7_86, %c0_87] : memref<2x8x128xf32, #tpu.memory_space<vmem>>, vector<1x1x32xf32>
    %191 = vector.shape_cast %190 : vector<1x1x32xf32> to vector<1x32xf32>
    %c1_88 = arith.constant 1 : index
    %c0_89 = arith.constant 0 : index
    %c0_90 = arith.constant 0 : index
    %192 = vector.load %arg4[%c1_88, %c0_89, %c0_90] : memref<2x32x96xf32, #tpu.memory_space<vmem>>, vector<1x32x96xf32>
    %193 = vector.shape_cast %192 : vector<1x32x96xf32> to vector<32x96xf32>
    %cst_91 = arith.constant dense<0.000000e+00> : vector<16x96xf32>
    %194 = tpu.matmul %175, %193, %cst_91 {dimension_numbers = #tpu.dot_dimension_numbers<[1], [0], [0], [1], [0, 0, 1, 1], [], []>} : vector<16x32xf32>, vector<32x96xf32>, vector<16x96xf32> -> vector<16x96xf32>
    %195 = vector.broadcast %177 : vector<1x96xf32> to vector<16x96xf32>
    %196 = arith.addf %194, %195 : vector<16x96xf32>
    %197 = vector.extract_strided_slice %196 {offsets = [0, 0], sizes = [16, 8], strides = [1, 1]} : vector<16x96xf32> to vector<16x8xf32>
    %198 = vector.extract_strided_slice %196 {offsets = [0, 8], sizes = [16, 8], strides = [1, 1]} : vector<16x96xf32> to vector<16x8xf32>
    %199 = vector.extract_strided_slice %196 {offsets = [0, 16], sizes = [16, 8], strides = [1, 1]} : vector<16x96xf32> to vector<16x8xf32>
    %200 = vector.extract_strided_slice %196 {offsets = [0, 24], sizes = [16, 8], strides = [1, 1]} : vector<16x96xf32> to vector<16x8xf32>
    %201 = vector.shape_cast %197 : vector<16x8xf32> to vector<1x16x8xf32>
    %202 = vector.shape_cast %198 : vector<16x8xf32> to vector<1x16x8xf32>
    %203 = vector.shape_cast %199 : vector<16x8xf32> to vector<1x16x8xf32>
    %204 = vector.shape_cast %200 : vector<16x8xf32> to vector<1x16x8xf32>
    %205 = tpu.concatenate %201, %202, %203, %204 in 0 : vector<1x16x8xf32>, vector<1x16x8xf32>, vector<1x16x8xf32>, vector<1x16x8xf32> -> vector<4x16x8xf32>
    %206 = vector.shape_cast %205 : vector<4x16x8xf32> to vector<8x8x8xf32>
    %207 = vector.extract_strided_slice %196 {offsets = [0, 32], sizes = [16, 8], strides = [1, 1]} : vector<16x96xf32> to vector<16x8xf32>
    %208 = vector.extract_strided_slice %196 {offsets = [0, 40], sizes = [16, 8], strides = [1, 1]} : vector<16x96xf32> to vector<16x8xf32>
    %209 = vector.extract_strided_slice %196 {offsets = [0, 48], sizes = [16, 8], strides = [1, 1]} : vector<16x96xf32> to vector<16x8xf32>
    %210 = vector.extract_strided_slice %196 {offsets = [0, 56], sizes = [16, 8], strides = [1, 1]} : vector<16x96xf32> to vector<16x8xf32>
    %211 = vector.shape_cast %207 : vector<16x8xf32> to vector<1x16x8xf32>
    %212 = vector.shape_cast %208 : vector<16x8xf32> to vector<1x16x8xf32>
    %213 = vector.shape_cast %209 : vector<16x8xf32> to vector<1x16x8xf32>
    %214 = vector.shape_cast %210 : vector<16x8xf32> to vector<1x16x8xf32>
    %215 = tpu.concatenate %211, %212, %213, %214 in 0 : vector<1x16x8xf32>, vector<1x16x8xf32>, vector<1x16x8xf32>, vector<1x16x8xf32> -> vector<4x16x8xf32>
    %216 = vector.shape_cast %215 : vector<4x16x8xf32> to vector<8x8x8xf32>
    %217 = vector.extract_strided_slice %196 {offsets = [0, 64], sizes = [16, 8], strides = [1, 1]} : vector<16x96xf32> to vector<16x8xf32>
    %218 = vector.extract_strided_slice %196 {offsets = [0, 72], sizes = [16, 8], strides = [1, 1]} : vector<16x96xf32> to vector<16x8xf32>
    %219 = vector.extract_strided_slice %196 {offsets = [0, 80], sizes = [16, 8], strides = [1, 1]} : vector<16x96xf32> to vector<16x8xf32>
    %220 = vector.extract_strided_slice %196 {offsets = [0, 88], sizes = [16, 8], strides = [1, 1]} : vector<16x96xf32> to vector<16x8xf32>
    %221 = vector.shape_cast %217 : vector<16x8xf32> to vector<1x16x8xf32>
    %222 = vector.shape_cast %218 : vector<16x8xf32> to vector<1x16x8xf32>
    %223 = vector.shape_cast %219 : vector<16x8xf32> to vector<1x16x8xf32>
    %224 = vector.shape_cast %220 : vector<16x8xf32> to vector<1x16x8xf32>
    %225 = tpu.concatenate %221, %222, %223, %224 in 0 : vector<1x16x8xf32>, vector<1x16x8xf32>, vector<1x16x8xf32>, vector<1x16x8xf32> -> vector<4x16x8xf32>
    %226 = vector.shape_cast %225 : vector<4x16x8xf32> to vector<8x8x8xf32>
    "tpu.trace_start"() <{level = 10 : i32, message = "bqd,bkd->bqk"}> : () -> ()
    %cst_92 = arith.constant dense<0.000000e+00> : vector<8x8x8xf32>
    %227 = tpu.matmul %206, %216, %cst_92 {dimension_numbers = #tpu.dot_dimension_numbers<[2], [2], [1], [1], [0, 0, 0, 1, 1, 1], [0], [0]>} : vector<8x8x8xf32>, vector<8x8x8xf32>, vector<8x8x8xf32> -> vector<8x8x8xf32>
    "tpu.trace_stop"() : () -> ()
    %cst_93 = arith.constant 0.353553385 : f32
    %228 = vector.broadcast %cst_93 : f32 to vector<8x8x8xf32>
    %229 = arith.mulf %227, %228 : vector<8x8x8xf32>
    %230 = vector.broadcast %0 : vector<8x1x8xf32> to vector<8x8x8xf32>
    %231 = arith.addf %229, %230 : vector<8x8x8xf32>
    %cst_94 = arith.constant dense<0xFF800000> : vector<8x8xf32>
    %232 = vector.multi_reduction <maximumf>, %231, %cst_94 [2] : vector<8x8x8xf32> to vector<8x8xf32>
    %233 = vector.shape_cast %232 : vector<8x8xf32> to vector<8x8x1xf32>
    %234 = vector.broadcast %233 : vector<8x8x1xf32> to vector<8x8x8xf32>
    %235 = arith.subf %231, %234 : vector<8x8x8xf32>
    %236 = math.exp %235 : vector<8x8x8xf32>
    %cst_95 = arith.constant dense<0.000000e+00> : vector<8x8xf32>
    %237 = vector.multi_reduction <add>, %236, %cst_95 [2] : vector<8x8x8xf32> to vector<8x8xf32>
    %238 = vector.shape_cast %237 : vector<8x8xf32> to vector<8x8x1xf32>
    %239 = vector.broadcast %238 : vector<8x8x1xf32> to vector<8x8x8xf32>
    %240 = arith.divf %236, %239 : vector<8x8x8xf32>
    "tpu.trace_start"() <{level = 10 : i32, message = "bqk,bkd->bqd"}> : () -> ()
    %cst_96 = arith.constant dense<0.000000e+00> : vector<8x8x8xf32>
    %241 = tpu.matmul %240, %226, %cst_96 {dimension_numbers = #tpu.dot_dimension_numbers<[2], [1], [1], [2], [0, 0, 0, 1, 1, 2], [0], [0]>} : vector<8x8x8xf32>, vector<8x8x8xf32>, vector<8x8x8xf32> -> vector<8x8x8xf32>
    "tpu.trace_stop"() : () -> ()
    %242 = vector.shape_cast %241 : vector<8x8x8xf32> to vector<4x16x8xf32>
    %243 = vector.extract_strided_slice %242 {offsets = [0, 0, 0], sizes = [1, 16, 8], strides = [1, 1, 1]} : vector<4x16x8xf32> to vector<1x16x8xf32>
    %244 = vector.shape_cast %243 : vector<1x16x8xf32> to vector<16x8xf32>
    %245 = vector.extract_strided_slice %242 {offsets = [1, 0, 0], sizes = [1, 16, 8], strides = [1, 1, 1]} : vector<4x16x8xf32> to vector<1x16x8xf32>
    %246 = vector.shape_cast %245 : vector<1x16x8xf32> to vector<16x8xf32>
    %247 = vector.extract_strided_slice %242 {offsets = [2, 0, 0], sizes = [1, 16, 8], strides = [1, 1, 1]} : vector<4x16x8xf32> to vector<1x16x8xf32>
    %248 = vector.shape_cast %247 : vector<1x16x8xf32> to vector<16x8xf32>
    %249 = vector.extract_strided_slice %242 {offsets = [3, 0, 0], sizes = [1, 16, 8], strides = [1, 1, 1]} : vector<4x16x8xf32> to vector<1x16x8xf32>
    %250 = vector.shape_cast %249 : vector<1x16x8xf32> to vector<16x8xf32>
    %251 = tpu.concatenate %244, %246, %248, %250 in 1 : vector<16x8xf32>, vector<16x8xf32>, vector<16x8xf32>, vector<16x8xf32> -> vector<16x32xf32>
    %c1_97 = arith.constant 1 : index
    %c0_98 = arith.constant 0 : index
    %c0_99 = arith.constant 0 : index
    %252 = vector.load %arg5[%c1_97, %c0_98, %c0_99] : memref<2x32x32xf32, #tpu.memory_space<vmem>>, vector<1x32x32xf32>
    %253 = vector.shape_cast %252 : vector<1x32x32xf32> to vector<32x32xf32>
    %cst_100 = arith.constant dense<0.000000e+00> : vector<16x32xf32>
    %254 = tpu.matmul %251, %253, %cst_100 {dimension_numbers = #tpu.dot_dimension_numbers<[1], [0], [0], [1], [0, 0, 1, 1], [], []>} : vector<16x32xf32>, vector<32x32xf32>, vector<16x32xf32> -> vector<16x32xf32>
    %255 = vector.broadcast %179 : vector<1x32xf32> to vector<16x32xf32>
    %256 = arith.addf %254, %255 : vector<16x32xf32>
    %257 = arith.addf %256, %175 : vector<16x32xf32>
    %cst_101 = arith.constant dense<0.000000e+00> : vector<16xf32>
    %258 = vector.multi_reduction <add>, %257, %cst_101 [1] : vector<16x32xf32> to vector<16xf32>
    %259 = vector.shape_cast %258 : vector<16xf32> to vector<16x1xf32>
    %cst_102 = arith.constant 3.200000e+01 : f32
    %260 = vector.broadcast %cst_102 : f32 to vector<16x1xf32>
    %261 = arith.divf %259, %260 : vector<16x1xf32>
    %262 = vector.broadcast %261 : vector<16x1xf32> to vector<16x32xf32>
    %263 = arith.subf %257, %262 : vector<16x32xf32>
    %264 = arith.mulf %263, %263 : vector<16x32xf32>
    %cst_103 = arith.constant dense<0.000000e+00> : vector<16xf32>
    %265 = vector.multi_reduction <add>, %264, %cst_103 [1] : vector<16x32xf32> to vector<16xf32>
    %266 = vector.shape_cast %265 : vector<16xf32> to vector<16x1xf32>
    %cst_104 = arith.constant 3.200000e+01 : f32
    %267 = vector.broadcast %cst_104 : f32 to vector<16x1xf32>
    %268 = arith.divf %266, %267 : vector<16x1xf32>
    %269 = vector.broadcast %261 : vector<16x1xf32> to vector<16x32xf32>
    %270 = arith.subf %257, %269 : vector<16x32xf32>
    %cst_105 = arith.constant 9.99999974E-6 : f32
    %271 = vector.broadcast %cst_105 : f32 to vector<16x1xf32>
    %272 = arith.addf %268, %271 : vector<16x1xf32>
    %273 = math.rsqrt %272 : vector<16x1xf32>
    %274 = vector.broadcast %273 : vector<16x1xf32> to vector<16x32xf32>
    %275 = arith.mulf %270, %274 : vector<16x32xf32>
    %276 = vector.broadcast %181 : vector<1x32xf32> to vector<16x32xf32>
    %277 = arith.mulf %275, %276 : vector<16x32xf32>
    %278 = vector.broadcast %183 : vector<1x32xf32> to vector<16x32xf32>
    %279 = arith.addf %277, %278 : vector<16x32xf32>
    %c1_106 = arith.constant 1 : index
    %c0_107 = arith.constant 0 : index
    %c0_108 = arith.constant 0 : index
    %280 = vector.load %arg6[%c1_106, %c0_107, %c0_108] : memref<2x32x64xf32, #tpu.memory_space<vmem>>, vector<1x32x64xf32>
    %281 = vector.shape_cast %280 : vector<1x32x64xf32> to vector<32x64xf32>
    %cst_109 = arith.constant dense<0.000000e+00> : vector<16x64xf32>
    %282 = tpu.matmul %279, %281, %cst_109 {dimension_numbers = #tpu.dot_dimension_numbers<[1], [0], [0], [1], [0, 0, 1, 1], [], []>} : vector<16x32xf32>, vector<32x64xf32>, vector<16x64xf32> -> vector<16x64xf32>
    %283 = vector.broadcast %185 : vector<1x64xf32> to vector<16x64xf32>
    %284 = arith.addf %282, %283 : vector<16x64xf32>
    %285 = arith.mulf %284, %284 : vector<16x64xf32>
    %286 = arith.mulf %284, %285 : vector<16x64xf32>
    %cst_110 = arith.constant 4.471500e-02 : f32
    %287 = vector.broadcast %cst_110 : f32 to vector<16x64xf32>
    %288 = arith.mulf %287, %286 : vector<16x64xf32>
    %289 = arith.addf %284, %288 : vector<16x64xf32>
    %cst_111 = arith.constant 0.797884583 : f32
    %290 = vector.broadcast %cst_111 : f32 to vector<16x64xf32>
    %291 = arith.mulf %290, %289 : vector<16x64xf32>
    %292 = math.tanh %291 : vector<16x64xf32>
    %cst_112 = arith.constant 1.000000e+00 : f32
    %293 = vector.broadcast %cst_112 : f32 to vector<16x64xf32>
    %294 = arith.addf %293, %292 : vector<16x64xf32>
    %cst_113 = arith.constant 5.000000e-01 : f32
    %295 = vector.broadcast %cst_113 : f32 to vector<16x64xf32>
    %296 = arith.mulf %295, %294 : vector<16x64xf32>
    %297 = arith.mulf %284, %296 : vector<16x64xf32>
    %c1_114 = arith.constant 1 : index
    %c0_115 = arith.constant 0 : index
    %c0_116 = arith.constant 0 : index
    %298 = vector.load %arg7[%c1_114, %c0_115, %c0_116] : memref<2x64x32xf32, #tpu.memory_space<vmem>>, vector<1x64x32xf32>
    %299 = vector.shape_cast %298 : vector<1x64x32xf32> to vector<64x32xf32>
    %cst_117 = arith.constant dense<0.000000e+00> : vector<16x32xf32>
    %300 = tpu.matmul %297, %299, %cst_117 {dimension_numbers = #tpu.dot_dimension_numbers<[1], [0], [0], [1], [0, 0, 1, 1], [], []>} : vector<16x64xf32>, vector<64x32xf32>, vector<16x32xf32> -> vector<16x32xf32>
    %301 = vector.broadcast %187 : vector<1x32xf32> to vector<16x32xf32>
    %302 = arith.addf %300, %301 : vector<16x32xf32>
    %303 = arith.addf %302, %279 : vector<16x32xf32>
    %cst_118 = arith.constant dense<0.000000e+00> : vector<16xf32>
    %304 = vector.multi_reduction <add>, %303, %cst_118 [1] : vector<16x32xf32> to vector<16xf32>
    %305 = vector.shape_cast %304 : vector<16xf32> to vector<16x1xf32>
    %cst_119 = arith.constant 3.200000e+01 : f32
    %306 = vector.broadcast %cst_119 : f32 to vector<16x1xf32>
    %307 = arith.divf %305, %306 : vector<16x1xf32>
    %308 = vector.broadcast %307 : vector<16x1xf32> to vector<16x32xf32>
    %309 = arith.subf %303, %308 : vector<16x32xf32>
    %310 = arith.mulf %309, %309 : vector<16x32xf32>
    %cst_120 = arith.constant dense<0.000000e+00> : vector<16xf32>
    %311 = vector.multi_reduction <add>, %310, %cst_120 [1] : vector<16x32xf32> to vector<16xf32>
    %312 = vector.shape_cast %311 : vector<16xf32> to vector<16x1xf32>
    %cst_121 = arith.constant 3.200000e+01 : f32
    %313 = vector.broadcast %cst_121 : f32 to vector<16x1xf32>
    %314 = arith.divf %312, %313 : vector<16x1xf32>
    %315 = vector.broadcast %307 : vector<16x1xf32> to vector<16x32xf32>
    %316 = arith.subf %303, %315 : vector<16x32xf32>
    %cst_122 = arith.constant 9.99999974E-6 : f32
    %317 = vector.broadcast %cst_122 : f32 to vector<16x1xf32>
    %318 = arith.addf %314, %317 : vector<16x1xf32>
    %319 = math.rsqrt %318 : vector<16x1xf32>
    %320 = vector.broadcast %319 : vector<16x1xf32> to vector<16x32xf32>
    %321 = arith.mulf %316, %320 : vector<16x32xf32>
    %322 = vector.broadcast %189 : vector<1x32xf32> to vector<16x32xf32>
    %323 = arith.mulf %321, %322 : vector<16x32xf32>
    %324 = vector.broadcast %191 : vector<1x32xf32> to vector<16x32xf32>
    %325 = arith.addf %323, %324 : vector<16x32xf32>
    %326 = vector.shape_cast %325 : vector<16x32xf32> to vector<2x8x32xf32>
    %327 = vector.extract_strided_slice %326 {offsets = [0, 0, 0], sizes = [2, 1, 32], strides = [1, 1, 1]} : vector<2x8x32xf32> to vector<2x1x32xf32>
    %328 = vector.shape_cast %327 : vector<2x1x32xf32> to vector<2x32xf32>
    %c0_123 = arith.constant 0 : index
    %c0_124 = arith.constant 0 : index
    %329 = vector.load %arg8[%c0_123, %c0_124] : memref<32x32xf32, #tpu.memory_space<vmem>>, vector<32x32xf32>
    %cst_125 = arith.constant dense<0.000000e+00> : vector<2x32xf32>
    %330 = tpu.matmul %328, %329, %cst_125 {dimension_numbers = #tpu.dot_dimension_numbers<[1], [0], [0], [1], [0, 0, 1, 1], [], []>} : vector<2x32xf32>, vector<32x32xf32>, vector<2x32xf32> -> vector<2x32xf32>
    %c2_126 = arith.constant 2 : index
    %c0_127 = arith.constant 0 : index
    %331 = vector.load %arg2[%c2_126, %c0_127] : memref<4x128xf32, #tpu.memory_space<vmem>>, vector<1x32xf32>
    %332 = vector.broadcast %331 : vector<1x32xf32> to vector<2x32xf32>
    %333 = arith.addf %330, %332 : vector<2x32xf32>
    %334 = math.tanh %333 : vector<2x32xf32>
    %c0_128 = arith.constant 0 : index
    %c0_129 = arith.constant 0 : index
    %335 = vector.load %arg9[%c0_128, %c0_129] : memref<32x2xf32, #tpu.memory_space<vmem>>, vector<32x2xf32>
    %cst_130 = arith.constant dense<0.000000e+00> : vector<2x2xf32>
    %336 = tpu.matmul %334, %335, %cst_130 {dimension_numbers = #tpu.dot_dimension_numbers<[1], [0], [0], [1], [0, 0, 1, 1], [], []>} : vector<2x32xf32>, vector<32x2xf32>, vector<2x2xf32> -> vector<2x2xf32>
    %c3_131 = arith.constant 3 : index
    %c0_132 = arith.constant 0 : index
    %337 = vector.load %arg2[%c3_131, %c0_132] : memref<4x128xf32, #tpu.memory_space<vmem>>, vector<1x2xf32>
    %338 = vector.broadcast %337 : vector<1x2xf32> to vector<2x2xf32>
    %339 = arith.addf %336, %338 : vector<2x2xf32>
    %c0_133 = arith.constant 0 : index
    %c0_134 = arith.constant 0 : index
    %340 = vector.load %arg10[%c0_133, %c0_134] : memref<2x2xf32, #tpu.memory_space<vmem>>, vector<2x2xf32>
    tpu.vector_store %arg10[%c0_133, %c0_134], %339 {strides = array<i32>} : memref<2x2xf32, #tpu.memory_space<vmem>>, vector<2x2xf32>,
    return
  }
}

</mosaic_0001>

<llo_original>
// kernel: model_forward.1
$region0: #{model_forward.1}
  #allocation0 [shape = 'u32[]', space=smem, size = 0x4, offset = 0x4, fixed_abs, tag = 'smem constant byte address 0x4 - core index']
  #allocation1 [shape = 'u32[144,128]{1,0:T(1,128)}', space=vmem, size = 0x12000, scoped, tag = 'internal scratch']
  %s0 = inlined_call_operand.vmem [shape: f32[16,32], index: 0, kind: input, shape index: {}]
  %s1 = inlined_call_operand.vmem [shape: f32[8,1,8], index: 1, kind: input, shape index: {}]
  %s2 = inlined_call_operand.vmem [shape: f32[4,128], index: 2, kind: input, shape index: {}]
  %s3 = inlined_call_operand.vmem [shape: f32[2,8,128], index: 3, kind: input, shape index: {}]
  %s4 = inlined_call_operand.vmem [shape: f32[2,32,96], index: 4, kind: input, shape index: {}]
  %s5 = inlined_call_operand.vmem [shape: f32[2,32,32], index: 5, kind: input, shape index: {}]
  %s6 = inlined_call_operand.vmem [shape: f32[2,32,64], index: 6, kind: input, shape index: {}]
  %s7 = inlined_call_operand.vmem [shape: f32[2,64,32], index: 7, kind: input, shape index: {}]
  %s8 = inlined_call_operand.vmem [shape: f32[32,32], index: 8, kind: input, shape index: {}]
  %s9 = inlined_call_operand.vmem [shape: f32[32,2], index: 9, kind: input, shape index: {}]
  %s10 = inlined_call_operand.hbm [shape: f32[2,2], index: 10, kind: output, shape index: {}]
  %s11 = sld [smem:[#allocation0]]
  $region50: #{model_forward.1} parent=0
    _
  %s13 = ssub.s32 1, %s11
  %s14 = scalar_select 0, %s13, %s11
  $region1: #{model_forward.1} parent=0
    #allocation2 [shape = 'u8[1024]{0}', space=vmem, size = 0x400, scoped, tag = 'output window, operand 0, single buffered']
    #allocation3 [shape = 's32[1]{0}', space=sflag, size = 0x4, scoped, tag = 'scoped memory for model_forward.1']
    %15 = vsyncpa [#allocation3], 0
    // Predicated region
    $region2: #{model_forward.1} parent=1 // pred_check
      _
    $region3: #{model_forward.1} parent=1 // pred_check_branch
      %17 = sbr.rel (0) target = $region5
    $region4: #{model_forward.1} parent=1 // pred_region
      _
    $region5: #{model_forward.1} parent=1 // pred_fallthru
      _
    // Predicated region
    $region6: #{model_forward.1} parent=1 // pred_check
      _
    $region7: #{model_forward.1} parent=1 // pred_check_branch
      %19 = sbr.rel (0) target = $region9
    $region8: #{model_forward.1} parent=1 // pred_region
      _
    $region9: #{model_forward.1} parent=1 // pred_fallthru
      _
    // Predicated region
    $region10: #{model_forward.1} parent=1 // pred_check
      _
    $region11: #{model_forward.1} parent=1 // pred_check_branch
      %21 = sbr.rel (0) target = $region13
    $region12: #{model_forward.1} parent=1 // pred_region
      _
    $region13: #{model_forward.1} parent=1 // pred_fallthru
      _
    // Predicated region
    $region14: #{model_forward.1} parent=1 // pred_check
      _
    $region15: #{model_forward.1} parent=1 // pred_check_branch
      %23 = sbr.rel (0) target = $region17
    $region16: #{model_forward.1} parent=1 // pred_region
      _
    $region17: #{model_forward.1} parent=1 // pred_fallthru
      _
    // Predicated region
    $region18: #{model_forward.1} parent=1 // pred_check
      _
    $region19: #{model_forward.1} parent=1 // pred_check_branch
      %25 = sbr.rel (0) target = $region21
    $region20: #{model_forward.1} parent=1 // pred_region
      _
    $region21: #{model_forward.1} parent=1 // pred_fallthru
      _
    // Predicated region
    $region22: #{model_forward.1} parent=1 // pred_check
      _
    $region23: #{model_forward.1} parent=1 // pred_check_branch
      %27 = sbr.rel (0) target = $region25
    $region24: #{model_forward.1} parent=1 // pred_region
      _
    $region25: #{model_forward.1} parent=1 // pred_fallthru
      _
    // Predicated region
    $region26: #{model_forward.1} parent=1 // pred_check
      _
    $region27: #{model_forward.1} parent=1 // pred_check_branch
      %29 = sbr.rel (0) target = $region29
    $region28: #{model_forward.1} parent=1 // pred_region
      _
    $region29: #{model_forward.1} parent=1 // pred_fallthru
      _
    // Predicated region
    $region30: #{model_forward.1} parent=1 // pred_check
      _
    $region31: #{model_forward.1} parent=1 // pred_check_branch
      %31 = sbr.rel (0) target = $region33
    $region32: #{model_forward.1} parent=1 // pred_region
      _
    $region33: #{model_forward.1} parent=1 // pred_fallthru
      _
    // Predicated region
    $region34: #{model_forward.1} parent=1 // pred_check
      _
    $region35: #{model_forward.1} parent=1 // pred_check_branch
      %33 = sbr.rel (0) target = $region37
    $region36: #{model_forward.1} parent=1 // pred_region
      _
    $region37: #{model_forward.1} parent=1 // pred_fallthru
      _
    // Predicated region
    $region38: #{model_forward.1} parent=1 // pred_check
      _
    $region39: #{model_forward.1} parent=1 // pred_check_branch
      %35 = sbr.rel (0) target = $region41
    $region40: #{model_forward.1} parent=1 // pred_region
      _
    $region41: #{model_forward.1} parent=1 // pred_fallthru
      _
    %v36 = vld [vmem:[%s1] sm:$0x1]
    %v37 = vld [vmem:[%s1 + $0x1] sm:$0x1]
    %v38 = vld [vmem:[%s1 + $0x2] sm:$0x1]
    %v39 = vld [vmem:[%s1 + $0x3] sm:$0x1]
    %v40 = vld [vmem:[%s1 + $0x4] sm:$0x1]
    %v41 = vld [vmem:[%s1 + $0x5] sm:$0x1]
    %v42 = vld [vmem:[%s1 + $0x6] sm:$0x1]
    %v43 = vld [vmem:[%s1 + $0x7] sm:$0x1]
    %v44 = vld [vmem:[%s0] sm:$0xff]
    %v45 = vld [vmem:[%s0 + $0x8] sm:$0xff]
    %v46 = vld [vmem:[%s2] sm:$0x1]
    %v47 = vld [vmem:[%s2 + $0x1] sm:$0x1]
    %vm48 = vcmask 261120
    %v49 = vsel %vm48, %v44, 0.0
    %50 = vadd.xlane.f32.xlu0 %v49
    %v51 = vpop.xlane.xlu0 %50
    %v52 = vsel %vm48, %v45, 0.0
    %53 = vadd.xlane.f32.xlu0 %v52
    %v54 = vpop.xlane.xlu0 %53
    %v55 = vrcp.pop 32.0
    %v56 = vmul.f32 %v51, %v55
    %v57 = vmul.f32 %v54, %v55
    %v58 = vsub.f32 %v44, %v56
    %v59 = vsub.f32 %v45, %v57
    %v60 = vmul.f32 %v58, %v58
    %v61 = vmul.f32 %v59, %v59
    %v62 = vsel %vm48, %v60, 0.0
    %63 = vadd.xlane.f32.xlu0 %v62
    %v64 = vpop.xlane.xlu0 %63
    %v65 = vsel %vm48, %v61, 0.0
    %66 = vadd.xlane.f32.xlu0 %v65
    %v67 = vpop.xlane.xlu0 %66
    %v68 = vmul.f32 %v64, %v55
    %v69 = vmul.f32 %v67, %v55
    %v70 = vadd.f32 %v68, 1e-05
    %v71 = vadd.f32 %v69, 1e-05
    %v72 = vrsqrt.pop %v70
    %v73 = vrsqrt.pop %v71
    %v74 = vmul.f32 %v58, %v72
    %v75 = vmul.f32 %v59, %v73
    %v76 = vlaneseq
    %v77 = vshrl.u32 %v76, 7
    %v78 = vsub.s32 0, %v77
    %v79 = vrot.slane %v46, %v78
    %v80 = vmul.f32 %v74, %v79
    %v81 = vmul.f32 %v75, %v79
    %v82 = vlaneseq
    %v83 = vshrl.u32 %v82, 7
    %v84 = vsub.s32 0, %v83
    %v85 = vrot.slane %v47, %v84
    %v86 = vadd.f32 %v80, %v85
    %v87 = vadd.f32 %v81, %v85
    %v88 = vld [vmem:[%s3] sm:$0x1]
    %v89 = vld [vmem:[%s3 + $0x1] sm:$0x1]
    %v90 = vld [vmem:[%s3 + $0x2] sm:$0x1]
    %v91 = vld [vmem:[%s3 + $0x3] sm:$0x1]
    %v92 = vld [vmem:[%s3 + $0x4] sm:$0x1]
    %v93 = vld [vmem:[%s3 + $0x5] sm:$0x1]
    %v94 = vld [vmem:[%s3 + $0x6] sm:$0x1]
    %v95 = vld [vmem:[%s3 + $0x7] sm:$0x1]
    %v96 = vld [vmem:[%s4] sm:$0xff]
    %v97 = vld [vmem:[%s4 + $0x8] sm:$0xff]
    %v98 = vld [vmem:[%s4 + $0x10] sm:$0xff]
    %v99 = vld [vmem:[%s4 + $0x18] sm:$0xff]
    %v100 = vlaneseq
    %v101 = vshrl.u32 %v100, 7
    %v102 = vsub.s32 0, %v101
    %v103 = vrot.slane %v88, %v102
    %v105 = vsel %vm48, %v86, 0
    %v108 = vsel %vm48, %v87, 0
    %110 = vmatprep.subr.mxu0 0.0
    %111 = vmatpush1.msra.mxu0 %v96
    %112 = vmatprep.subr.mxu0 0.0
    %113 = vmatpush1.msra.mxu0 %v97
    %114 = vmatprep.subr.mxu0 0.0
    %115 = vmatpush1.msra.mxu0 %v98
    %116 = vmatprep.subr.mxu0 0.0
    %117 = vmatpush1.msra.mxu0 %v99
    %118 = vmatprep.subr.mxu0 0.0
    %119 = vmatpush1.msra.mxu0 0.0
    %120 = vmatprep.subr.mxu0 0.0
    %121 = vmatpush1.msra.mxu0 0.0
    %122 = vmatprep.subr.mxu0 0.0
    %123 = vmatpush1.msra.mxu0 0.0
    %124 = vmatprep.subr.mxu0 0.0
    %125 = vmatpush1.msra.mxu0 0.0
    %126 = vmatprep.subr.mxu0 0.0
    %127 = vmatpush1.msra.mxu0 0.0
    %128 = vmatprep.subr.mxu0 0.0
    %129 = vmatpush1.msra.mxu0 0.0
    %130 = vmatprep.subr.mxu0 0.0
    %131 = vmatpush1.msra.mxu0 0.0
    %132 = vmatprep.subr.mxu0 0.0
    %133 = vmatpush1.msra.mxu0 0.0
    %134 = vmatprep.subr.mxu0 0.0
    %135 = vmatpush1.msra.mxu0 0.0
    %136 = vmatprep.subr.mxu0 0.0
    %137 = vmatpush1.msra.mxu0 0.0
    %138 = vmatprep.subr.mxu0 0.0
    %139 = vmatpush1.msra.mxu0 0.0
    %140 = vmatprep.subr.mxu0 0.0
    %141 = vmatpush1.msra.mxu0 0.0
    %142 = vmatprep.subr.mxu0 0.0
    %143 = vmatpush1.msra.mxu0 0.0
    %144 = vmatprep.subr.mxu0 0.0
    %145 = vmatpush1.msra.mxu0 0.0
    %146 = vmatprep.subr.mxu0 0.0
    %147 = vmatpush1.msra.mxu0 0.0
    %148 = vmatprep.subr.mxu0 0.0
    %149 = vmatpush1.msra.mxu0 0.0
    %150 = vmatprep.subr.mxu0 0.0
    %151 = vmatpush1.msra.mxu0 0.0
    %152 = vmatprep.subr.mxu0 0.0
    %153 = vmatpush1.msra.mxu0 0.0
    %154 = vmatprep.subr.mxu0 0.0
    %155 = vmatpush1.msra.mxu0 0.0
    %156 = vmatprep.subr.mxu0 0.0
    %157 = vmatpush1.msra.mxu0 0.0
    %158 = vmatprep.subr.mxu0 0.0
    %159 = vmatpush1.msra.mxu0 0.0
    %160 = vmatprep.subr.mxu0 0.0
    %161 = vmatpush1.msra.mxu0 0.0
    %162 = vmatprep.subr.mxu0 0.0
    %163 = vmatpush1.msra.mxu0 0.0
    %164 = vmatprep.subr.mxu0 0.0
    %165 = vmatpush1.msra.mxu0 0.0
    %166 = vmatprep.subr.mxu0 0.0
    %167 = vmatpush1.msra.mxu0 0.0
    %168 = vmatprep.subr.mxu0 0.0
    %169 = vmatpush1.msra.mxu0 0.0
    %170 = vmatprep.subr.mxu0 0.0
    %171 = vmatpush1.msra.mxu0 0.0
    %172 = vmatprep.subr.mxu0 0.0
    %173 = vmatpush1.msra.mxu0 0.0
    %174 = vmatprep.mubr.f32.mxu0 0.0
    %175 = vmatmul.mubr.f32.gmra.mrb[0].mxu0 %v105
    %v176 = vpop.f32.mrb[0].mxu0
    %v177 = vadd.f32 %v103, %v176
    %v178 = vpop.f32.mrb[0].mxu0
    %179 = vmatprep.mubr.f32.mxu0 0.0
    %180 = vmatmul.mubr.f32.gmra.mrb[0].mxu0 %v108
    %v181 = vpop.f32.mrb[0].mxu0
    %v182 = vadd.f32 %v103, %v181
    %v183 = vpop.f32.mrb[0].mxu0
    %184 = vdwg.mxu0
    %187 = vrot.lane.b32.xlu0 %v177, 120
    %v188 = vpop.permute.xlu0 %187
    %189 = vrot.lane.b32.xlu0 %v182, 120
    %v190 = vpop.permute.xlu0 %189
    %191 = vrot.lane.b32.xlu0 %v177, 112
    %v192 = vpop.permute.xlu0 %191
    %193 = vrot.lane.b32.xlu0 %v182, 112
    %v194 = vpop.permute.xlu0 %193
    %195 = vrot.lane.b32.xlu0 %v177, 104
    %v196 = vpop.permute.xlu0 %195
    %197 = vrot.lane.b32.xlu0 %v182, 104
    %v198 = vpop.permute.xlu0 %197
    %199 = vrot.lane.b32.xlu0 %v177, 96
    %v200 = vpop.permute.xlu0 %199
    %vm201 = vcmask 64512
    %v202 = vsel %vm201, %v177, 0
    %v204 = vsel %vm201, %v200, 0
    %206 = vmatprep.subr.mxu0 0.0
    %207 = vmatpush1.xpose.msra.mxu0 %v204
    %208 = vmatprep.subr.mxu0 0.0
    %209 = vmatpush1.xpose.msra.mxu0 0.0
    %210 = vmatprep.subr.mxu0 0.0
    %211 = vmatpush1.xpose.msra.mxu0 0.0
    %212 = vmatprep.subr.mxu0 0.0
    %213 = vmatpush1.xpose.msra.mxu0 0.0
    %214 = vmatprep.subr.mxu0 0.0
    %215 = vmatpush1.xpose.msra.mxu0 0.0
    %216 = vmatprep.subr.mxu0 0.0
    %217 = vmatpush1.xpose.msra.mxu0 0.0
    %218 = vmatprep.subr.mxu0 0.0
    %219 = vmatpush1.xpose.msra.mxu0 0.0
    %220 = vmatprep.subr.mxu0 0.0
    %221 = vmatpush1.xpose.msra.mxu0 0.0
    %222 = vmatprep.subr.mxu0 0.0
    %223 = vmatpush1.xpose.msra.mxu0 0.0
    %224 = vmatprep.subr.mxu0 0.0
    %225 = vmatpush1.xpose.msra.mxu0 0.0
    %226 = vmatprep.subr.mxu0 0.0
    %227 = vmatpush1.xpose.msra.mxu0 0.0
    %228 = vmatprep.subr.mxu0 0.0
    %229 = vmatpush1.xpose.msra.mxu0 0.0
    %230 = vmatprep.subr.mxu0 0.0
    %231 = vmatpush1.xpose.msra.mxu0 0.0
    %232 = vmatprep.subr.mxu0 0.0
    %233 = vmatpush1.xpose.msra.mxu0 0.0
    %234 = vmatprep.subr.mxu0 0.0
    %235 = vmatpush1.xpose.msra.mxu0 0.0
    %236 = vmatprep.subr.mxu0 0.0
    %237 = vmatpush1.xpose.msra.mxu0 0.0
    %238 = vmatprep.subr.mxu0 0.0
    %239 = vmatpush1.xpose.msra.mxu0 0.0
    %240 = vmatprep.subr.mxu0 0.0
    %241 = vmatpush1.xpose.msra.mxu0 0.0
    %242 = vmatprep.subr.mxu0 0.0
    %243 = vmatpush1.xpose.msra.mxu0 0.0
    %244 = vmatprep.subr.mxu0 0.0
    %245 = vmatpush1.xpose.msra.mxu0 0.0
    %246 = vmatprep.subr.mxu0 0.0
    %247 = vmatpush1.xpose.msra.mxu0 0.0
    %248 = vmatprep.subr.mxu0 0.0
    %249 = vmatpush1.xpose.msra.mxu0 0.0
    %250 = vmatprep.subr.mxu0 0.0
    %251 = vmatpush1.xpose.msra.mxu0 0.0
    %252 = vmatprep.subr.mxu0 0.0
    %253 = vmatpush1.xpose.msra.mxu0 0.0
    %254 = vmatprep.subr.mxu0 0.0
    %255 = vmatpush1.xpose.msra.mxu0 0.0
    %256 = vmatprep.subr.mxu0 0.0
    %257 = vmatpush1.xpose.msra.mxu0 0.0
    %258 = vmatprep.subr.mxu0 0.0
    %259 = vmatpush1.xpose.msra.mxu0 0.0
    %260 = vmatprep.subr.mxu0 0.0
    %261 = vmatpush1.xpose.msra.mxu0 0.0
    %262 = vmatprep.subr.mxu0 0.0
    %263 = vmatpush1.xpose.msra.mxu0 0.0
    %264 = vmatprep.subr.mxu0 0.0
    %265 = vmatpush1.xpose.msra.mxu0 0.0
    %266 = vmatprep.subr.mxu0 0.0
    %267 = vmatpush1.xpose.msra.mxu0 0.0
    %268 = vmatprep.subr.mxu0 0.0
    %269 = vmatpush1.xpose.msra.mxu0 0.0
    %270 = vmatprep.mubr.f32.mxu0 0.0
    %271 = vmatmul.mubr.f32.gmra.mrb[0].mxu0 %v202
    %v272 = vpop.f32.mrb[0].mxu0
    %v273 = vadd.f32 0.0, %v272
    %v274 = vpop.f32.mrb[0].mxu0
    %275 = vdwg.mxu0
    %276 = vrot.lane.b32.xlu0 %v182, 96
    %v277 = vpop.permute.xlu0 %276
    %v278 = vsel %vm201, %v182, 0
    %v280 = vsel %vm201, %v277, 0
    %282 = vmatprep.subr.mxu0 0.0
    %283 = vmatpush1.xpose.msra.mxu0 %v280
    %284 = vmatprep.subr.mxu0 0.0
    %285 = vmatpush1.xpose.msra.mxu0 0.0
    %286 = vmatprep.subr.mxu0 0.0
    %287 = vmatpush1.xpose.msra.mxu0 0.0
    %288 = vmatprep.subr.mxu0 0.0
    %289 = vmatpush1.xpose.msra.mxu0 0.0
    %290 = vmatprep.subr.mxu0 0.0
    %291 = vmatpush1.xpose.msra.mxu0 0.0
    %292 = vmatprep.subr.mxu0 0.0
    %293 = vmatpush1.xpose.msra.mxu0 0.0
    %294 = vmatprep.subr.mxu0 0.0
    %295 = vmatpush1.xpose.msra.mxu0 0.0
    %296 = vmatprep.subr.mxu0 0.0
    %297 = vmatpush1.xpose.msra.mxu0 0.0
    %298 = vmatprep.subr.mxu0 0.0
    %299 = vmatpush1.xpose.msra.mxu0 0.0
    %300 = vmatprep.subr.mxu0 0.0
    %301 = vmatpush1.xpose.msra.mxu0 0.0
    %302 = vmatprep.subr.mxu0 0.0
    %303 = vmatpush1.xpose.msra.mxu0 0.0
    %304 = vmatprep.subr.mxu0 0.0
    %305 = vmatpush1.xpose.msra.mxu0 0.0
    %306 = vmatprep.subr.mxu0 0.0
    %307 = vmatpush1.xpose.msra.mxu0 0.0
    %308 = vmatprep.subr.mxu0 0.0
    %309 = vmatpush1.xpose.msra.mxu0 0.0
    %310 = vmatprep.subr.mxu0 0.0
    %311 = vmatpush1.xpose.msra.mxu0 0.0
    %312 = vmatprep.subr.mxu0 0.0
    %313 = vmatpush1.xpose.msra.mxu0 0.0
    %314 = vmatprep.subr.mxu0 0.0
    %315 = vmatpush1.xpose.msra.mxu0 0.0
    %316 = vmatprep.subr.mxu0 0.0
    %317 = vmatpush1.xpose.msra.mxu0 0.0
    %318 = vmatprep.subr.mxu0 0.0
    %319 = vmatpush1.xpose.msra.mxu0 0.0
    %320 = vmatprep.subr.mxu0 0.0
    %321 = vmatpush1.xpose.msra.mxu0 0.0
    %322 = vmatprep.subr.mxu0 0.0
    %323 = vmatpush1.xpose.msra.mxu0 0.0
    %324 = vmatprep.subr.mxu0 0.0
    %325 = vmatpush1.xpose.msra.mxu0 0.0
    %326 = vmatprep.subr.mxu0 0.0
    %327 = vmatpush1.xpose.msra.mxu0 0.0
    %328 = vmatprep.subr.mxu0 0.0
    %329 = vmatpush1.xpose.msra.mxu0 0.0
    %330 = vmatprep.subr.mxu0 0.0
    %331 = vmatpush1.xpose.msra.mxu0 0.0
    %332 = vmatprep.subr.mxu0 0.0
    %333 = vmatpush1.xpose.msra.mxu0 0.0
    %334 = vmatprep.subr.mxu0 0.0
    %335 = vmatpush1.xpose.msra.mxu0 0.0
    %336 = vmatprep.subr.mxu0 0.0
    %337 = vmatpush1.xpose.msra.mxu0 0.0
    %338 = vmatprep.subr.mxu0 0.0
    %339 = vmatpush1.xpose.msra.mxu0 0.0
    %340 = vmatprep.subr.mxu0 0.0
    %341 = vmatpush1.xpose.msra.mxu0 0.0
    %342 = vmatprep.subr.mxu0 0.0
    %343 = vmatpush1.xpose.msra.mxu0 0.0
    %344 = vmatprep.subr.mxu0 0.0
    %345 = vmatpush1.xpose.msra.mxu0 0.0
    %346 = vmatprep.mubr.f32.mxu0 0.0
    %347 = vmatmul.mubr.f32.gmra.mrb[0].mxu0 %v278
    %v348 = vpop.f32.mrb[0].mxu0
    %v349 = vadd.f32 0.0, %v348
    %v350 = vpop.f32.mrb[0].mxu0
    %351 = vdwg.mxu0
    %352 = vrot.lane.b32.xlu0 %v188, 96
    %v353 = vpop.permute.xlu0 %352
    %v354 = vsel %vm201, %v188, 0
    %v356 = vsel %vm201, %v353, 0
    %358 = vmatprep.subr.mxu0 0.0
    %359 = vmatpush1.xpose.msra.mxu0 %v356
    %360 = vmatprep.subr.mxu0 0.0
    %361 = vmatpush1.xpose.msra.mxu0 0.0
    %362 = vmatprep.subr.mxu0 0.0
    %363 = vmatpush1.xpose.msra.mxu0 0.0
    %364 = vmatprep.subr.mxu0 0.0
    %365 = vmatpush1.xpose.msra.mxu0 0.0
    %366 = vmatprep.subr.mxu0 0.0
    %367 = vmatpush1.xpose.msra.mxu0 0.0
    %368 = vmatprep.subr.mxu0 0.0
    %369 = vmatpush1.xpose.msra.mxu0 0.0
    %370 = vmatprep.subr.mxu0 0.0
    %371 = vmatpush1.xpose.msra.mxu0 0.0
    %372 = vmatprep.subr.mxu0 0.0
    %373 = vmatpush1.xpose.msra.mxu0 0.0
    %374 = vmatprep.subr.mxu0 0.0
    %375 = vmatpush1.xpose.msra.mxu0 0.0
    %376 = vmatprep.subr.mxu0 0.0
    %377 = vmatpush1.xpose.msra.mxu0 0.0
    %378 = vmatprep.subr.mxu0 0.0
    %379 = vmatpush1.xpose.msra.mxu0 0.0
    %380 = vmatprep.subr.mxu0 0.0
    %381 = vmatpush1.xpose.msra.mxu0 0.0
    %382 = vmatprep.subr.mxu0 0.0
    %383 = vmatpush1.xpose.msra.mxu0 0.0
    %384 = vmatprep.subr.mxu0 0.0
    %385 = vmatpush1.xpose.msra.mxu0 0.0
    %386 = vmatprep.subr.mxu0 0.0
    %387 = vmatpush1.xpose.msra.mxu0 0.0
    %388 = vmatprep.subr.mxu0 0.0
    %389 = vmatpush1.xpose.msra.mxu0 0.0
    %390 = vmatprep.subr.mxu0 0.0
    %391 = vmatpush1.xpose.msra.mxu0 0.0
    %392 = vmatprep.subr.mxu0 0.0
    %393 = vmatpush1.xpose.msra.mxu0 0.0
    %394 = vmatprep.subr.mxu0 0.0
    %395 = vmatpush1.xpose.msra.mxu0 0.0
    %396 = vmatprep.subr.mxu0 0.0
    %397 = vmatpush1.xpose.msra.mxu0 0.0
    %398 = vmatprep.subr.mxu0 0.0
    %399 = vmatpush1.xpose.msra.mxu0 0.0
    %400 = vmatprep.subr.mxu0 0.0
    %401 = vmatpush1.xpose.msra.mxu0 0.0
    %402 = vmatprep.subr.mxu0 0.0
    %403 = vmatpush1.xpose.msra.mxu0 0.0
    %404 = vmatprep.subr.mxu0 0.0
    %405 = vmatpush1.xpose.msra.mxu0 0.0
    %406 = vmatprep.subr.mxu0 0.0
    %407 = vmatpush1.xpose.msra.mxu0 0.0
    %408 = vmatprep.subr.mxu0 0.0
    %409 = vmatpush1.xpose.msra.mxu0 0.0
    %410 = vmatprep.subr.mxu0 0.0
    %411 = vmatpush1.xpose.msra.mxu0 0.0
    %412 = vmatprep.subr.mxu0 0.0
    %413 = vmatpush1.xpose.msra.mxu0 0.0
    %414 = vmatprep.subr.mxu0 0.0
    %415 = vmatpush1.xpose.msra.mxu0 0.0
    %416 = vmatprep.subr.mxu0 0.0
    %417 = vmatpush1.xpose.msra.mxu0 0.0
    %418 = vmatprep.subr.mxu0 0.0
    %419 = vmatpush1.xpose.msra.mxu0 0.0
    %420 = vmatprep.subr.mxu0 0.0
    %421 = vmatpush1.xpose.msra.mxu0 0.0
    %422 = vmatprep.mubr.f32.mxu0 0.0
    %423 = vmatmul.mubr.f32.gmra.mrb[0].mxu0 %v354
    %v424 = vpop.f32.mrb[0].mxu0
    %v425 = vadd.f32 0.0, %v424
    %v426 = vpop.f32.mrb[0].mxu0
    %427 = vdwg.mxu0
    %428 = vrot.lane.b32.xlu0 %v190, 96
    %v429 = vpop.permute.xlu0 %428
    %v430 = vsel %vm201, %v190, 0
    %v432 = vsel %vm201, %v429, 0
    %434 = vmatprep.subr.mxu0 0.0
    %435 = vmatpush1.xpose.msra.mxu0 %v432
    %436 = vmatprep.subr.mxu0 0.0
    %437 = vmatpush1.xpose.msra.mxu0 0.0
    %438 = vmatprep.subr.mxu0 0.0
    %439 = vmatpush1.xpose.msra.mxu0 0.0
    %440 = vmatprep.subr.mxu0 0.0
    %441 = vmatpush1.xpose.msra.mxu0 0.0
    %442 = vmatprep.subr.mxu0 0.0
    %443 = vmatpush1.xpose.msra.mxu0 0.0
    %444 = vmatprep.subr.mxu0 0.0
    %445 = vmatpush1.xpose.msra.mxu0 0.0
    %446 = vmatprep.subr.mxu0 0.0
    %447 = vmatpush1.xpose.msra.mxu0 0.0
    %448 = vmatprep.subr.mxu0 0.0
    %449 = vmatpush1.xpose.msra.mxu0 0.0
    %450 = vmatprep.subr.mxu0 0.0
    %451 = vmatpush1.xpose.msra.mxu0 0.0
    %452 = vmatprep.subr.mxu0 0.0
    %453 = vmatpush1.xpose.msra.mxu0 0.0
    %454 = vmatprep.subr.mxu0 0.0
    %455 = vmatpush1.xpose.msra.mxu0 0.0
    %456 = vmatprep.subr.mxu0 0.0
    %457 = vmatpush1.xpose.msra.mxu0 0.0
    %458 = vmatprep.subr.mxu0 0.0
    %459 = vmatpush1.xpose.msra.mxu0 0.0
    %460 = vmatprep.subr.mxu0 0.0
    %461 = vmatpush1.xpose.msra.mxu0 0.0
    %462 = vmatprep.subr.mxu0 0.0
    %463 = vmatpush1.xpose.msra.mxu0 0.0
    %464 = vmatprep.subr.mxu0 0.0
    %465 = vmatpush1.xpose.msra.mxu0 0.0
    %466 = vmatprep.subr.mxu0 0.0
    %467 = vmatpush1.xpose.msra.mxu0 0.0
    %468 = vmatprep.subr.mxu0 0.0
    %469 = vmatpush1.xpose.msra.mxu0 0.0
    %470 = vmatprep.subr.mxu0 0.0
    %471 = vmatpush1.xpose.msra.mxu0 0.0
    %472 = vmatprep.subr.mxu0 0.0
    %473 = vmatpush1.xpose.msra.mxu0 0.0
    %474 = vmatprep.subr.mxu0 0.0
    %475 = vmatpush1.xpose.msra.mxu0 0.0
    %476 = vmatprep.subr.mxu0 0.0
    %477 = vmatpush1.xpose.msra.mxu0 0.0
    %478 = vmatprep.subr.mxu0 0.0
    %479 = vmatpush1.xpose.msra.mxu0 0.0
    %480 = vmatprep.subr.mxu0 0.0
    %481 = vmatpush1.xpose.msra.mxu0 0.0
    %482 = vmatprep.subr.mxu0 0.0
    %483 = vmatpush1.xpose.msra.mxu0 0.0
    %484 = vmatprep.subr.mxu0 0.0
    %485 = vmatpush1.xpose.msra.mxu0 0.0
    %486 = vmatprep.subr.mxu0 0.0
    %487 = vmatpush1.xpose.msra.mxu0 0.0
    %488 = vmatprep.subr.mxu0 0.0
    %489 = vmatpush1.xpose.msra.mxu0 0.0
    %490 = vmatprep.subr.mxu0 0.0
    %491 = vmatpush1.xpose.msra.mxu0 0.0
    %492 = vmatprep.subr.mxu0 0.0
    %493 = vmatpush1.xpose.msra.mxu0 0.0
    %494 = vmatprep.subr.mxu0 0.0
    %495 = vmatpush1.xpose.msra.mxu0 0.0
    %496 = vmatprep.subr.mxu0 0.0
    %497 = vmatpush1.xpose.msra.mxu0 0.0
    %498 = vmatprep.mubr.f32.mxu0 0.0
    %499 = vmatmul.mubr.f32.gmra.mrb[0].mxu0 %v430
    %v500 = vpop.f32.mrb[0].mxu0
    %v501 = vadd.f32 0.0, %v500
    %v502 = vpop.f32.mrb[0].mxu0
    %503 = vdwg.mxu0
    %504 = vrot.lane.b32.xlu0 %v192, 96
    %v505 = vpop.permute.xlu0 %504
    %v506 = vsel %vm201, %v192, 0
    %v508 = vsel %vm201, %v505, 0
    %510 = vmatprep.subr.mxu0 0.0
    %511 = vmatpush1.xpose.msra.mxu0 %v508
    %512 = vmatprep.subr.mxu0 0.0
    %513 = vmatpush1.xpose.msra.mxu0 0.0
    %514 = vmatprep.subr.mxu0 0.0
    %515 = vmatpush1.xpose.msra.mxu0 0.0
    %516 = vmatprep.subr.mxu0 0.0
    %517 = vmatpush1.xpose.msra.mxu0 0.0
    %518 = vmatprep.subr.mxu0 0.0
    %519 = vmatpush1.xpose.msra.mxu0 0.0
    %520 = vmatprep.subr.mxu0 0.0
    %521 = vmatpush1.xpose.msra.mxu0 0.0
    %522 = vmatprep.subr.mxu0 0.0
    %523 = vmatpush1.xpose.msra.mxu0 0.0
    %524 = vmatprep.subr.mxu0 0.0
    %525 = vmatpush1.xpose.msra.mxu0 0.0
    %526 = vmatprep.subr.mxu0 0.0
    %527 = vmatpush1.xpose.msra.mxu0 0.0
    %528 = vmatprep.subr.mxu0 0.0
    %529 = vmatpush1.xpose.msra.mxu0 0.0
    %530 = vmatprep.subr.mxu0 0.0
    %531 = vmatpush1.xpose.msra.mxu0 0.0
    %532 = vmatprep.subr.mxu0 0.0
    %533 = vmatpush1.xpose.msra.mxu0 0.0
    %534 = vmatprep.subr.mxu0 0.0
    %535 = vmatpush1.xpose.msra.mxu0 0.0
    %536 = vmatprep.subr.mxu0 0.0
    %537 = vmatpush1.xpose.msra.mxu0 0.0
    %538 = vmatprep.subr.mxu0 0.0
    %539 = vmatpush1.xpose.msra.mxu0 0.0
    %540 = vmatprep.subr.mxu0 0.0
    %541 = vmatpush1.xpose.msra.mxu0 0.0
    %542 = vmatprep.subr.mxu0 0.0
    %543 = vmatpush1.xpose.msra.mxu0 0.0
    %544 = vmatprep.subr.mxu0 0.0
    %545 = vmatpush1.xpose.msra.mxu0 0.0
    %546 = vmatprep.subr.mxu0 0.0
    %547 = vmatpush1.xpose.msra.mxu0 0.0
    %548 = vmatprep.subr.mxu0 0.0
    %549 = vmatpush1.xpose.msra.mxu0 0.0
    %550 = vmatprep.subr.mxu0 0.0
    %551 = vmatpush1.xpose.msra.mxu0 0.0
    %552 = vmatprep.subr.mxu0 0.0
    %553 = vmatpush1.xpose.msra.mxu0 0.0
    %554 = vmatprep.subr.mxu0 0.0
    %555 = vmatpush1.xpose.msra.mxu0 0.0
    %556 = vmatprep.subr.mxu0 0.0
    %557 = vmatpush1.xpose.msra.mxu0 0.0
    %558 = vmatprep.subr.mxu0 0.0
    %559 = vmatpush1.xpose.msra.mxu0 0.0
    %560 = vmatprep.subr.mxu0 0.0
    %561 = vmatpush1.xpose.msra.mxu0 0.0
    %562 = vmatprep.subr.mxu0 0.0
    %563 = vmatpush1.xpose.msra.mxu0 0.0
    %564 = vmatprep.subr.mxu0 0.0
    %565 = vmatpush1.xpose.msra.mxu0 0.0
    %566 = vmatprep.subr.mxu0 0.0
    %567 = vmatpush1.xpose.msra.mxu0 0.0
    %568 = vmatprep.subr.mxu0 0.0
    %569 = vmatpush1.xpose.msra.mxu0 0.0
    %570 = vmatprep.subr.mxu0 0.0
    %571 = vmatpush1.xpose.msra.mxu0 0.0
    %572 = vmatprep.subr.mxu0 0.0
    %573 = vmatpush1.xpose.msra.mxu0 0.0
    %574 = vmatprep.mubr.f32.mxu0 0.0
    %575 = vmatmul.mubr.f32.gmra.mrb[0].mxu0 %v506
    %v576 = vpop.f32.mrb[0].mxu0
    %v577 = vadd.f32 0.0, %v576
    %v578 = vpop.f32.mrb[0].mxu0
    %579 = vdwg.mxu0
    %580 = vrot.lane.b32.xlu0 %v194, 96
    %v581 = vpop.permute.xlu0 %580
    %v582 = vsel %vm201, %v194, 0
    %v584 = vsel %vm201, %v581, 0
    %586 = vmatprep.subr.mxu0 0.0
    %587 = vmatpush1.xpose.msra.mxu0 %v584
    %588 = vmatprep.subr.mxu0 0.0
    %589 = vmatpush1.xpose.msra.mxu0 0.0
    %590 = vmatprep.subr.mxu0 0.0
    %591 = vmatpush1.xpose.msra.mxu0 0.0
    %592 = vmatprep.subr.mxu0 0.0
    %593 = vmatpush1.xpose.msra.mxu0 0.0
    %594 = vmatprep.subr.mxu0 0.0
    %595 = vmatpush1.xpose.msra.mxu0 0.0
    %596 = vmatprep.subr.mxu0 0.0
    %597 = vmatpush1.xpose.msra.mxu0 0.0
    %598 = vmatprep.subr.mxu0 0.0
    %599 = vmatpush1.xpose.msra.mxu0 0.0
    %600 = vmatprep.subr.mxu0 0.0
    %601 = vmatpush1.xpose.msra.mxu0 0.0
    %602 = vmatprep.subr.mxu0 0.0
    %603 = vmatpush1.xpose.msra.mxu0 0.0
    %604 = vmatprep.subr.mxu0 0.0
    %605 = vmatpush1.xpose.msra.mxu0 0.0
    %606 = vmatprep.subr.mxu0 0.0
    %607 = vmatpush1.xpose.msra.mxu0 0.0
    %608 = vmatprep.subr.mxu0 0.0
    %609 = vmatpush1.xpose.msra.mxu0 0.0
    %610 = vmatprep.subr.mxu0 0.0
    %611 = vmatpush1.xpose.msra.mxu0 0.0
    %612 = vmatprep.subr.mxu0 0.0
    %613 = vmatpush1.xpose.msra.mxu0 0.0
    %614 = vmatprep.subr.mxu0 0.0
    %615 = vmatpush1.xpose.msra.mxu0 0.0
    %616 = vmatprep.subr.mxu0 0.0
    %617 = vmatpush1.xpose.msra.mxu0 0.0
    %618 = vmatprep.subr.mxu0 0.0
    %619 = vmatpush1.xpose.msra.mxu0 0.0
    %620 = vmatprep.subr.mxu0 0.0
    %621 = vmatpush1.xpose.msra.mxu0 0.0
    %622 = vmatprep.subr.mxu0 0.0
    %623 = vmatpush1.xpose.msra.mxu0 0.0
    %624 = vmatprep.subr.mxu0 0.0
    %625 = vmatpush1.xpose.msra.mxu0 0.0
    %626 = vmatprep.subr.mxu0 0.0
    %627 = vmatpush1.xpose.msra.mxu0 0.0
    %628 = vmatprep.subr.mxu0 0.0
    %629 = vmatpush1.xpose.msra.mxu0 0.0
    %630 = vmatprep.subr.mxu0 0.0
    %631 = vmatpush1.xpose.msra.mxu0 0.0
    %632 = vmatprep.subr.mxu0 0.0
    %633 = vmatpush1.xpose.msra.mxu0 0.0
    %634 = vmatprep.subr.mxu0 0.0
    %635 = vmatpush1.xpose.msra.mxu0 0.0
    %636 = vmatprep.subr.mxu0 0.0
    %637 = vmatpush1.xpose.msra.mxu0 0.0
    %638 = vmatprep.subr.mxu0 0.0
    %639 = vmatpush1.xpose.msra.mxu0 0.0
    %640 = vmatprep.subr.mxu0 0.0
    %641 = vmatpush1.xpose.msra.mxu0 0.0
    %642 = vmatprep.subr.mxu0 0.0
    %643 = vmatpush1.xpose.msra.mxu0 0.0
    %644 = vmatprep.subr.mxu0 0.0
    %645 = vmatpush1.xpose.msra.mxu0 0.0
    %646 = vmatprep.subr.mxu0 0.0
    %647 = vmatpush1.xpose.msra.mxu0 0.0
    %648 = vmatprep.subr.mxu0 0.0
    %649 = vmatpush1.xpose.msra.mxu0 0.0
    %650 = vmatprep.mubr.f32.mxu0 0.0
    %651 = vmatmul.mubr.f32.gmra.mrb[0].mxu0 %v582
    %v652 = vpop.f32.mrb[0].mxu0
    %v653 = vadd.f32 0.0, %v652
    %v654 = vpop.f32.mrb[0].mxu0
    %655 = vdwg.mxu0
    %656 = vrot.lane.b32.xlu0 %v196, 96
    %v657 = vpop.permute.xlu0 %656
    %v658 = vsel %vm201, %v196, 0
    %v660 = vsel %vm201, %v657, 0
    %662 = vmatprep.subr.mxu0 0.0
    %663 = vmatpush1.xpose.msra.mxu0 %v660
    %664 = vmatprep.subr.mxu0 0.0
    %665 = vmatpush1.xpose.msra.mxu0 0.0
    %666 = vmatprep.subr.mxu0 0.0
    %667 = vmatpush1.xpose.msra.mxu0 0.0
    %668 = vmatprep.subr.mxu0 0.0
    %669 = vmatpush1.xpose.msra.mxu0 0.0
    %670 = vmatprep.subr.mxu0 0.0
    %671 = vmatpush1.xpose.msra.mxu0 0.0
    %672 = vmatprep.subr.mxu0 0.0
    %673 = vmatpush1.xpose.msra.mxu0 0.0
    %674 = vmatprep.subr.mxu0 0.0
    %675 = vmatpush1.xpose.msra.mxu0 0.0
    %676 = vmatprep.subr.mxu0 0.0
    %677 = vmatpush1.xpose.msra.mxu0 0.0
    %678 = vmatprep.subr.mxu0 0.0
    %679 = vmatpush1.xpose.msra.mxu0 0.0
    %680 = vmatprep.subr.mxu0 0.0
    %681 = vmatpush1.xpose.msra.mxu0 0.0
    %682 = vmatprep.subr.mxu0 0.0
    %683 = vmatpush1.xpose.msra.mxu0 0.0
    %684 = vmatprep.subr.mxu0 0.0
    %685 = vmatpush1.xpose.msra.mxu0 0.0
    %686 = vmatprep.subr.mxu0 0.0
    %687 = vmatpush1.xpose.msra.mxu0 0.0
    %688 = vmatprep.subr.mxu0 0.0
    %689 = vmatpush1.xpose.msra.mxu0 0.0
    %690 = vmatprep.subr.mxu0 0.0
    %691 = vmatpush1.xpose.msra.mxu0 0.0
    %692 = vmatprep.subr.mxu0 0.0
    %693 = vmatpush1.xpose.msra.mxu0 0.0
    %694 = vmatprep.subr.mxu0 0.0
    %695 = vmatpush1.xpose.msra.mxu0 0.0
    %696 = vmatprep.subr.mxu0 0.0
    %697 = vmatpush1.xpose.msra.mxu0 0.0
    %698 = vmatprep.subr.mxu0 0.0
    %699 = vmatpush1.xpose.msra.mxu0 0.0
    %700 = vmatprep.subr.mxu0 0.0
    %701 = vmatpush1.xpose.msra.mxu0 0.0
    %702 = vmatprep.subr.mxu0 0.0
    %703 = vmatpush1.xpose.msra.mxu0 0.0
    %704 = vmatprep.subr.mxu0 0.0
    %705 = vmatpush1.xpose.msra.mxu0 0.0
    %706 = vmatprep.subr.mxu0 0.0
    %707 = vmatpush1.xpose.msra.mxu0 0.0
    %708 = vmatprep.subr.mxu0 0.0
    %709 = vmatpush1.xpose.msra.mxu0 0.0
    %710 = vmatprep.subr.mxu0 0.0
    %711 = vmatpush1.xpose.msra.mxu0 0.0
    %712 = vmatprep.subr.mxu0 0.0
    %713 = vmatpush1.xpose.msra.mxu0 0.0
    %714 = vmatprep.subr.mxu0 0.0
    %715 = vmatpush1.xpose.msra.mxu0 0.0
    %716 = vmatprep.subr.mxu0 0.0
    %717 = vmatpush1.xpose.msra.mxu0 0.0
    %718 = vmatprep.subr.mxu0 0.0
    %719 = vmatpush1.xpose.msra.mxu0 0.0
    %720 = vmatprep.subr.mxu0 0.0
    %721 = vmatpush1.xpose.msra.mxu0 0.0
    %722 = vmatprep.subr.mxu0 0.0
    %723 = vmatpush1.xpose.msra.mxu0 0.0
    %724 = vmatprep.subr.mxu0 0.0
    %725 = vmatpush1.xpose.msra.mxu0 0.0
    %726 = vmatprep.mubr.f32.mxu0 0.0
    %727 = vmatmul.mubr.f32.gmra.mrb[0].mxu0 %v658
    %v728 = vpop.f32.mrb[0].mxu0
    %v729 = vadd.f32 0.0, %v728
    %v730 = vpop.f32.mrb[0].mxu0
    %731 = vdwg.mxu0
    %732 = vrot.lane.b32.xlu0 %v198, 96
    %v733 = vpop.permute.xlu0 %732
    %v734 = vsel %vm201, %v198, 0
    %v736 = vsel %vm201, %v733, 0
    %738 = vmatprep.subr.mxu0 0.0
    %739 = vmatpush1.xpose.msra.mxu0 %v736
    %740 = vmatprep.subr.mxu0 0.0
    %741 = vmatpush1.xpose.msra.mxu0 0.0
    %742 = vmatprep.subr.mxu0 0.0
    %743 = vmatpush1.xpose.msra.mxu0 0.0
    %744 = vmatprep.subr.mxu0 0.0
    %745 = vmatpush1.xpose.msra.mxu0 0.0
    %746 = vmatprep.subr.mxu0 0.0
    %747 = vmatpush1.xpose.msra.mxu0 0.0
    %748 = vmatprep.subr.mxu0 0.0
    %749 = vmatpush1.xpose.msra.mxu0 0.0
    %750 = vmatprep.subr.mxu0 0.0
    %751 = vmatpush1.xpose.msra.mxu0 0.0
    %752 = vmatprep.subr.mxu0 0.0
    %753 = vmatpush1.xpose.msra.mxu0 0.0
    %754 = vmatprep.subr.mxu0 0.0
    %755 = vmatpush1.xpose.msra.mxu0 0.0
    %756 = vmatprep.subr.mxu0 0.0
    %757 = vmatpush1.xpose.msra.mxu0 0.0
    %758 = vmatprep.subr.mxu0 0.0
    %759 = vmatpush1.xpose.msra.mxu0 0.0
    %760 = vmatprep.subr.mxu0 0.0
    %761 = vmatpush1.xpose.msra.mxu0 0.0
    %762 = vmatprep.subr.mxu0 0.0
    %763 = vmatpush1.xpose.msra.mxu0 0.0
    %764 = vmatprep.subr.mxu0 0.0
    %765 = vmatpush1.xpose.msra.mxu0 0.0
    %766 = vmatprep.subr.mxu0 0.0
    %767 = vmatpush1.xpose.msra.mxu0 0.0
    %768 = vmatprep.subr.mxu0 0.0
    %769 = vmatpush1.xpose.msra.mxu0 0.0
    %770 = vmatprep.subr.mxu0 0.0
    %771 = vmatpush1.xpose.msra.mxu0 0.0
    %772 = vmatprep.subr.mxu0 0.0
    %773 = vmatpush1.xpose.msra.mxu0 0.0
    %774 = vmatprep.subr.mxu0 0.0
    %775 = vmatpush1.xpose.msra.mxu0 0.0
    %776 = vmatprep.subr.mxu0 0.0
    %777 = vmatpush1.xpose.msra.mxu0 0.0
    %778 = vmatprep.subr.mxu0 0.0
    %779 = vmatpush1.xpose.msra.mxu0 0.0
    %780 = vmatprep.subr.mxu0 0.0
    %781 = vmatpush1.xpose.msra.mxu0 0.0
    %782 = vmatprep.subr.mxu0 0.0
    %783 = vmatpush1.xpose.msra.mxu0 0.0
    %784 = vmatprep.subr.mxu0 0.0
    %785 = vmatpush1.xpose.msra.mxu0 0.0
    %786 = vmatprep.subr.mxu0 0.0
    %787 = vmatpush1.xpose.msra.mxu0 0.0
    %788 = vmatprep.subr.mxu0 0.0
    %789 = vmatpush1.xpose.msra.mxu0 0.0
    %790 = vmatprep.subr.mxu0 0.0
    %791 = vmatpush1.xpose.msra.mxu0 0.0
    %792 = vmatprep.subr.mxu0 0.0
    %793 = vmatpush1.xpose.msra.mxu0 0.0
    %794 = vmatprep.subr.mxu0 0.0
    %795 = vmatpush1.xpose.msra.mxu0 0.0
    %796 = vmatprep.subr.mxu0 0.0
    %797 = vmatpush1.xpose.msra.mxu0 0.0
    %798 = vmatprep.subr.mxu0 0.0
    %799 = vmatpush1.xpose.msra.mxu0 0.0
    %800 = vmatprep.subr.mxu0 0.0
    %801 = vmatpush1.xpose.msra.mxu0 0.0
    %802 = vmatprep.mubr.f32.mxu0 0.0
    %803 = vmatmul.mubr.f32.gmra.mrb[0].mxu0 %v734
    %v804 = vpop.f32.mrb[0].mxu0
    %v805 = vadd.f32 0.0, %v804
    %v806 = vpop.f32.mrb[0].mxu0
    %807 = vdwg.mxu0
    %v808 = vmul.f32 %v273, 0.35355338
    %v809 = vmul.f32 %v349, 0.35355338
    %v810 = vmul.f32 %v425, 0.35355338
    %v811 = vmul.f32 %v501, 0.35355338
    %v812 = vmul.f32 %v577, 0.35355338
    %v813 = vmul.f32 %v653, 0.35355338
    %v814 = vmul.f32 %v729, 0.35355338
    %v815 = vmul.f32 %v805, 0.35355338
    %v824 = vlaneseq
    %v825 = vshrl.u32 %v824, 7
    %v826 = vsub.s32 0, %v825
    %v827 = vrot.slane %v36, %v826
    %v828 = vlaneseq
    %v829 = vshrl.u32 %v828, 7
    %v830 = vsub.s32 0, %v829
    %v831 = vrot.slane %v37, %v830
    %v832 = vlaneseq
    %v833 = vshrl.u32 %v832, 7
    %v834 = vsub.s32 0, %v833
    %v835 = vrot.slane %v38, %v834
    %v836 = vlaneseq
    %v837 = vshrl.u32 %v836, 7
    %v838 = vsub.s32 0, %v837
    %v839 = vrot.slane %v39, %v838
    %v840 = vlaneseq
    %v841 = vshrl.u32 %v840, 7
    %v842 = vsub.s32 0, %v841
    %v843 = vrot.slane %v40, %v842
    %v844 = vlaneseq
    %v845 = vshrl.u32 %v844, 7
    %v846 = vsub.s32 0, %v845
    %v847 = vrot.slane %v41, %v846
    %v848 = vlaneseq
    %v849 = vshrl.u32 %v848, 7
    %v850 = vsub.s32 0, %v849
    %v851 = vrot.slane %v42, %v850
    %v852 = vlaneseq
    %v853 = vshrl.u32 %v852, 7
    %v854 = vsub.s32 0, %v853
    %v855 = vrot.slane %v43, %v854
    %v864 = vadd.f32 %v808, %v827
    %v865 = vadd.f32 %v809, %v831
    %v866 = vadd.f32 %v810, %v835
    %v867 = vadd.f32 %v811, %v839
    %v868 = vadd.f32 %v812, %v843
    %v869 = vadd.f32 %v813, %v847
    %v870 = vadd.f32 %v814, %v851
    %v871 = vadd.f32 %v815, %v855
    %v872 = vsel %vm201, %v864, -inf
    %873 = vmax.xlane.f32.xlu0 %v872
    %v874 = vpop.xlane.xlu0 %873
    %v875 = vsel %vm201, %v865, -inf
    %876 = vmax.xlane.f32.xlu0 %v875
    %v877 = vpop.xlane.xlu0 %876
    %v878 = vsel %vm201, %v866, -inf
    %879 = vmax.xlane.f32.xlu0 %v878
    %v880 = vpop.xlane.xlu0 %879
    %v881 = vsel %vm201, %v867, -inf
    %882 = vmax.xlane.f32.xlu0 %v881
    %v883 = vpop.xlane.xlu0 %882
    %v884 = vsel %vm201, %v868, -inf
    %885 = vmax.xlane.f32.xlu0 %v884
    %v886 = vpop.xlane.xlu0 %885
    %v887 = vsel %vm201, %v869, -inf
    %888 = vmax.xlane.f32.xlu0 %v887
    %v889 = vpop.xlane.xlu0 %888
    %v890 = vsel %vm201, %v870, -inf
    %891 = vmax.xlane.f32.xlu0 %v890
    %v892 = vpop.xlane.xlu0 %891
    %v893 = vsel %vm201, %v871, -inf
    %894 = vmax.xlane.f32.xlu0 %v893
    %v895 = vpop.xlane.xlu0 %894
    %v896 = vsub.f32 %v864, %v874
    %v897 = vsub.f32 %v865, %v877
    %v898 = vsub.f32 %v866, %v880
    %v899 = vsub.f32 %v867, %v883
    %v900 = vsub.f32 %v868, %v886
    %v901 = vsub.f32 %v869, %v889
    %v902 = vsub.f32 %v870, %v892
    %v903 = vsub.f32 %v871, %v895
    %v904 = vmul.f32 %v896, 1.442695
    %v905 = vpow.pop %v904
    %v906 = vmul.f32 %v897, 1.442695
    %v907 = vpow.pop %v906
    %v908 = vmul.f32 %v898, 1.442695
    %v909 = vpow.pop %v908
    %v910 = vmul.f32 %v899, 1.442695
    %v911 = vpow.pop %v910
    %v912 = vmul.f32 %v900, 1.442695
    %v913 = vpow.pop %v912
    %v914 = vmul.f32 %v901, 1.442695
    %v915 = vpow.pop %v914
    %v916 = vmul.f32 %v902, 1.442695
    %v917 = vpow.pop %v916
    %v918 = vmul.f32 %v903, 1.442695
    %v919 = vpow.pop %v918
    %v920 = vsel %vm201, %v905, 0.0
    %921 = vadd.xlane.f32.xlu0 %v920
    %v922 = vpop.xlane.xlu0 %921
    %v923 = vsel %vm201, %v907, 0.0
    %924 = vadd.xlane.f32.xlu0 %v923
    %v925 = vpop.xlane.xlu0 %924
    %v926 = vsel %vm201, %v909, 0.0
    %927 = vadd.xlane.f32.xlu0 %v926
    %v928 = vpop.xlane.xlu0 %927
    %v929 = vsel %vm201, %v911, 0.0
    %930 = vadd.xlane.f32.xlu0 %v929
    %v931 = vpop.xlane.xlu0 %930
    %v932 = vsel %vm201, %v913, 0.0
    %933 = vadd.xlane.f32.xlu0 %v932
    %v934 = vpop.xlane.xlu0 %933
    %v935 = vsel %vm201, %v915, 0.0
    %936 = vadd.xlane.f32.xlu0 %v935
    %v937 = vpop.xlane.xlu0 %936
    %v938 = vsel %vm201, %v917, 0.0
    %939 = vadd.xlane.f32.xlu0 %v938
    %v940 = vpop.xlane.xlu0 %939
    %v941 = vsel %vm201, %v919, 0.0
    %942 = vadd.xlane.f32.xlu0 %v941
    %v943 = vpop.xlane.xlu0 %942
    %v944 = vrcp.pop %v922
    %v945 = vmul.f32 %v905, %v944
    %v946 = vrcp.pop %v925
    %v947 = vmul.f32 %v907, %v946
    %v948 = vrcp.pop %v928
    %v949 = vmul.f32 %v909, %v948
    %v950 = vrcp.pop %v931
    %v951 = vmul.f32 %v911, %v950
    %v952 = vrcp.pop %v934
    %v953 = vmul.f32 %v913, %v952
    %v954 = vrcp.pop %v937
    %v955 = vmul.f32 %v915, %v954
    %v956 = vrcp.pop %v940
    %v957 = vmul.f32 %v917, %v956
    %v958 = vrcp.pop %v943
    %v959 = vmul.f32 %v919, %v958
    %960 = vrot.lane.b32.xlu0 %v177, 64
    %v961 = vpop.permute.xlu0 %960
    %v964 = vsel %vm201, %v945, 0
    %966 = vmatprep.subr.mxu0 0.0
    %967 = vmatpush1.msra.mxu0 %v961
    %968 = vmatprep.subr.mxu0 0.0
    %969 = vmatpush1.msra.mxu0 0.0
    %970 = vmatprep.subr.mxu0 0.0
    %971 = vmatpush1.msra.mxu0 0.0
    %972 = vmatprep.subr.mxu0 0.0
    %973 = vmatpush1.msra.mxu0 0.0
    %974 = vmatprep.subr.mxu0 0.0
    %975 = vmatpush1.msra.mxu0 0.0
    %976 = vmatprep.subr.mxu0 0.0
    %977 = vmatpush1.msra.mxu0 0.0
    %978 = vmatprep.subr.mxu0 0.0
    %979 = vmatpush1.msra.mxu0 0.0
    %980 = vmatprep.subr.mxu0 0.0
    %981 = vmatpush1.msra.mxu0 0.0
    %982 = vmatprep.subr.mxu0 0.0
    %983 = vmatpush1.msra.mxu0 0.0
    %984 = vmatprep.subr.mxu0 0.0
    %985 = vmatpush1.msra.mxu0 0.0
    %986 = vmatprep.subr.mxu0 0.0
    %987 = vmatpush1.msra.mxu0 0.0
    %988 = vmatprep.subr.mxu0 0.0
    %989 = vmatpush1.msra.mxu0 0.0
    %990 = vmatprep.subr.mxu0 0.0
    %991 = vmatpush1.msra.mxu0 0.0
    %992 = vmatprep.subr.mxu0 0.0
    %993 = vmatpush1.msra.mxu0 0.0
    %994 = vmatprep.subr.mxu0 0.0
    %995 = vmatpush1.msra.mxu0 0.0
    %996 = vmatprep.subr.mxu0 0.0
    %997 = vmatpush1.msra.mxu0 0.0
    %998 = vmatprep.subr.mxu0 0.0
    %999 = vmatpush1.msra.mxu0 0.0
    %1000 = vmatprep.subr.mxu0 0.0
    %1001 = vmatpush1.msra.mxu0 0.0
    %1002 = vmatprep.subr.mxu0 0.0
    %1003 = vmatpush1.msra.mxu0 0.0
    %1004 = vmatprep.subr.mxu0 0.0
    %1005 = vmatpush1.msra.mxu0 0.0
    %1006 = vmatprep.subr.mxu0 0.0
    %1007 = vmatpush1.msra.mxu0 0.0
    %1008 = vmatprep.subr.mxu0 0.0
    %1009 = vmatpush1.msra.mxu0 0.0
    %1010 = vmatprep.subr.mxu0 0.0
    %1011 = vmatpush1.msra.mxu0 0.0
    %1012 = vmatprep.subr.mxu0 0.0
    %1013 = vmatpush1.msra.mxu0 0.0
    %1014 = vmatprep.subr.mxu0 0.0
    %1015 = vmatpush1.msra.mxu0 0.0
    %1016 = vmatprep.subr.mxu0 0.0
    %1017 = vmatpush1.msra.mxu0 0.0
    %1018 = vmatprep.subr.mxu0 0.0
    %1019 = vmatpush1.msra.mxu0 0.0
    %1020 = vmatprep.subr.mxu0 0.0
    %1021 = vmatpush1.msra.mxu0 0.0
    %1022 = vmatprep.subr.mxu0 0.0
    %1023 = vmatpush1.msra.mxu0 0.0
    %1024 = vmatprep.subr.mxu0 0.0
    %1025 = vmatpush1.msra.mxu0 0.0
    %1026 = vmatprep.subr.mxu0 0.0
    %1027 = vmatpush1.msra.mxu0 0.0
    %1028 = vmatprep.subr.mxu0 0.0
    %1029 = vmatpush1.msra.mxu0 0.0
    %1030 = vmatprep.mubr.f32.mxu0 0.0
    %1031 = vmatmul.mubr.f32.gmra.mrb[0].mxu0 %v964
    %v1032 = vpop.f32.mrb[0].mxu0
    %v1033 = vadd.f32 0.0, %v1032
    %v1034 = vpop.f32.mrb[0].mxu0
    %1035 = vdwg.mxu0
    %1036 = vrot.lane.b32.xlu0 %v182, 64
    %v1037 = vpop.permute.xlu0 %1036
    %v1040 = vsel %vm201, %v947, 0
    %1042 = vmatprep.subr.mxu0 0.0
    %1043 = vmatpush1.msra.mxu0 %v1037
    %1044 = vmatprep.subr.mxu0 0.0
    %1045 = vmatpush1.msra.mxu0 0.0
    %1046 = vmatprep.subr.mxu0 0.0
    %1047 = vmatpush1.msra.mxu0 0.0
    %1048 = vmatprep.subr.mxu0 0.0
    %1049 = vmatpush1.msra.mxu0 0.0
    %1050 = vmatprep.subr.mxu0 0.0
    %1051 = vmatpush1.msra.mxu0 0.0
    %1052 = vmatprep.subr.mxu0 0.0
    %1053 = vmatpush1.msra.mxu0 0.0
    %1054 = vmatprep.subr.mxu0 0.0
    %1055 = vmatpush1.msra.mxu0 0.0
    %1056 = vmatprep.subr.mxu0 0.0
    %1057 = vmatpush1.msra.mxu0 0.0
    %1058 = vmatprep.subr.mxu0 0.0
    %1059 = vmatpush1.msra.mxu0 0.0
    %1060 = vmatprep.subr.mxu0 0.0
    %1061 = vmatpush1.msra.mxu0 0.0
    %1062 = vmatprep.subr.mxu0 0.0
    %1063 = vmatpush1.msra.mxu0 0.0
    %1064 = vmatprep.subr.mxu0 0.0
    %1065 = vmatpush1.msra.mxu0 0.0
    %1066 = vmatprep.subr.mxu0 0.0
    %1067 = vmatpush1.msra.mxu0 0.0
    %1068 = vmatprep.subr.mxu0 0.0
    %1069 = vmatpush1.msra.mxu0 0.0
    %1070 = vmatprep.subr.mxu0 0.0
    %1071 = vmatpush1.msra.mxu0 0.0
    %1072 = vmatprep.subr.mxu0 0.0
    %1073 = vmatpush1.msra.mxu0 0.0
    %1074 = vmatprep.subr.mxu0 0.0
    %1075 = vmatpush1.msra.mxu0 0.0
    %1076 = vmatprep.subr.mxu0 0.0
    %1077 = vmatpush1.msra.mxu0 0.0
    %1078 = vmatprep.subr.mxu0 0.0
    %1079 = vmatpush1.msra.mxu0 0.0
    %1080 = vmatprep.subr.mxu0 0.0
    %1081 = vmatpush1.msra.mxu0 0.0
    %1082 = vmatprep.subr.mxu0 0.0
    %1083 = vmatpush1.msra.mxu0 0.0
    %1084 = vmatprep.subr.mxu0 0.0
    %1085 = vmatpush1.msra.mxu0 0.0
    %1086 = vmatprep.subr.mxu0 0.0
    %1087 = vmatpush1.msra.mxu0 0.0
    %1088 = vmatprep.subr.mxu0 0.0
    %1089 = vmatpush1.msra.mxu0 0.0
    %1090 = vmatprep.subr.mxu0 0.0
    %1091 = vmatpush1.msra.mxu0 0.0
    %1092 = vmatprep.subr.mxu0 0.0
    %1093 = vmatpush1.msra.mxu0 0.0
    %1094 = vmatprep.subr.mxu0 0.0
    %1095 = vmatpush1.msra.mxu0 0.0
    %1096 = vmatprep.subr.mxu0 0.0
    %1097 = vmatpush1.msra.mxu0 0.0
    %1098 = vmatprep.subr.mxu0 0.0
    %1099 = vmatpush1.msra.mxu0 0.0
    %1100 = vmatprep.subr.mxu0 0.0
    %1101 = vmatpush1.msra.mxu0 0.0
    %1102 = vmatprep.subr.mxu0 0.0
    %1103 = vmatpush1.msra.mxu0 0.0
    %1104 = vmatprep.subr.mxu0 0.0
    %1105 = vmatpush1.msra.mxu0 0.0
    %1106 = vmatprep.mubr.f32.mxu0 0.0
    %1107 = vmatmul.mubr.f32.gmra.mrb[0].mxu0 %v1040
    %v1108 = vpop.f32.mrb[0].mxu0
    %v1109 = vadd.f32 0.0, %v1108
    %v1110 = vpop.f32.mrb[0].mxu0
    %1111 = vdwg.mxu0
    %1112 = vrot.lane.b32.xlu0 %v188, 64
    %v1113 = vpop.permute.xlu0 %1112
    %v1116 = vsel %vm201, %v949, 0
    %1118 = vmatprep.subr.mxu0 0.0
    %1119 = vmatpush1.msra.mxu0 %v1113
    %1120 = vmatprep.subr.mxu0 0.0
    %1121 = vmatpush1.msra.mxu0 0.0
    %1122 = vmatprep.subr.mxu0 0.0
    %1123 = vmatpush1.msra.mxu0 0.0
    %1124 = vmatprep.subr.mxu0 0.0
    %1125 = vmatpush1.msra.mxu0 0.0
    %1126 = vmatprep.subr.mxu0 0.0
    %1127 = vmatpush1.msra.mxu0 0.0
    %1128 = vmatprep.subr.mxu0 0.0
    %1129 = vmatpush1.msra.mxu0 0.0
    %1130 = vmatprep.subr.mxu0 0.0
    %1131 = vmatpush1.msra.mxu0 0.0
    %1132 = vmatprep.subr.mxu0 0.0
    %1133 = vmatpush1.msra.mxu0 0.0
    %1134 = vmatprep.subr.mxu0 0.0
    %1135 = vmatpush1.msra.mxu0 0.0
    %1136 = vmatprep.subr.mxu0 0.0
    %1137 = vmatpush1.msra.mxu0 0.0
    %1138 = vmatprep.subr.mxu0 0.0
    %1139 = vmatpush1.msra.mxu0 0.0
    %1140 = vmatprep.subr.mxu0 0.0
    %1141 = vmatpush1.msra.mxu0 0.0
    %1142 = vmatprep.subr.mxu0 0.0
    %1143 = vmatpush1.msra.mxu0 0.0
    %1144 = vmatprep.subr.mxu0 0.0
    %1145 = vmatpush1.msra.mxu0 0.0
    %1146 = vmatprep.subr.mxu0 0.0
    %1147 = vmatpush1.msra.mxu0 0.0
    %1148 = vmatprep.subr.mxu0 0.0
    %1149 = vmatpush1.msra.mxu0 0.0
    %1150 = vmatprep.subr.mxu0 0.0
    %1151 = vmatpush1.msra.mxu0 0.0
    %1152 = vmatprep.subr.mxu0 0.0
    %1153 = vmatpush1.msra.mxu0 0.0
    %1154 = vmatprep.subr.mxu0 0.0
    %1155 = vmatpush1.msra.mxu0 0.0
    %1156 = vmatprep.subr.mxu0 0.0
    %1157 = vmatpush1.msra.mxu0 0.0
    %1158 = vmatprep.subr.mxu0 0.0
    %1159 = vmatpush1.msra.mxu0 0.0
    %1160 = vmatprep.subr.mxu0 0.0
    %1161 = vmatpush1.msra.mxu0 0.0
    %1162 = vmatprep.subr.mxu0 0.0
    %1163 = vmatpush1.msra.mxu0 0.0
    %1164 = vmatprep.subr.mxu0 0.0
    %1165 = vmatpush1.msra.mxu0 0.0
    %1166 = vmatprep.subr.mxu0 0.0
    %1167 = vmatpush1.msra.mxu0 0.0
    %1168 = vmatprep.subr.mxu0 0.0
    %1169 = vmatpush1.msra.mxu0 0.0
    %1170 = vmatprep.subr.mxu0 0.0
    %1171 = vmatpush1.msra.mxu0 0.0
    %1172 = vmatprep.subr.mxu0 0.0
    %1173 = vmatpush1.msra.mxu0 0.0
    %1174 = vmatprep.subr.mxu0 0.0
    %1175 = vmatpush1.msra.mxu0 0.0
    %1176 = vmatprep.subr.mxu0 0.0
    %1177 = vmatpush1.msra.mxu0 0.0
    %1178 = vmatprep.subr.mxu0 0.0
    %1179 = vmatpush1.msra.mxu0 0.0
    %1180 = vmatprep.subr.mxu0 0.0
    %1181 = vmatpush1.msra.mxu0 0.0
    %1182 = vmatprep.mubr.f32.mxu0 0.0
    %1183 = vmatmul.mubr.f32.gmra.mrb[0].mxu0 %v1116
    %v1184 = vpop.f32.mrb[0].mxu0
    %v1185 = vadd.f32 0.0, %v1184
    %v1186 = vpop.f32.mrb[0].mxu0
    %1187 = vdwg.mxu0
    %1188 = vrot.lane.b32.xlu0 %v190, 64
    %v1189 = vpop.permute.xlu0 %1188
    %v1192 = vsel %vm201, %v951, 0
    %1194 = vmatprep.subr.mxu0 0.0
    %1195 = vmatpush1.msra.mxu0 %v1189
    %1196 = vmatprep.subr.mxu0 0.0
    %1197 = vmatpush1.msra.mxu0 0.0
    %1198 = vmatprep.subr.mxu0 0.0
    %1199 = vmatpush1.msra.mxu0 0.0
    %1200 = vmatprep.subr.mxu0 0.0
    %1201 = vmatpush1.msra.mxu0 0.0
    %1202 = vmatprep.subr.mxu0 0.0
    %1203 = vmatpush1.msra.mxu0 0.0
    %1204 = vmatprep.subr.mxu0 0.0
    %1205 = vmatpush1.msra.mxu0 0.0
    %1206 = vmatprep.subr.mxu0 0.0
    %1207 = vmatpush1.msra.mxu0 0.0
    %1208 = vmatprep.subr.mxu0 0.0
    %1209 = vmatpush1.msra.mxu0 0.0
    %1210 = vmatprep.subr.mxu0 0.0
    %1211 = vmatpush1.msra.mxu0 0.0
    %1212 = vmatprep.subr.mxu0 0.0
    %1213 = vmatpush1.msra.mxu0 0.0
    %1214 = vmatprep.subr.mxu0 0.0
    %1215 = vmatpush1.msra.mxu0 0.0
    %1216 = vmatprep.subr.mxu0 0.0
    %1217 = vmatpush1.msra.mxu0 0.0
    %1218 = vmatprep.subr.mxu0 0.0
    %1219 = vmatpush1.msra.mxu0 0.0
    %1220 = vmatprep.subr.mxu0 0.0
    %1221 = vmatpush1.msra.mxu0 0.0
    %1222 = vmatprep.subr.mxu0 0.0
    %1223 = vmatpush1.msra.mxu0 0.0
    %1224 = vmatprep.subr.mxu0 0.0
    %1225 = vmatpush1.msra.mxu0 0.0
    %1226 = vmatprep.subr.mxu0 0.0
    %1227 = vmatpush1.msra.mxu0 0.0
    %1228 = vmatprep.subr.mxu0 0.0
    %1229 = vmatpush1.msra.mxu0 0.0
    %1230 = vmatprep.subr.mxu0 0.0
    %1231 = vmatpush1.msra.mxu0 0.0
    %1232 = vmatprep.subr.mxu0 0.0
    %1233 = vmatpush1.msra.mxu0 0.0
    %1234 = vmatprep.subr.mxu0 0.0
    %1235 = vmatpush1.msra.mxu0 0.0
    %1236 = vmatprep.subr.mxu0 0.0
    %1237 = vmatpush1.msra.mxu0 0.0
    %1238 = vmatprep.subr.mxu0 0.0
    %1239 = vmatpush1.msra.mxu0 0.0
    %1240 = vmatprep.subr.mxu0 0.0
    %1241 = vmatpush1.msra.mxu0 0.0
    %1242 = vmatprep.subr.mxu0 0.0
    %1243 = vmatpush1.msra.mxu0 0.0
    %1244 = vmatprep.subr.mxu0 0.0
    %1245 = vmatpush1.msra.mxu0 0.0
    %1246 = vmatprep.subr.mxu0 0.0
    %1247 = vmatpush1.msra.mxu0 0.0
    %1248 = vmatprep.subr.mxu0 0.0
    %1249 = vmatpush1.msra.mxu0 0.0
    %1250 = vmatprep.subr.mxu0 0.0
    %1251 = vmatpush1.msra.mxu0 0.0
    %1252 = vmatprep.subr.mxu0 0.0
    %1253 = vmatpush1.msra.mxu0 0.0
    %1254 = vmatprep.subr.mxu0 0.0
    %1255 = vmatpush1.msra.mxu0 0.0
    %1256 = vmatprep.subr.mxu0 0.0
    %1257 = vmatpush1.msra.mxu0 0.0
    %1258 = vmatprep.mubr.f32.mxu0 0.0
    %1259 = vmatmul.mubr.f32.gmra.mrb[0].mxu0 %v1192
    %v1260 = vpop.f32.mrb[0].mxu0
    %v1261 = vadd.f32 0.0, %v1260
    %v1262 = vpop.f32.mrb[0].mxu0
    %1263 = vdwg.mxu0
    %1264 = vrot.lane.b32.xlu0 %v192, 64
    %v1265 = vpop.permute.xlu0 %1264
    %v1268 = vsel %vm201, %v953, 0
    %1270 = vmatprep.subr.mxu0 0.0
    %1271 = vmatpush1.msra.mxu0 %v1265
    %1272 = vmatprep.subr.mxu0 0.0
    %1273 = vmatpush1.msra.mxu0 0.0
    %1274 = vmatprep.subr.mxu0 0.0
    %1275 = vmatpush1.msra.mxu0 0.0
    %1276 = vmatprep.subr.mxu0 0.0
    %1277 = vmatpush1.msra.mxu0 0.0
    %1278 = vmatprep.subr.mxu0 0.0
    %1279 = vmatpush1.msra.mxu0 0.0
    %1280 = vmatprep.subr.mxu0 0.0
    %1281 = vmatpush1.msra.mxu0 0.0
    %1282 = vmatprep.subr.mxu0 0.0
    %1283 = vmatpush1.msra.mxu0 0.0
    %1284 = vmatprep.subr.mxu0 0.0
    %1285 = vmatpush1.msra.mxu0 0.0
    %1286 = vmatprep.subr.mxu0 0.0
    %1287 = vmatpush1.msra.mxu0 0.0
    %1288 = vmatprep.subr.mxu0 0.0
    %1289 = vmatpush1.msra.mxu0 0.0
    %1290 = vmatprep.subr.mxu0 0.0
    %1291 = vmatpush1.msra.mxu0 0.0
    %1292 = vmatprep.subr.mxu0 0.0
    %1293 = vmatpush1.msra.mxu0 0.0
    %1294 = vmatprep.subr.mxu0 0.0
    %1295 = vmatpush1.msra.mxu0 0.0
    %1296 = vmatprep.subr.mxu0 0.0
    %1297 = vmatpush1.msra.mxu0 0.0
    %1298 = vmatprep.subr.mxu0 0.0
    %1299 = vmatpush1.msra.mxu0 0.0
    %1300 = vmatprep.subr.mxu0 0.0
    %1301 = vmatpush1.msra.mxu0 0.0
    %1302 = vmatprep.subr.mxu0 0.0
    %1303 = vmatpush1.msra.mxu0 0.0
    %1304 = vmatprep.subr.mxu0 0.0
    %1305 = vmatpush1.msra.mxu0 0.0
    %1306 = vmatprep.subr.mxu0 0.0
    %1307 = vmatpush1.msra.mxu0 0.0
    %1308 = vmatprep.subr.mxu0 0.0
    %1309 = vmatpush1.msra.mxu0 0.0
    %1310 = vmatprep.subr.mxu0 0.0
    %1311 = vmatpush1.msra.mxu0 0.0
    %1312 = vmatprep.subr.mxu0 0.0
    %1313 = vmatpush1.msra.mxu0 0.0
    %1314 = vmatprep.subr.mxu0 0.0
    %1315 = vmatpush1.msra.mxu0 0.0
    %1316 = vmatprep.subr.mxu0 0.0
    %1317 = vmatpush1.msra.mxu0 0.0
    %1318 = vmatprep.subr.mxu0 0.0
    %1319 = vmatpush1.msra.mxu0 0.0
    %1320 = vmatprep.subr.mxu0 0.0
    %1321 = vmatpush1.msra.mxu0 0.0
    %1322 = vmatprep.subr.mxu0 0.0
    %1323 = vmatpush1.msra.mxu0 0.0
    %1324 = vmatprep.subr.mxu0 0.0
    %1325 = vmatpush1.msra.mxu0 0.0
    %1326 = vmatprep.subr.mxu0 0.0
    %1327 = vmatpush1.msra.mxu0 0.0
    %1328 = vmatprep.subr.mxu0 0.0
    %1329 = vmatpush1.msra.mxu0 0.0
    %1330 = vmatprep.subr.mxu0 0.0
    %1331 = vmatpush1.msra.mxu0 0.0
    %1332 = vmatprep.subr.mxu0 0.0
    %1333 = vmatpush1.msra.mxu0 0.0
    %1334 = vmatprep.mubr.f32.mxu0 0.0
    %1335 = vmatmul.mubr.f32.gmra.mrb[0].mxu0 %v1268
    %v1336 = vpop.f32.mrb[0].mxu0
    %v1337 = vadd.f32 0.0, %v1336
    %v1338 = vpop.f32.mrb[0].mxu0
    %1339 = vdwg.mxu0
    %1340 = vrot.lane.b32.xlu0 %v194, 64
    %v1341 = vpop.permute.xlu0 %1340
    %v1344 = vsel %vm201, %v955, 0
    %1346 = vmatprep.subr.mxu0 0.0
    %1347 = vmatpush1.msra.mxu0 %v1341
    %1348 = vmatprep.subr.mxu0 0.0
    %1349 = vmatpush1.msra.mxu0 0.0
    %1350 = vmatprep.subr.mxu0 0.0
    %1351 = vmatpush1.msra.mxu0 0.0
    %1352 = vmatprep.subr.mxu0 0.0
    %1353 = vmatpush1.msra.mxu0 0.0
    %1354 = vmatprep.subr.mxu0 0.0
    %1355 = vmatpush1.msra.mxu0 0.0
    %1356 = vmatprep.subr.mxu0 0.0
    %1357 = vmatpush1.msra.mxu0 0.0
    %1358 = vmatprep.subr.mxu0 0.0
    %1359 = vmatpush1.msra.mxu0 0.0
    %1360 = vmatprep.subr.mxu0 0.0
    %1361 = vmatpush1.msra.mxu0 0.0
    %1362 = vmatprep.subr.mxu0 0.0
    %1363 = vmatpush1.msra.mxu0 0.0
    %1364 = vmatprep.subr.mxu0 0.0
    %1365 = vmatpush1.msra.mxu0 0.0
    %1366 = vmatprep.subr.mxu0 0.0
    %1367 = vmatpush1.msra.mxu0 0.0
    %1368 = vmatprep.subr.mxu0 0.0
    %1369 = vmatpush1.msra.mxu0 0.0
    %1370 = vmatprep.subr.mxu0 0.0
    %1371 = vmatpush1.msra.mxu0 0.0
    %1372 = vmatprep.subr.mxu0 0.0
    %1373 = vmatpush1.msra.mxu0 0.0
    %1374 = vmatprep.subr.mxu0 0.0
    %1375 = vmatpush1.msra.mxu0 0.0
    %1376 = vmatprep.subr.mxu0 0.0
    %1377 = vmatpush1.msra.mxu0 0.0
    %1378 = vmatprep.subr.mxu0 0.0
    %1379 = vmatpush1.msra.mxu0 0.0
    %1380 = vmatprep.subr.mxu0 0.0
    %1381 = vmatpush1.msra.mxu0 0.0
    %1382 = vmatprep.subr.mxu0 0.0
    %1383 = vmatpush1.msra.mxu0 0.0
    %1384 = vmatprep.subr.mxu0 0.0
    %1385 = vmatpush1.msra.mxu0 0.0
    %1386 = vmatprep.subr.mxu0 0.0
    %1387 = vmatpush1.msra.mxu0 0.0
    %1388 = vmatprep.subr.mxu0 0.0
    %1389 = vmatpush1.msra.mxu0 0.0
    %1390 = vmatprep.subr.mxu0 0.0
    %1391 = vmatpush1.msra.mxu0 0.0
    %1392 = vmatprep.subr.mxu0 0.0
    %1393 = vmatpush1.msra.mxu0 0.0
    %1394 = vmatprep.subr.mxu0 0.0
    %1395 = vmatpush1.msra.mxu0 0.0
    %1396 = vmatprep.subr.mxu0 0.0
    %1397 = vmatpush1.msra.mxu0 0.0
    %1398 = vmatprep.subr.mxu0 0.0
    %1399 = vmatpush1.msra.mxu0 0.0
    %1400 = vmatprep.subr.mxu0 0.0
    %1401 = vmatpush1.msra.mxu0 0.0
    %1402 = vmatprep.subr.mxu0 0.0
    %1403 = vmatpush1.msra.mxu0 0.0
    %1404 = vmatprep.subr.mxu0 0.0
    %1405 = vmatpush1.msra.mxu0 0.0
    %1406 = vmatprep.subr.mxu0 0.0
    %1407 = vmatpush1.msra.mxu0 0.0
    %1408 = vmatprep.subr.mxu0 0.0
    %1409 = vmatpush1.msra.mxu0 0.0
    %1410 = vmatprep.mubr.f32.mxu0 0.0
    %1411 = vmatmul.mubr.f32.gmra.mrb[0].mxu0 %v1344
    %v1412 = vpop.f32.mrb[0].mxu0
    %v1413 = vadd.f32 0.0, %v1412
    %v1414 = vpop.f32.mrb[0].mxu0
    %1415 = vdwg.mxu0
    %1416 = vrot.lane.b32.xlu0 %v196, 64
    %v1417 = vpop.permute.xlu0 %1416
    %v1420 = vsel %vm201, %v957, 0
    %1422 = vmatprep.subr.mxu0 0.0
    %1423 = vmatpush1.msra.mxu0 %v1417
    %1424 = vmatprep.subr.mxu0 0.0
    %1425 = vmatpush1.msra.mxu0 0.0
    %1426 = vmatprep.subr.mxu0 0.0
    %1427 = vmatpush1.msra.mxu0 0.0
    %1428 = vmatprep.subr.mxu0 0.0
    %1429 = vmatpush1.msra.mxu0 0.0
    %1430 = vmatprep.subr.mxu0 0.0
    %1431 = vmatpush1.msra.mxu0 0.0
    %1432 = vmatprep.subr.mxu0 0.0
    %1433 = vmatpush1.msra.mxu0 0.0
    %1434 = vmatprep.subr.mxu0 0.0
    %1435 = vmatpush1.msra.mxu0 0.0
    %1436 = vmatprep.subr.mxu0 0.0
    %1437 = vmatpush1.msra.mxu0 0.0
    %1438 = vmatprep.subr.mxu0 0.0
    %1439 = vmatpush1.msra.mxu0 0.0
    %1440 = vmatprep.subr.mxu0 0.0
    %1441 = vmatpush1.msra.mxu0 0.0
    %1442 = vmatprep.subr.mxu0 0.0
    %1443 = vmatpush1.msra.mxu0 0.0
    %1444 = vmatprep.subr.mxu0 0.0
    %1445 = vmatpush1.msra.mxu0 0.0
    %1446 = vmatprep.subr.mxu0 0.0
    %1447 = vmatpush1.msra.mxu0 0.0
    %1448 = vmatprep.subr.mxu0 0.0
    %1449 = vmatpush1.msra.mxu0 0.0
    %1450 = vmatprep.subr.mxu0 0.0
    %1451 = vmatpush1.msra.mxu0 0.0
    %1452 = vmatprep.subr.mxu0 0.0
    %1453 = vmatpush1.msra.mxu0 0.0
    %1454 = vmatprep.subr.mxu0 0.0
    %1455 = vmatpush1.msra.mxu0 0.0
    %1456 = vmatprep.subr.mxu0 0.0
    %1457 = vmatpush1.msra.mxu0 0.0
    %1458 = vmatprep.subr.mxu0 0.0
    %1459 = vmatpush1.msra.mxu0 0.0
    %1460 = vmatprep.subr.mxu0 0.0
    %1461 = vmatpush1.msra.mxu0 0.0
    %1462 = vmatprep.subr.mxu0 0.0
    %1463 = vmatpush1.msra.mxu0 0.0
    %1464 = vmatprep.subr.mxu0 0.0
    %1465 = vmatpush1.msra.mxu0 0.0
    %1466 = vmatprep.subr.mxu0 0.0
    %1467 = vmatpush1.msra.mxu0 0.0
    %1468 = vmatprep.subr.mxu0 0.0
    %1469 = vmatpush1.msra.mxu0 0.0
    %1470 = vmatprep.subr.mxu0 0.0
    %1471 = vmatpush1.msra.mxu0 0.0
    %1472 = vmatprep.subr.mxu0 0.0
    %1473 = vmatpush1.msra.mxu0 0.0
    %1474 = vmatprep.subr.mxu0 0.0
    %1475 = vmatpush1.msra.mxu0 0.0
    %1476 = vmatprep.subr.mxu0 0.0
    %1477 = vmatpush1.msra.mxu0 0.0
    %1478 = vmatprep.subr.mxu0 0.0
    %1479 = vmatpush1.msra.mxu0 0.0
    %1480 = vmatprep.subr.mxu0 0.0
    %1481 = vmatpush1.msra.mxu0 0.0
    %1482 = vmatprep.subr.mxu0 0.0
    %1483 = vmatpush1.msra.mxu0 0.0
    %1484 = vmatprep.subr.mxu0 0.0
    %1485 = vmatpush1.msra.mxu0 0.0
    %1486 = vmatprep.mubr.f32.mxu0 0.0
    %1487 = vmatmul.mubr.f32.gmra.mrb[0].mxu0 %v1420
    %v1488 = vpop.f32.mrb[0].mxu0
    %v1489 = vadd.f32 0.0, %v1488
    %v1490 = vpop.f32.mrb[0].mxu0
    %1491 = vdwg.mxu0
    %1492 = vrot.lane.b32.xlu0 %v198, 64
    %v1493 = vpop.permute.xlu0 %1492
    %v1496 = vsel %vm201, %v959, 0
    %1498 = vmatprep.subr.mxu0 0.0
    %1499 = vmatpush1.msra.mxu0 %v1493
    %1500 = vmatprep.subr.mxu0 0.0
    %1501 = vmatpush1.msra.mxu0 0.0
    %1502 = vmatprep.subr.mxu0 0.0
    %1503 = vmatpush1.msra.mxu0 0.0
    %1504 = vmatprep.subr.mxu0 0.0
    %1505 = vmatpush1.msra.mxu0 0.0
    %1506 = vmatprep.subr.mxu0 0.0
    %1507 = vmatpush1.msra.mxu0 0.0
    %1508 = vmatprep.subr.mxu0 0.0
    %1509 = vmatpush1.msra.mxu0 0.0
    %1510 = vmatprep.subr.mxu0 0.0
    %1511 = vmatpush1.msra.mxu0 0.0
    %1512 = vmatprep.subr.mxu0 0.0
    %1513 = vmatpush1.msra.mxu0 0.0
    %1514 = vmatprep.subr.mxu0 0.0
    %1515 = vmatpush1.msra.mxu0 0.0
    %1516 = vmatprep.subr.mxu0 0.0
    %1517 = vmatpush1.msra.mxu0 0.0
    %1518 = vmatprep.subr.mxu0 0.0
    %1519 = vmatpush1.msra.mxu0 0.0
    %1520 = vmatprep.subr.mxu0 0.0
    %1521 = vmatpush1.msra.mxu0 0.0
    %1522 = vmatprep.subr.mxu0 0.0
    %1523 = vmatpush1.msra.mxu0 0.0
    %1524 = vmatprep.subr.mxu0 0.0
    %1525 = vmatpush1.msra.mxu0 0.0
    %1526 = vmatprep.subr.mxu0 0.0
    %1527 = vmatpush1.msra.mxu0 0.0
    %1528 = vmatprep.subr.mxu0 0.0
    %1529 = vmatpush1.msra.mxu0 0.0
    %1530 = vmatprep.subr.mxu0 0.0
    %1531 = vmatpush1.msra.mxu0 0.0
    %1532 = vmatprep.subr.mxu0 0.0
    %1533 = vmatpush1.msra.mxu0 0.0
    %1534 = vmatprep.subr.mxu0 0.0
    %1535 = vmatpush1.msra.mxu0 0.0
    %1536 = vmatprep.subr.mxu0 0.0
    %1537 = vmatpush1.msra.mxu0 0.0
    %1538 = vmatprep.subr.mxu0 0.0
    %1539 = vmatpush1.msra.mxu0 0.0
    %1540 = vmatprep.subr.mxu0 0.0
    %1541 = vmatpush1.msra.mxu0 0.0
    %1542 = vmatprep.subr.mxu0 0.0
    %1543 = vmatpush1.msra.mxu0 0.0
    %1544 = vmatprep.subr.mxu0 0.0
    %1545 = vmatpush1.msra.mxu0 0.0
    %1546 = vmatprep.subr.mxu0 0.0
    %1547 = vmatpush1.msra.mxu0 0.0
    %1548 = vmatprep.subr.mxu0 0.0
    %1549 = vmatpush1.msra.mxu0 0.0
    %1550 = vmatprep.subr.mxu0 0.0
    %1551 = vmatpush1.msra.mxu0 0.0
    %1552 = vmatprep.subr.mxu0 0.0
    %1553 = vmatpush1.msra.mxu0 0.0
    %1554 = vmatprep.subr.mxu0 0.0
    %1555 = vmatpush1.msra.mxu0 0.0
    %1556 = vmatprep.subr.mxu0 0.0
    %1557 = vmatpush1.msra.mxu0 0.0
    %1558 = vmatprep.subr.mxu0 0.0
    %1559 = vmatpush1.msra.mxu0 0.0
    %1560 = vmatprep.subr.mxu0 0.0
    %1561 = vmatpush1.msra.mxu0 0.0
    %1562 = vmatprep.mubr.f32.mxu0 0.0
    %1563 = vmatmul.mubr.f32.gmra.mrb[0].mxu0 %v1496
    %v1564 = vpop.f32.mrb[0].mxu0
    %v1565 = vadd.f32 0.0, %v1564
    %v1566 = vpop.f32.mrb[0].mxu0
    %1567 = vdwg.mxu0
    %1570 = vrot.lane.b32.xlu0 %v1185, 8
    %v1571 = vpop.permute.xlu0 %1570
    %1572 = vrot.lane.b32.xlu0 %v1261, 8
    %v1573 = vpop.permute.xlu0 %1572
    %1578 = vrot.lane.b32.xlu0 %v1337, 16
    %v1579 = vpop.permute.xlu0 %1578
    %1580 = vrot.lane.b32.xlu0 %v1413, 16
    %v1581 = vpop.permute.xlu0 %1580
    %1586 = vrot.lane.b32.xlu0 %v1489, 24
    %v1587 = vpop.permute.xlu0 %1586
    %1588 = vrot.lane.b32.xlu0 %v1565, 24
    %v1589 = vpop.permute.xlu0 %1588
    %v1592 = vsel %vm201, %v1033, %v1571
    %v1593 = vsel %vm201, %v1109, %v1573
    %vm1594 = vcmask 130048
    %v1595 = vsel %vm1594, %v1592, %v1579
    %v1596 = vsel %vm1594, %v1593, %v1581
    %vm1597 = vcmask 195584
    %v1598 = vsel %vm1597, %v1595, %v1587
    %v1599 = vsel %vm1597, %v1596, %v1589
    %v1600 = vld [vmem:[%s5] sm:$0xff]
    %v1601 = vld [vmem:[%s5 + $0x8] sm:$0xff]
    %v1602 = vld [vmem:[%s5 + $0x10] sm:$0xff]
    %v1603 = vld [vmem:[%s5 + $0x18] sm:$0xff]
    %v1604 = vlaneseq
    %v1605 = vshrl.u32 %v1604, 7
    %v1606 = vsub.s32 0, %v1605
    %v1607 = vrot.slane %v89, %v1606
    %v1609 = vsel %vm48, %v1598, 0
    %v1612 = vsel %vm48, %v1599, 0
    %1614 = vmatprep.subr.mxu0 0.0
    %1615 = vmatpush1.msra.mxu0 %v1600
    %1616 = vmatprep.subr.mxu0 0.0
    %1617 = vmatpush1.msra.mxu0 %v1601
    %1618 = vmatprep.subr.mxu0 0.0
    %1619 = vmatpush1.msra.mxu0 %v1602
    %1620 = vmatprep.subr.mxu0 0.0
    %1621 = vmatpush1.msra.mxu0 %v1603
    %1622 = vmatprep.subr.mxu0 0.0
    %1623 = vmatpush1.msra.mxu0 0.0
    %1624 = vmatprep.subr.mxu0 0.0
    %1625 = vmatpush1.msra.mxu0 0.0
    %1626 = vmatprep.subr.mxu0 0.0
    %1627 = vmatpush1.msra.mxu0 0.0
    %1628 = vmatprep.subr.mxu0 0.0
    %1629 = vmatpush1.msra.mxu0 0.0
    %1630 = vmatprep.subr.mxu0 0.0
    %1631 = vmatpush1.msra.mxu0 0.0
    %1632 = vmatprep.subr.mxu0 0.0
    %1633 = vmatpush1.msra.mxu0 0.0
    %1634 = vmatprep.subr.mxu0 0.0
    %1635 = vmatpush1.msra.mxu0 0.0
    %1636 = vmatprep.subr.mxu0 0.0
    %1637 = vmatpush1.msra.mxu0 0.0
    %1638 = vmatprep.subr.mxu0 0.0
    %1639 = vmatpush1.msra.mxu0 0.0
    %1640 = vmatprep.subr.mxu0 0.0
    %1641 = vmatpush1.msra.mxu0 0.0
    %1642 = vmatprep.subr.mxu0 0.0
    %1643 = vmatpush1.msra.mxu0 0.0
    %1644 = vmatprep.subr.mxu0 0.0
    %1645 = vmatpush1.msra.mxu0 0.0
    %1646 = vmatprep.subr.mxu0 0.0
    %1647 = vmatpush1.msra.mxu0 0.0
    %1648 = vmatprep.subr.mxu0 0.0
    %1649 = vmatpush1.msra.mxu0 0.0
    %1650 = vmatprep.subr.mxu0 0.0
    %1651 = vmatpush1.msra.mxu0 0.0
    %1652 = vmatprep.subr.mxu0 0.0
    %1653 = vmatpush1.msra.mxu0 0.0
    %1654 = vmatprep.subr.mxu0 0.0
    %1655 = vmatpush1.msra.mxu0 0.0
    %1656 = vmatprep.subr.mxu0 0.0
    %1657 = vmatpush1.msra.mxu0 0.0
    %1658 = vmatprep.subr.mxu0 0.0
    %1659 = vmatpush1.msra.mxu0 0.0
    %1660 = vmatprep.subr.mxu0 0.0
    %1661 = vmatpush1.msra.mxu0 0.0
    %1662 = vmatprep.subr.mxu0 0.0
    %1663 = vmatpush1.msra.mxu0 0.0
    %1664 = vmatprep.subr.mxu0 0.0
    %1665 = vmatpush1.msra.mxu0 0.0
    %1666 = vmatprep.subr.mxu0 0.0
    %1667 = vmatpush1.msra.mxu0 0.0
    %1668 = vmatprep.subr.mxu0 0.0
    %1669 = vmatpush1.msra.mxu0 0.0
    %1670 = vmatprep.subr.mxu0 0.0
    %1671 = vmatpush1.msra.mxu0 0.0
    %1672 = vmatprep.subr.mxu0 0.0
    %1673 = vmatpush1.msra.mxu0 0.0
    %1674 = vmatprep.subr.mxu0 0.0
    %1675 = vmatpush1.msra.mxu0 0.0
    %1676 = vmatprep.subr.mxu0 0.0
    %1677 = vmatpush1.msra.mxu0 0.0
    %1678 = vmatprep.mubr.f32.mxu0 0.0
    %1679 = vmatmul.mubr.f32.gmra.mrb[0].mxu0 %v1609
    %v1680 = vpop.f32.mrb[0].mxu0
    %v1681 = vadd.f32 %v1607, %v1680
    %v1682 = vpop.f32.mrb[0].mxu0
    %1683 = vmatprep.mubr.f32.mxu0 0.0
    %1684 = vmatmul.mubr.f32.gmra.mrb[0].mxu0 %v1612
    %v1685 = vpop.f32.mrb[0].mxu0
    %v1686 = vadd.f32 %v1607, %v1685
    %v1687 = vpop.f32.mrb[0].mxu0
    %1688 = vdwg.mxu0
    %v1689 = vadd.f32 %v1681, %v86
    %v1690 = vadd.f32 %v1686, %v87
    %v1691 = vsel %vm48, %v1689, 0.0
    %1692 = vadd.xlane.f32.xlu0 %v1691
    %v1693 = vpop.xlane.xlu0 %1692
    %v1694 = vsel %vm48, %v1690, 0.0
    %1695 = vadd.xlane.f32.xlu0 %v1694
    %v1696 = vpop.xlane.xlu0 %1695
    %v1697 = vmul.f32 %v1693, %v55
    %v1698 = vmul.f32 %v1696, %v55
    %v1699 = vsub.f32 %v1689, %v1697
    %v1700 = vsub.f32 %v1690, %v1698
    %v1701 = vmul.f32 %v1699, %v1699
    %v1702 = vmul.f32 %v1700, %v1700
    %v1703 = vsel %vm48, %v1701, 0.0
    %1704 = vadd.xlane.f32.xlu0 %v1703
    %v1705 = vpop.xlane.xlu0 %1704
    %v1706 = vsel %vm48, %v1702, 0.0
    %1707 = vadd.xlane.f32.xlu0 %v1706
    %v1708 = vpop.xlane.xlu0 %1707
    %v1709 = vmul.f32 %v1705, %v55
    %v1710 = vmul.f32 %v1708, %v55
    %v1711 = vadd.f32 %v1709, 1e-05
    %v1712 = vadd.f32 %v1710, 1e-05
    %v1713 = vrsqrt.pop %v1711
    %v1714 = vrsqrt.pop %v1712
    %v1715 = vmul.f32 %v1699, %v1713
    %v1716 = vmul.f32 %v1700, %v1714
    %v1717 = vlaneseq
    %v1718 = vshrl.u32 %v1717, 7
    %v1719 = vsub.s32 0, %v1718
    %v1720 = vrot.slane %v90, %v1719
    %v1721 = vmul.f32 %v1715, %v1720
    %v1722 = vmul.f32 %v1716, %v1720
    %v1723 = vlaneseq
    %v1724 = vshrl.u32 %v1723, 7
    %v1725 = vsub.s32 0, %v1724
    %v1726 = vrot.slane %v91, %v1725
    %v1727 = vadd.f32 %v1721, %v1726
    %v1728 = vadd.f32 %v1722, %v1726
    %v1729 = vld [vmem:[%s6] sm:$0xff]
    %v1730 = vld [vmem:[%s6 + $0x8] sm:$0xff]
    %v1731 = vld [vmem:[%s6 + $0x10] sm:$0xff]
    %v1732 = vld [vmem:[%s6 + $0x18] sm:$0xff]
    %v1733 = vlaneseq
    %v1734 = vshrl.u32 %v1733, 7
    %v1735 = vsub.s32 0, %v1734
    %v1736 = vrot.slane %v92, %v1735
    %v1738 = vsel %vm48, %v1727, 0
    %v1741 = vsel %vm48, %v1728, 0
    %1743 = vmatprep.subr.mxu0 0.0
    %1744 = vmatpush1.msra.mxu0 %v1729
    %1745 = vmatprep.subr.mxu0 0.0
    %1746 = vmatpush1.msra.mxu0 %v1730
    %1747 = vmatprep.subr.mxu0 0.0
    %1748 = vmatpush1.msra.mxu0 %v1731
    %1749 = vmatprep.subr.mxu0 0.0
    %1750 = vmatpush1.msra.mxu0 %v1732
    %1751 = vmatprep.subr.mxu0 0.0
    %1752 = vmatpush1.msra.mxu0 0.0
    %1753 = vmatprep.subr.mxu0 0.0
    %1754 = vmatpush1.msra.mxu0 0.0
    %1755 = vmatprep.subr.mxu0 0.0
    %1756 = vmatpush1.msra.mxu0 0.0
    %1757 = vmatprep.subr.mxu0 0.0
    %1758 = vmatpush1.msra.mxu0 0.0
    %1759 = vmatprep.subr.mxu0 0.0
    %1760 = vmatpush1.msra.mxu0 0.0
    %1761 = vmatprep.subr.mxu0 0.0
    %1762 = vmatpush1.msra.mxu0 0.0
    %1763 = vmatprep.subr.mxu0 0.0
    %1764 = vmatpush1.msra.mxu0 0.0
    %1765 = vmatprep.subr.mxu0 0.0
    %1766 = vmatpush1.msra.mxu0 0.0
    %1767 = vmatprep.subr.mxu0 0.0
    %1768 = vmatpush1.msra.mxu0 0.0
    %1769 = vmatprep.subr.mxu0 0.0
    %1770 = vmatpush1.msra.mxu0 0.0
    %1771 = vmatprep.subr.mxu0 0.0
    %1772 = vmatpush1.msra.mxu0 0.0
    %1773 = vmatprep.subr.mxu0 0.0
    %1774 = vmatpush1.msra.mxu0 0.0
    %1775 = vmatprep.subr.mxu0 0.0
    %1776 = vmatpush1.msra.mxu0 0.0
    %1777 = vmatprep.subr.mxu0 0.0
    %1778 = vmatpush1.msra.mxu0 0.0
    %1779 = vmatprep.subr.mxu0 0.0
    %1780 = vmatpush1.msra.mxu0 0.0
    %1781 = vmatprep.subr.mxu0 0.0
    %1782 = vmatpush1.msra.mxu0 0.0
    %1783 = vmatprep.subr.mxu0 0.0
    %1784 = vmatpush1.msra.mxu0 0.0
    %1785 = vmatprep.subr.mxu0 0.0
    %1786 = vmatpush1.msra.mxu0 0.0
    %1787 = vmatprep.subr.mxu0 0.0
    %1788 = vmatpush1.msra.mxu0 0.0
    %1789 = vmatprep.subr.mxu0 0.0
    %1790 = vmatpush1.msra.mxu0 0.0
    %1791 = vmatprep.subr.mxu0 0.0
    %1792 = vmatpush1.msra.mxu0 0.0
    %1793 = vmatprep.subr.mxu0 0.0
    %1794 = vmatpush1.msra.mxu0 0.0
    %1795 = vmatprep.subr.mxu0 0.0
    %1796 = vmatpush1.msra.mxu0 0.0
    %1797 = vmatprep.subr.mxu0 0.0
    %1798 = vmatpush1.msra.mxu0 0.0
    %1799 = vmatprep.subr.mxu0 0.0
    %1800 = vmatpush1.msra.mxu0 0.0
    %1801 = vmatprep.subr.mxu0 0.0
    %1802 = vmatpush1.msra.mxu0 0.0
    %1803 = vmatprep.subr.mxu0 0.0
    %1804 = vmatpush1.msra.mxu0 0.0
    %1805 = vmatprep.subr.mxu0 0.0
    %1806 = vmatpush1.msra.mxu0 0.0
    %1807 = vmatprep.mubr.f32.mxu0 0.0
    %1808 = vmatmul.mubr.f32.gmra.mrb[0].mxu0 %v1738
    %v1809 = vpop.f32.mrb[0].mxu0
    %v1810 = vadd.f32 %v1736, %v1809
    %v1811 = vpop.f32.mrb[0].mxu0
    %1812 = vmatprep.mubr.f32.mxu0 0.0
    %1813 = vmatmul.mubr.f32.gmra.mrb[0].mxu0 %v1741
    %v1814 = vpop.f32.mrb[0].mxu0
    %v1815 = vadd.f32 %v1736, %v1814
    %v1816 = vpop.f32.mrb[0].mxu0
    %1817 = vdwg.mxu0
    %v1818 = vmul.f32 %v1810, %v1810
    %v1819 = vmul.f32 %v1815, %v1815
    %v1820 = vmul.f32 %v1810, %v1818
    %v1821 = vmul.f32 %v1815, %v1819
    %v1822 = vmul.f32 %v1820, 0.044715
    %v1823 = vmul.f32 %v1821, 0.044715
    %v1824 = vadd.f32 %v1810, %v1822
    %v1825 = vadd.f32 %v1815, %v1823
    %v1826 = vmul.f32 %v1824, 0.7978846
    %v1827 = vmul.f32 %v1825, 0.7978846
    %v1828 = vtanh.pop %v1826
    %v1829 = vtanh.pop %v1827
    %v1830 = vadd.f32 %v1828, 1.0
    %v1831 = vadd.f32 %v1829, 1.0
    %v1832 = vmul.f32 %v1830, 0.5
    %v1833 = vmul.f32 %v1831, 0.5
    %v1834 = vmul.f32 %v1810, %v1832
    %v1835 = vmul.f32 %v1815, %v1833
    %v1836 = vld [vmem:[%s7] sm:$0xff]
    %v1837 = vld [vmem:[%s7 + $0x8] sm:$0xff]
    %v1838 = vld [vmem:[%s7 + $0x10] sm:$0xff]
    %v1839 = vld [vmem:[%s7 + $0x18] sm:$0xff]
    %v1840 = vld [vmem:[%s7 + $0x20] sm:$0xff]
    %v1841 = vld [vmem:[%s7 + $0x28] sm:$0xff]
    %v1842 = vld [vmem:[%s7 + $0x30] sm:$0xff]
    %v1843 = vld [vmem:[%s7 + $0x38] sm:$0xff]
    %v1844 = vlaneseq
    %v1845 = vshrl.u32 %v1844, 7
    %v1846 = vsub.s32 0, %v1845
    %v1847 = vrot.slane %v93, %v1846
    %vm1848 = vcmask 523264
    %v1850 = vsel %vm1848, %v1834, 0
    %v1853 = vsel %vm1848, %v1835, 0
    %1855 = vmatprep.subr.mxu0 0.0
    %1856 = vmatpush1.msra.mxu0 %v1836
    %1857 = vmatprep.subr.mxu0 0.0
    %1858 = vmatpush1.msra.mxu0 %v1837
    %1859 = vmatprep.subr.mxu0 0.0
    %1860 = vmatpush1.msra.mxu0 %v1838
    %1861 = vmatprep.subr.mxu0 0.0
    %1862 = vmatpush1.msra.mxu0 %v1839
    %1863 = vmatprep.subr.mxu0 0.0
    %1864 = vmatpush1.msra.mxu0 %v1840
    %1865 = vmatprep.subr.mxu0 0.0
    %1866 = vmatpush1.msra.mxu0 %v1841
    %1867 = vmatprep.subr.mxu0 0.0
    %1868 = vmatpush1.msra.mxu0 %v1842
    %1869 = vmatprep.subr.mxu0 0.0
    %1870 = vmatpush1.msra.mxu0 %v1843
    %1871 = vmatprep.subr.mxu0 0.0
    %1872 = vmatpush1.msra.mxu0 0.0
    %1873 = vmatprep.subr.mxu0 0.0
    %1874 = vmatpush1.msra.mxu0 0.0
    %1875 = vmatprep.subr.mxu0 0.0
    %1876 = vmatpush1.msra.mxu0 0.0
    %1877 = vmatprep.subr.mxu0 0.0
    %1878 = vmatpush1.msra.mxu0 0.0
    %1879 = vmatprep.subr.mxu0 0.0
    %1880 = vmatpush1.msra.mxu0 0.0
    %1881 = vmatprep.subr.mxu0 0.0
    %1882 = vmatpush1.msra.mxu0 0.0
    %1883 = vmatprep.subr.mxu0 0.0
    %1884 = vmatpush1.msra.mxu0 0.0
    %1885 = vmatprep.subr.mxu0 0.0
    %1886 = vmatpush1.msra.mxu0 0.0
    %1887 = vmatprep.subr.mxu0 0.0
    %1888 = vmatpush1.msra.mxu0 0.0
    %1889 = vmatprep.subr.mxu0 0.0
    %1890 = vmatpush1.msra.mxu0 0.0
    %1891 = vmatprep.subr.mxu0 0.0
    %1892 = vmatpush1.msra.mxu0 0.0
    %1893 = vmatprep.subr.mxu0 0.0
    %1894 = vmatpush1.msra.mxu0 0.0
    %1895 = vmatprep.subr.mxu0 0.0
    %1896 = vmatpush1.msra.mxu0 0.0
    %1897 = vmatprep.subr.mxu0 0.0
    %1898 = vmatpush1.msra.mxu0 0.0
    %1899 = vmatprep.subr.mxu0 0.0
    %1900 = vmatpush1.msra.mxu0 0.0
    %1901 = vmatprep.subr.mxu0 0.0
    %1902 = vmatpush1.msra.mxu0 0.0
    %1903 = vmatprep.subr.mxu0 0.0
    %1904 = vmatpush1.msra.mxu0 0.0
    %1905 = vmatprep.subr.mxu0 0.0
    %1906 = vmatpush1.msra.mxu0 0.0
    %1907 = vmatprep.subr.mxu0 0.0
    %1908 = vmatpush1.msra.mxu0 0.0
    %1909 = vmatprep.subr.mxu0 0.0
    %1910 = vmatpush1.msra.mxu0 0.0
    %1911 = vmatprep.subr.mxu0 0.0
    %1912 = vmatpush1.msra.mxu0 0.0
    %1913 = vmatprep.subr.mxu0 0.0
    %1914 = vmatpush1.msra.mxu0 0.0
    %1915 = vmatprep.subr.mxu0 0.0
    %1916 = vmatpush1.msra.mxu0 0.0
    %1917 = vmatprep.subr.mxu0 0.0
    %1918 = vmatpush1.msra.mxu0 0.0
    %1919 = vmatprep.mubr.f32.mxu0 0.0
    %1920 = vmatmul.mubr.f32.gmra.mrb[0].mxu0 %v1850
    %v1921 = vpop.f32.mrb[0].mxu0
    %v1922 = vadd.f32 %v1847, %v1921
    %v1923 = vpop.f32.mrb[0].mxu0
    %1924 = vmatprep.mubr.f32.mxu0 0.0
    %1925 = vmatmul.mubr.f32.gmra.mrb[0].mxu0 %v1853
    %v1926 = vpop.f32.mrb[0].mxu0
    %v1927 = vadd.f32 %v1847, %v1926
    %v1928 = vpop.f32.mrb[0].mxu0
    %1929 = vdwg.mxu0
    %v1930 = vadd.f32 %v1922, %v1727
    %v1931 = vadd.f32 %v1927, %v1728
    %v1932 = vsel %vm48, %v1930, 0.0
    %1933 = vadd.xlane.f32.xlu0 %v1932
    %v1934 = vpop.xlane.xlu0 %1933
    %v1935 = vsel %vm48, %v1931, 0.0
    %1936 = vadd.xlane.f32.xlu0 %v1935
    %v1937 = vpop.xlane.xlu0 %1936
    %v1938 = vmul.f32 %v1934, %v55
    %v1939 = vmul.f32 %v1937, %v55
    %v1940 = vsub.f32 %v1930, %v1938
    %v1941 = vsub.f32 %v1931, %v1939
    %v1942 = vmul.f32 %v1940, %v1940
    %v1943 = vmul.f32 %v1941, %v1941
    %v1944 = vsel %vm48, %v1942, 0.0
    %1945 = vadd.xlane.f32.xlu0 %v1944
    %v1946 = vpop.xlane.xlu0 %1945
    %v1947 = vsel %vm48, %v1943, 0.0
    %1948 = vadd.xlane.f32.xlu0 %v1947
    %v1949 = vpop.xlane.xlu0 %1948
    %v1950 = vmul.f32 %v1946, %v55
    %v1951 = vmul.f32 %v1949, %v55
    %v1952 = vadd.f32 %v1950, 1e-05
    %v1953 = vadd.f32 %v1951, 1e-05
    %v1954 = vrsqrt.pop %v1952
    %v1955 = vrsqrt.pop %v1953
    %v1956 = vmul.f32 %v1940, %v1954
    %v1957 = vmul.f32 %v1941, %v1955
    %v1958 = vlaneseq
    %v1959 = vshrl.u32 %v1958, 7
    %v1960 = vsub.s32 0, %v1959
    %v1961 = vrot.slane %v94, %v1960
    %v1962 = vmul.f32 %v1956, %v1961
    %v1963 = vmul.f32 %v1957, %v1961
    %v1964 = vlaneseq
    %v1965 = vshrl.u32 %v1964, 7
    %v1966 = vsub.s32 0, %v1965
    %v1967 = vrot.slane %v95, %v1966
    %v1968 = vadd.f32 %v1962, %v1967
    %v1969 = vadd.f32 %v1963, %v1967
    %s1970 = scalar_lea.vmem %s3, 8
    %v1971 = vld [vmem:[%s1970] sm:$0x1]
    %v1972 = vld [vmem:[%s1970 + $0x1] sm:$0x1]
    %v1973 = vld [vmem:[%s1970 + $0x2] sm:$0x1]
    %v1974 = vld [vmem:[%s1970 + $0x3] sm:$0x1]
    %v1975 = vld [vmem:[%s1970 + $0x4] sm:$0x1]
    %v1976 = vld [vmem:[%s1970 + $0x5] sm:$0x1]
    %v1977 = vld [vmem:[%s1970 + $0x6] sm:$0x1]
    %v1978 = vld [vmem:[%s1970 + $0x7] sm:$0x1]
    %s1979 = scalar_lea.vmem %s4, 32
    %v1980 = vld [vmem:[%s1979] sm:$0xff]
    %v1981 = vld [vmem:[%s1979 + $0x8] sm:$0xff]
    %v1982 = vld [vmem:[%s1979 + $0x10] sm:$0xff]
    %v1983 = vld [vmem:[%s1979 + $0x18] sm:$0xff]
    %v1984 = vlaneseq
    %v1985 = vshrl.u32 %v1984, 7
    %v1986 = vsub.s32 0, %v1985
    %v1987 = vrot.slane %v1971, %v1986
    %v1989 = vsel %vm48, %v1968, 0
    %v1992 = vsel %vm48, %v1969, 0
    %1994 = vmatprep.subr.mxu0 0.0
    %1995 = vmatpush1.msra.mxu0 %v1980
    %1996 = vmatprep.subr.mxu0 0.0
    %1997 = vmatpush1.msra.mxu0 %v1981
    %1998 = vmatprep.subr.mxu0 0.0
    %1999 = vmatpush1.msra.mxu0 %v1982
    %2000 = vmatprep.subr.mxu0 0.0
    %2001 = vmatpush1.msra.mxu0 %v1983
    %2002 = vmatprep.subr.mxu0 0.0
    %2003 = vmatpush1.msra.mxu0 0.0
    %2004 = vmatprep.subr.mxu0 0.0
    %2005 = vmatpush1.msra.mxu0 0.0
    %2006 = vmatprep.subr.mxu0 0.0
    %2007 = vmatpush1.msra.mxu0 0.0
    %2008 = vmatprep.subr.mxu0 0.0
    %2009 = vmatpush1.msra.mxu0 0.0
    %2010 = vmatprep.subr.mxu0 0.0
    %2011 = vmatpush1.msra.mxu0 0.0
    %2012 = vmatprep.subr.mxu0 0.0
    %2013 = vmatpush1.msra.mxu0 0.0
    %2014 = vmatprep.subr.mxu0 0.0
    %2015 = vmatpush1.msra.mxu0 0.0
    %2016 = vmatprep.subr.mxu0 0.0
    %2017 = vmatpush1.msra.mxu0 0.0
    %2018 = vmatprep.subr.mxu0 0.0
    %2019 = vmatpush1.msra.mxu0 0.0
    %2020 = vmatprep.subr.mxu0 0.0
    %2021 = vmatpush1.msra.mxu0 0.0
    %2022 = vmatprep.subr.mxu0 0.0
    %2023 = vmatpush1.msra.mxu0 0.0
    %2024 = vmatprep.subr.mxu0 0.0
    %2025 = vmatpush1.msra.mxu0 0.0
    %2026 = vmatprep.subr.mxu0 0.0
    %2027 = vmatpush1.msra.mxu0 0.0
    %2028 = vmatprep.subr.mxu0 0.0
    %2029 = vmatpush1.msra.mxu0 0.0
    %2030 = vmatprep.subr.mxu0 0.0
    %2031 = vmatpush1.msra.mxu0 0.0
    %2032 = vmatprep.subr.mxu0 0.0
    %2033 = vmatpush1.msra.mxu0 0.0
    %2034 = vmatprep.subr.mxu0 0.0
    %2035 = vmatpush1.msra.mxu0 0.0
    %2036 = vmatprep.subr.mxu0 0.0
    %2037 = vmatpush1.msra.mxu0 0.0
    %2038 = vmatprep.subr.mxu0 0.0
    %2039 = vmatpush1.msra.mxu0 0.0
    %2040 = vmatprep.subr.mxu0 0.0
    %2041 = vmatpush1.msra.mxu0 0.0
    %2042 = vmatprep.subr.mxu0 0.0
    %2043 = vmatpush1.msra.mxu0 0.0
    %2044 = vmatprep.subr.mxu0 0.0
    %2045 = vmatpush1.msra.mxu0 0.0
    %2046 = vmatprep.subr.mxu0 0.0
    %2047 = vmatpush1.msra.mxu0 0.0
    %2048 = vmatprep.subr.mxu0 0.0
    %2049 = vmatpush1.msra.mxu0 0.0
    %2050 = vmatprep.subr.mxu0 0.0
    %2051 = vmatpush1.msra.mxu0 0.0
    %2052 = vmatprep.subr.mxu0 0.0
    %2053 = vmatpush1.msra.mxu0 0.0
    %2054 = vmatprep.subr.mxu0 0.0
    %2055 = vmatpush1.msra.mxu0 0.0
    %2056 = vmatprep.subr.mxu0 0.0
    %2057 = vmatpush1.msra.mxu0 0.0
    %2058 = vmatprep.mubr.f32.mxu0 0.0
    %2059 = vmatmul.mubr.f32.gmra.mrb[0].mxu0 %v1989
    %v2060 = vpop.f32.mrb[0].mxu0
    %v2061 = vadd.f32 %v1987, %v2060
    %v2062 = vpop.f32.mrb[0].mxu0
    %2063 = vmatprep.mubr.f32.mxu0 0.0
    %2064 = vmatmul.mubr.f32.gmra.mrb[0].mxu0 %v1992
    %v2065 = vpop.f32.mrb[0].mxu0
    %v2066 = vadd.f32 %v1987, %v2065
    %v2067 = vpop.f32.mrb[0].mxu0
    %2068 = vdwg.mxu0
    %2071 = vrot.lane.b32.xlu0 %v2061, 120
    %v2072 = vpop.permute.xlu0 %2071
    %2073 = vrot.lane.b32.xlu0 %v2066, 120
    %v2074 = vpop.permute.xlu0 %2073
    %2075 = vrot.lane.b32.xlu0 %v2061, 112
    %v2076 = vpop.permute.xlu0 %2075
    %2077 = vrot.lane.b32.xlu0 %v2066, 112
    %v2078 = vpop.permute.xlu0 %2077
    %2079 = vrot.lane.b32.xlu0 %v2061, 104
    %v2080 = vpop.permute.xlu0 %2079
    %2081 = vrot.lane.b32.xlu0 %v2066, 104
    %v2082 = vpop.permute.xlu0 %2081
    %2083 = vrot.lane.b32.xlu0 %v2061, 96
    %v2084 = vpop.permute.xlu0 %2083
    %v2085 = vsel %vm201, %v2061, 0
    %v2087 = vsel %vm201, %v2084, 0
    %2089 = vmatprep.subr.mxu0 0.0
    %2090 = vmatpush1.xpose.msra.mxu0 %v2087
    %2091 = vmatprep.subr.mxu0 0.0
    %2092 = vmatpush1.xpose.msra.mxu0 0.0
    %2093 = vmatprep.subr.mxu0 0.0
    %2094 = vmatpush1.xpose.msra.mxu0 0.0
    %2095 = vmatprep.subr.mxu0 0.0
    %2096 = vmatpush1.xpose.msra.mxu0 0.0
    %2097 = vmatprep.subr.mxu0 0.0
    %2098 = vmatpush1.xpose.msra.mxu0 0.0
    %2099 = vmatprep.subr.mxu0 0.0
    %2100 = vmatpush1.xpose.msra.mxu0 0.0
    %2101 = vmatprep.subr.mxu0 0.0
    %2102 = vmatpush1.xpose.msra.mxu0 0.0
    %2103 = vmatprep.subr.mxu0 0.0
    %2104 = vmatpush1.xpose.msra.mxu0 0.0
    %2105 = vmatprep.subr.mxu0 0.0
    %2106 = vmatpush1.xpose.msra.mxu0 0.0
    %2107 = vmatprep.subr.mxu0 0.0
    %2108 = vmatpush1.xpose.msra.mxu0 0.0
    %2109 = vmatprep.subr.mxu0 0.0
    %2110 = vmatpush1.xpose.msra.mxu0 0.0
    %2111 = vmatprep.subr.mxu0 0.0
    %2112 = vmatpush1.xpose.msra.mxu0 0.0
    %2113 = vmatprep.subr.mxu0 0.0
    %2114 = vmatpush1.xpose.msra.mxu0 0.0
    %2115 = vmatprep.subr.mxu0 0.0
    %2116 = vmatpush1.xpose.msra.mxu0 0.0
    %2117 = vmatprep.subr.mxu0 0.0
    %2118 = vmatpush1.xpose.msra.mxu0 0.0
    %2119 = vmatprep.subr.mxu0 0.0
    %2120 = vmatpush1.xpose.msra.mxu0 0.0
    %2121 = vmatprep.subr.mxu0 0.0
    %2122 = vmatpush1.xpose.msra.mxu0 0.0
    %2123 = vmatprep.subr.mxu0 0.0
    %2124 = vmatpush1.xpose.msra.mxu0 0.0
    %2125 = vmatprep.subr.mxu0 0.0
    %2126 = vmatpush1.xpose.msra.mxu0 0.0
    %2127 = vmatprep.subr.mxu0 0.0
    %2128 = vmatpush1.xpose.msra.mxu0 0.0
    %2129 = vmatprep.subr.mxu0 0.0
    %2130 = vmatpush1.xpose.msra.mxu0 0.0
    %2131 = vmatprep.subr.mxu0 0.0
    %2132 = vmatpush1.xpose.msra.mxu0 0.0
    %2133 = vmatprep.subr.mxu0 0.0
    %2134 = vmatpush1.xpose.msra.mxu0 0.0
    %2135 = vmatprep.subr.mxu0 0.0
    %2136 = vmatpush1.xpose.msra.mxu0 0.0
    %2137 = vmatprep.subr.mxu0 0.0
    %2138 = vmatpush1.xpose.msra.mxu0 0.0
    %2139 = vmatprep.subr.mxu0 0.0
    %2140 = vmatpush1.xpose.msra.mxu0 0.0
    %2141 = vmatprep.subr.mxu0 0.0
    %2142 = vmatpush1.xpose.msra.mxu0 0.0
    %2143 = vmatprep.subr.mxu0 0.0
    %2144 = vmatpush1.xpose.msra.mxu0 0.0
    %2145 = vmatprep.subr.mxu0 0.0
    %2146 = vmatpush1.xpose.msra.mxu0 0.0
    %2147 = vmatprep.subr.mxu0 0.0
    %2148 = vmatpush1.xpose.msra.mxu0 0.0
    %2149 = vmatprep.subr.mxu0 0.0
    %2150 = vmatpush1.xpose.msra.mxu0 0.0
    %2151 = vmatprep.subr.mxu0 0.0
    %2152 = vmatpush1.xpose.msra.mxu0 0.0
    %2153 = vmatprep.mubr.f32.mxu0 0.0
    %2154 = vmatmul.mubr.f32.gmra.mrb[0].mxu0 %v2085
    %v2155 = vpop.f32.mrb[0].mxu0
    %v2156 = vadd.f32 0.0, %v2155
    %v2157 = vpop.f32.mrb[0].mxu0
    %2158 = vdwg.mxu0
    %2159 = vrot.lane.b32.xlu0 %v2066, 96
    %v2160 = vpop.permute.xlu0 %2159
    %v2161 = vsel %vm201, %v2066, 0
    %v2163 = vsel %vm201, %v2160, 0
    %2165 = vmatprep.subr.mxu0 0.0
    %2166 = vmatpush1.xpose.msra.mxu0 %v2163
    %2167 = vmatprep.subr.mxu0 0.0
    %2168 = vmatpush1.xpose.msra.mxu0 0.0
    %2169 = vmatprep.subr.mxu0 0.0
    %2170 = vmatpush1.xpose.msra.mxu0 0.0
    %2171 = vmatprep.subr.mxu0 0.0
    %2172 = vmatpush1.xpose.msra.mxu0 0.0
    %2173 = vmatprep.subr.mxu0 0.0
    %2174 = vmatpush1.xpose.msra.mxu0 0.0
    %2175 = vmatprep.subr.mxu0 0.0
    %2176 = vmatpush1.xpose.msra.mxu0 0.0
    %2177 = vmatprep.subr.mxu0 0.0
    %2178 = vmatpush1.xpose.msra.mxu0 0.0
    %2179 = vmatprep.subr.mxu0 0.0
    %2180 = vmatpush1.xpose.msra.mxu0 0.0
    %2181 = vmatprep.subr.mxu0 0.0
    %2182 = vmatpush1.xpose.msra.mxu0 0.0
    %2183 = vmatprep.subr.mxu0 0.0
    %2184 = vmatpush1.xpose.msra.mxu0 0.0
    %2185 = vmatprep.subr.mxu0 0.0
    %2186 = vmatpush1.xpose.msra.mxu0 0.0
    %2187 = vmatprep.subr.mxu0 0.0
    %2188 = vmatpush1.xpose.msra.mxu0 0.0
    %2189 = vmatprep.subr.mxu0 0.0
    %2190 = vmatpush1.xpose.msra.mxu0 0.0
    %2191 = vmatprep.subr.mxu0 0.0
    %2192 = vmatpush1.xpose.msra.mxu0 0.0
    %2193 = vmatprep.subr.mxu0 0.0
    %2194 = vmatpush1.xpose.msra.mxu0 0.0
    %2195 = vmatprep.subr.mxu0 0.0
    %2196 = vmatpush1.xpose.msra.mxu0 0.0
    %2197 = vmatprep.subr.mxu0 0.0
    %2198 = vmatpush1.xpose.msra.mxu0 0.0
    %2199 = vmatprep.subr.mxu0 0.0
    %2200 = vmatpush1.xpose.msra.mxu0 0.0
    %2201 = vmatprep.subr.mxu0 0.0
    %2202 = vmatpush1.xpose.msra.mxu0 0.0
    %2203 = vmatprep.subr.mxu0 0.0
    %2204 = vmatpush1.xpose.msra.mxu0 0.0
    %2205 = vmatprep.subr.mxu0 0.0
    %2206 = vmatpush1.xpose.msra.mxu0 0.0
    %2207 = vmatprep.subr.mxu0 0.0
    %2208 = vmatpush1.xpose.msra.mxu0 0.0
    %2209 = vmatprep.subr.mxu0 0.0
    %2210 = vmatpush1.xpose.msra.mxu0 0.0
    %2211 = vmatprep.subr.mxu0 0.0
    %2212 = vmatpush1.xpose.msra.mxu0 0.0
    %2213 = vmatprep.subr.mxu0 0.0
    %2214 = vmatpush1.xpose.msra.mxu0 0.0
    %2215 = vmatprep.subr.mxu0 0.0
    %2216 = vmatpush1.xpose.msra.mxu0 0.0
    %2217 = vmatprep.subr.mxu0 0.0
    %2218 = vmatpush1.xpose.msra.mxu0 0.0
    %2219 = vmatprep.subr.mxu0 0.0
    %2220 = vmatpush1.xpose.msra.mxu0 0.0
    %2221 = vmatprep.subr.mxu0 0.0
    %2222 = vmatpush1.xpose.msra.mxu0 0.0
    %2223 = vmatprep.subr.mxu0 0.0
    %2224 = vmatpush1.xpose.msra.mxu0 0.0
    %2225 = vmatprep.subr.mxu0 0.0
    %2226 = vmatpush1.xpose.msra.mxu0 0.0
    %2227 = vmatprep.subr.mxu0 0.0
    %2228 = vmatpush1.xpose.msra.mxu0 0.0
    %2229 = vmatprep.mubr.f32.mxu0 0.0
    %2230 = vmatmul.mubr.f32.gmra.mrb[0].mxu0 %v2161
    %v2231 = vpop.f32.mrb[0].mxu0
    %v2232 = vadd.f32 0.0, %v2231
    %v2233 = vpop.f32.mrb[0].mxu0
    %2234 = vdwg.mxu0
    %2235 = vrot.lane.b32.xlu0 %v2072, 96
    %v2236 = vpop.permute.xlu0 %2235
    %v2237 = vsel %vm201, %v2072, 0
    %v2239 = vsel %vm201, %v2236, 0
    %2241 = vmatprep.subr.mxu0 0.0
    %2242 = vmatpush1.xpose.msra.mxu0 %v2239
    %2243 = vmatprep.subr.mxu0 0.0
    %2244 = vmatpush1.xpose.msra.mxu0 0.0
    %2245 = vmatprep.subr.mxu0 0.0
    %2246 = vmatpush1.xpose.msra.mxu0 0.0
    %2247 = vmatprep.subr.mxu0 0.0
    %2248 = vmatpush1.xpose.msra.mxu0 0.0
    %2249 = vmatprep.subr.mxu0 0.0
    %2250 = vmatpush1.xpose.msra.mxu0 0.0
    %2251 = vmatprep.subr.mxu0 0.0
    %2252 = vmatpush1.xpose.msra.mxu0 0.0
    %2253 = vmatprep.subr.mxu0 0.0
    %2254 = vmatpush1.xpose.msra.mxu0 0.0
    %2255 = vmatprep.subr.mxu0 0.0
    %2256 = vmatpush1.xpose.msra.mxu0 0.0
    %2257 = vmatprep.subr.mxu0 0.0
    %2258 = vmatpush1.xpose.msra.mxu0 0.0
    %2259 = vmatprep.subr.mxu0 0.0
    %2260 = vmatpush1.xpose.msra.mxu0 0.0
    %2261 = vmatprep.subr.mxu0 0.0
    %2262 = vmatpush1.xpose.msra.mxu0 0.0
    %2263 = vmatprep.subr.mxu0 0.0
    %2264 = vmatpush1.xpose.msra.mxu0 0.0
    %2265 = vmatprep.subr.mxu0 0.0
    %2266 = vmatpush1.xpose.msra.mxu0 0.0
    %2267 = vmatprep.subr.mxu0 0.0
    %2268 = vmatpush1.xpose.msra.mxu0 0.0
    %2269 = vmatprep.subr.mxu0 0.0
    %2270 = vmatpush1.xpose.msra.mxu0 0.0
    %2271 = vmatprep.subr.mxu0 0.0
    %2272 = vmatpush1.xpose.msra.mxu0 0.0
    %2273 = vmatprep.subr.mxu0 0.0
    %2274 = vmatpush1.xpose.msra.mxu0 0.0
    %2275 = vmatprep.subr.mxu0 0.0
    %2276 = vmatpush1.xpose.msra.mxu0 0.0
    %2277 = vmatprep.subr.mxu0 0.0
    %2278 = vmatpush1.xpose.msra.mxu0 0.0
    %2279 = vmatprep.subr.mxu0 0.0
    %2280 = vmatpush1.xpose.msra.mxu0 0.0
    %2281 = vmatprep.subr.mxu0 0.0
    %2282 = vmatpush1.xpose.msra.mxu0 0.0
    %2283 = vmatprep.subr.mxu0 0.0
    %2284 = vmatpush1.xpose.msra.mxu0 0.0
    %2285 = vmatprep.subr.mxu0 0.0
    %2286 = vmatpush1.xpose.msra.mxu0 0.0
    %2287 = vmatprep.subr.mxu0 0.0
    %2288 = vmatpush1.xpose.msra.mxu0 0.0
    %2289 = vmatprep.subr.mxu0 0.0
    %2290 = vmatpush1.xpose.msra.mxu0 0.0
    %2291 = vmatprep.subr.mxu0 0.0
    %2292 = vmatpush1.xpose.msra.mxu0 0.0
    %2293 = vmatprep.subr.mxu0 0.0
    %2294 = vmatpush1.xpose.msra.mxu0 0.0
    %2295 = vmatprep.subr.mxu0 0.0
    %2296 = vmatpush1.xpose.msra.mxu0 0.0
    %2297 = vmatprep.subr.mxu0 0.0
    %2298 = vmatpush1.xpose.msra.mxu0 0.0
    %2299 = vmatprep.subr.mxu0 0.0
    %2300 = vmatpush1.xpose.msra.mxu0 0.0
    %2301 = vmatprep.subr.mxu0 0.0
    %2302 = vmatpush1.xpose.msra.mxu0 0.0
    %2303 = vmatprep.subr.mxu0 0.0
    %2304 = vmatpush1.xpose.msra.mxu0 0.0
    %2305 = vmatprep.mubr.f32.mxu0 0.0
    %2306 = vmatmul.mubr.f32.gmra.mrb[0].mxu0 %v2237
    %v2307 = vpop.f32.mrb[0].mxu0
    %v2308 = vadd.f32 0.0, %v2307
    %v2309 = vpop.f32.mrb[0].mxu0
    %2310 = vdwg.mxu0
    %2311 = vrot.lane.b32.xlu0 %v2074, 96
    %v2312 = vpop.permute.xlu0 %2311
    %v2313 = vsel %vm201, %v2074, 0
    %v2315 = vsel %vm201, %v2312, 0
    %2317 = vmatprep.subr.mxu0 0.0
    %2318 = vmatpush1.xpose.msra.mxu0 %v2315
    %2319 = vmatprep.subr.mxu0 0.0
    %2320 = vmatpush1.xpose.msra.mxu0 0.0
    %2321 = vmatprep.subr.mxu0 0.0
    %2322 = vmatpush1.xpose.msra.mxu0 0.0
    %2323 = vmatprep.subr.mxu0 0.0
    %2324 = vmatpush1.xpose.msra.mxu0 0.0
    %2325 = vmatprep.subr.mxu0 0.0
    %2326 = vmatpush1.xpose.msra.mxu0 0.0
    %2327 = vmatprep.subr.mxu0 0.0
    %2328 = vmatpush1.xpose.msra.mxu0 0.0
    %2329 = vmatprep.subr.mxu0 0.0
    %2330 = vmatpush1.xpose.msra.mxu0 0.0
    %2331 = vmatprep.subr.mxu0 0.0
    %2332 = vmatpush1.xpose.msra.mxu0 0.0
    %2333 = vmatprep.subr.mxu0 0.0
    %2334 = vmatpush1.xpose.msra.mxu0 0.0
    %2335 = vmatprep.subr.mxu0 0.0
    %2336 = vmatpush1.xpose.msra.mxu0 0.0
    %2337 = vmatprep.subr.mxu0 0.0
    %2338 = vmatpush1.xpose.msra.mxu0 0.0
    %2339 = vmatprep.subr.mxu0 0.0
    %2340 = vmatpush1.xpose.msra.mxu0 0.0
    %2341 = vmatprep.subr.mxu0 0.0
    %2342 = vmatpush1.xpose.msra.mxu0 0.0
    %2343 = vmatprep.subr.mxu0 0.0
    %2344 = vmatpush1.xpose.msra.mxu0 0.0
    %2345 = vmatprep.subr.mxu0 0.0
    %2346 = vmatpush1.xpose.msra.mxu0 0.0
    %2347 = vmatprep.subr.mxu0 0.0
    %2348 = vmatpush1.xpose.msra.mxu0 0.0
    %2349 = vmatprep.subr.mxu0 0.0
    %2350 = vmatpush1.xpose.msra.mxu0 0.0
    %2351 = vmatprep.subr.mxu0 0.0
    %2352 = vmatpush1.xpose.msra.mxu0 0.0
    %2353 = vmatprep.subr.mxu0 0.0
    %2354 = vmatpush1.xpose.msra.mxu0 0.0
    %2355 = vmatprep.subr.mxu0 0.0
    %2356 = vmatpush1.xpose.msra.mxu0 0.0
    %2357 = vmatprep.subr.mxu0 0.0
    %2358 = vmatpush1.xpose.msra.mxu0 0.0
    %2359 = vmatprep.subr.mxu0 0.0
    %2360 = vmatpush1.xpose.msra.mxu0 0.0
    %2361 = vmatprep.subr.mxu0 0.0
    %2362 = vmatpush1.xpose.msra.mxu0 0.0
    %2363 = vmatprep.subr.mxu0 0.0
    %2364 = vmatpush1.xpose.msra.mxu0 0.0
    %2365 = vmatprep.subr.mxu0 0.0
    %2366 = vmatpush1.xpose.msra.mxu0 0.0
    %2367 = vmatprep.subr.mxu0 0.0
    %2368 = vmatpush1.xpose.msra.mxu0 0.0
    %2369 = vmatprep.subr.mxu0 0.0
    %2370 = vmatpush1.xpose.msra.mxu0 0.0
    %2371 = vmatprep.subr.mxu0 0.0
    %2372 = vmatpush1.xpose.msra.mxu0 0.0
    %2373 = vmatprep.subr.mxu0 0.0
    %2374 = vmatpush1.xpose.msra.mxu0 0.0
    %2375 = vmatprep.subr.mxu0 0.0
    %2376 = vmatpush1.xpose.msra.mxu0 0.0
    %2377 = vmatprep.subr.mxu0 0.0
    %2378 = vmatpush1.xpose.msra.mxu0 0.0
    %2379 = vmatprep.subr.mxu0 0.0
    %2380 = vmatpush1.xpose.msra.mxu0 0.0
    %2381 = vmatprep.mubr.f32.mxu0 0.0
    %2382 = vmatmul.mubr.f32.gmra.mrb[0].mxu0 %v2313
    %v2383 = vpop.f32.mrb[0].mxu0
    %v2384 = vadd.f32 0.0, %v2383
    %v2385 = vpop.f32.mrb[0].mxu0
    %2386 = vdwg.mxu0
    %2387 = vrot.lane.b32.xlu0 %v2076, 96
    %v2388 = vpop.permute.xlu0 %2387
    %v2389 = vsel %vm201, %v2076, 0
    %v2391 = vsel %vm201, %v2388, 0
    %2393 = vmatprep.subr.mxu0 0.0
    %2394 = vmatpush1.xpose.msra.mxu0 %v2391
    %2395 = vmatprep.subr.mxu0 0.0
    %2396 = vmatpush1.xpose.msra.mxu0 0.0
    %2397 = vmatprep.subr.mxu0 0.0
    %2398 = vmatpush1.xpose.msra.mxu0 0.0
    %2399 = vmatprep.subr.mxu0 0.0
    %2400 = vmatpush1.xpose.msra.mxu0 0.0
    %2401 = vmatprep.subr.mxu0 0.0
    %2402 = vmatpush1.xpose.msra.mxu0 0.0
    %2403 = vmatprep.subr.mxu0 0.0
    %2404 = vmatpush1.xpose.msra.mxu0 0.0
    %2405 = vmatprep.subr.mxu0 0.0
    %2406 = vmatpush1.xpose.msra.mxu0 0.0
    %2407 = vmatprep.subr.mxu0 0.0
    %2408 = vmatpush1.xpose.msra.mxu0 0.0
    %2409 = vmatprep.subr.mxu0 0.0
    %2410 = vmatpush1.xpose.msra.mxu0 0.0
    %2411 = vmatprep.subr.mxu0 0.0
    %2412 = vmatpush1.xpose.msra.mxu0 0.0
    %2413 = vmatprep.subr.mxu0 0.0
    %2414 = vmatpush1.xpose.msra.mxu0 0.0
    %2415 = vmatprep.subr.mxu0 0.0
    %2416 = vmatpush1.xpose.msra.mxu0 0.0
    %2417 = vmatprep.subr.mxu0 0.0
    %2418 = vmatpush1.xpose.msra.mxu0 0.0
    %2419 = vmatprep.subr.mxu0 0.0
    %2420 = vmatpush1.xpose.msra.mxu0 0.0
    %2421 = vmatprep.subr.mxu0 0.0
    %2422 = vmatpush1.xpose.msra.mxu0 0.0
    %2423 = vmatprep.subr.mxu0 0.0
    %2424 = vmatpush1.xpose.msra.mxu0 0.0
    %2425 = vmatprep.subr.mxu0 0.0
    %2426 = vmatpush1.xpose.msra.mxu0 0.0
    %2427 = vmatprep.subr.mxu0 0.0
    %2428 = vmatpush1.xpose.msra.mxu0 0.0
    %2429 = vmatprep.subr.mxu0 0.0
    %2430 = vmatpush1.xpose.msra.mxu0 0.0
    %2431 = vmatprep.subr.mxu0 0.0
    %2432 = vmatpush1.xpose.msra.mxu0 0.0
    %2433 = vmatprep.subr.mxu0 0.0
    %2434 = vmatpush1.xpose.msra.mxu0 0.0
    %2435 = vmatprep.subr.mxu0 0.0
    %2436 = vmatpush1.xpose.msra.mxu0 0.0
    %2437 = vmatprep.subr.mxu0 0.0
    %2438 = vmatpush1.xpose.msra.mxu0 0.0
    %2439 = vmatprep.subr.mxu0 0.0
    %2440 = vmatpush1.xpose.msra.mxu0 0.0
    %2441 = vmatprep.subr.mxu0 0.0
    %2442 = vmatpush1.xpose.msra.mxu0 0.0
    %2443 = vmatprep.subr.mxu0 0.0
    %2444 = vmatpush1.xpose.msra.mxu0 0.0
    %2445 = vmatprep.subr.mxu0 0.0
    %2446 = vmatpush1.xpose.msra.mxu0 0.0
    %2447 = vmatprep.subr.mxu0 0.0
    %2448 = vmatpush1.xpose.msra.mxu0 0.0
    %2449 = vmatprep.subr.mxu0 0.0
    %2450 = vmatpush1.xpose.msra.mxu0 0.0
    %2451 = vmatprep.subr.mxu0 0.0
    %2452 = vmatpush1.xpose.msra.mxu0 0.0
    %2453 = vmatprep.subr.mxu0 0.0
    %2454 = vmatpush1.xpose.msra.mxu0 0.0
    %2455 = vmatprep.subr.mxu0 0.0
    %2456 = vmatpush1.xpose.msra.mxu0 0.0
    %2457 = vmatprep.mubr.f32.mxu0 0.0
    %2458 = vmatmul.mubr.f32.gmra.mrb[0].mxu0 %v2389
    %v2459 = vpop.f32.mrb[0].mxu0
    %v2460 = vadd.f32 0.0, %v2459
    %v2461 = vpop.f32.mrb[0].mxu0
    %2462 = vdwg.mxu0
    %2463 = vrot.lane.b32.xlu0 %v2078, 96
    %v2464 = vpop.permute.xlu0 %2463
    %v2465 = vsel %vm201, %v2078, 0
    %v2467 = vsel %vm201, %v2464, 0
    %2469 = vmatprep.subr.mxu0 0.0
    %2470 = vmatpush1.xpose.msra.mxu0 %v2467
    %2471 = vmatprep.subr.mxu0 0.0
    %2472 = vmatpush1.xpose.msra.mxu0 0.0
    %2473 = vmatprep.subr.mxu0 0.0
    %2474 = vmatpush1.xpose.msra.mxu0 0.0
    %2475 = vmatprep.subr.mxu0 0.0
    %2476 = vmatpush1.xpose.msra.mxu0 0.0
    %2477 = vmatprep.subr.mxu0 0.0
    %2478 = vmatpush1.xpose.msra.mxu0 0.0
    %2479 = vmatprep.subr.mxu0 0.0
    %2480 = vmatpush1.xpose.msra.mxu0 0.0
    %2481 = vmatprep.subr.mxu0 0.0
    %2482 = vmatpush1.xpose.msra.mxu0 0.0
    %2483 = vmatprep.subr.mxu0 0.0
    %2484 = vmatpush1.xpose.msra.mxu0 0.0
    %2485 = vmatprep.subr.mxu0 0.0
    %2486 = vmatpush1.xpose.msra.mxu0 0.0
    %2487 = vmatprep.subr.mxu0 0.0
    %2488 = vmatpush1.xpose.msra.mxu0 0.0
    %2489 = vmatprep.subr.mxu0 0.0
    %2490 = vmatpush1.xpose.msra.mxu0 0.0
    %2491 = vmatprep.subr.mxu0 0.0
    %2492 = vmatpush1.xpose.msra.mxu0 0.0
    %2493 = vmatprep.subr.mxu0 0.0
    %2494 = vmatpush1.xpose.msra.mxu0 0.0
    %2495 = vmatprep.subr.mxu0 0.0
    %2496 = vmatpush1.xpose.msra.mxu0 0.0
    %2497 = vmatprep.subr.mxu0 0.0
    %2498 = vmatpush1.xpose.msra.mxu0 0.0
    %2499 = vmatprep.subr.mxu0 0.0
    %2500 = vmatpush1.xpose.msra.mxu0 0.0
    %2501 = vmatprep.subr.mxu0 0.0
    %2502 = vmatpush1.xpose.msra.mxu0 0.0
    %2503 = vmatprep.subr.mxu0 0.0
    %2504 = vmatpush1.xpose.msra.mxu0 0.0
    %2505 = vmatprep.subr.mxu0 0.0
    %2506 = vmatpush1.xpose.msra.mxu0 0.0
    %2507 = vmatprep.subr.mxu0 0.0
    %2508 = vmatpush1.xpose.msra.mxu0 0.0
    %2509 = vmatprep.subr.mxu0 0.0
    %2510 = vmatpush1.xpose.msra.mxu0 0.0
    %2511 = vmatprep.subr.mxu0 0.0
    %2512 = vmatpush1.xpose.msra.mxu0 0.0
    %2513 = vmatprep.subr.mxu0 0.0
    %2514 = vmatpush1.xpose.msra.mxu0 0.0
    %2515 = vmatprep.subr.mxu0 0.0
    %2516 = vmatpush1.xpose.msra.mxu0 0.0
    %2517 = vmatprep.subr.mxu0 0.0
    %2518 = vmatpush1.xpose.msra.mxu0 0.0
    %2519 = vmatprep.subr.mxu0 0.0
    %2520 = vmatpush1.xpose.msra.mxu0 0.0
    %2521 = vmatprep.subr.mxu0 0.0
    %2522 = vmatpush1.xpose.msra.mxu0 0.0
    %2523 = vmatprep.subr.mxu0 0.0
    %2524 = vmatpush1.xpose.msra.mxu0 0.0
    %2525 = vmatprep.subr.mxu0 0.0
    %2526 = vmatpush1.xpose.msra.mxu0 0.0
    %2527 = vmatprep.subr.mxu0 0.0
    %2528 = vmatpush1.xpose.msra.mxu0 0.0
    %2529 = vmatprep.subr.mxu0 0.0
    %2530 = vmatpush1.xpose.msra.mxu0 0.0
    %2531 = vmatprep.subr.mxu0 0.0
    %2532 = vmatpush1.xpose.msra.mxu0 0.0
    %2533 = vmatprep.mubr.f32.mxu0 0.0
    %2534 = vmatmul.mubr.f32.gmra.mrb[0].mxu0 %v2465
    %v2535 = vpop.f32.mrb[0].mxu0
    %v2536 = vadd.f32 0.0, %v2535
    %v2537 = vpop.f32.mrb[0].mxu0
    %2538 = vdwg.mxu0
    %2539 = vrot.lane.b32.xlu0 %v2080, 96
    %v2540 = vpop.permute.xlu0 %2539
    %v2541 = vsel %vm201, %v2080, 0
    %v2543 = vsel %vm201, %v2540, 0
    %2545 = vmatprep.subr.mxu0 0.0
    %2546 = vmatpush1.xpose.msra.mxu0 %v2543
    %2547 = vmatprep.subr.mxu0 0.0
    %2548 = vmatpush1.xpose.msra.mxu0 0.0
    %2549 = vmatprep.subr.mxu0 0.0
    %2550 = vmatpush1.xpose.msra.mxu0 0.0
    %2551 = vmatprep.subr.mxu0 0.0
    %2552 = vmatpush1.xpose.msra.mxu0 0.0
    %2553 = vmatprep.subr.mxu0 0.0
    %2554 = vmatpush1.xpose.msra.mxu0 0.0
    %2555 = vmatprep.subr.mxu0 0.0
    %2556 = vmatpush1.xpose.msra.mxu0 0.0
    %2557 = vmatprep.subr.mxu0 0.0
    %2558 = vmatpush1.xpose.msra.mxu0 0.0
    %2559 = vmatprep.subr.mxu0 0.0
    %2560 = vmatpush1.xpose.msra.mxu0 0.0
    %2561 = vmatprep.subr.mxu0 0.0
    %2562 = vmatpush1.xpose.msra.mxu0 0.0
    %2563 = vmatprep.subr.mxu0 0.0
    %2564 = vmatpush1.xpose.msra.mxu0 0.0
    %2565 = vmatprep.subr.mxu0 0.0
    %2566 = vmatpush1.xpose.msra.mxu0 0.0
    %2567 = vmatprep.subr.mxu0 0.0
    %2568 = vmatpush1.xpose.msra.mxu0 0.0
    %2569 = vmatprep.subr.mxu0 0.0
    %2570 = vmatpush1.xpose.msra.mxu0 0.0
    %2571 = vmatprep.subr.mxu0 0.0
    %2572 = vmatpush1.xpose.msra.mxu0 0.0
    %2573 = vmatprep.subr.mxu0 0.0
    %2574 = vmatpush1.xpose.msra.mxu0 0.0
    %2575 = vmatprep.subr.mxu0 0.0
    %2576 = vmatpush1.xpose.msra.mxu0 0.0
    %2577 = vmatprep.subr.mxu0 0.0
    %2578 = vmatpush1.xpose.msra.mxu0 0.0
    %2579 = vmatprep.subr.mxu0 0.0
    %2580 = vmatpush1.xpose.msra.mxu0 0.0
    %2581 = vmatprep.subr.mxu0 0.0
    %2582 = vmatpush1.xpose.msra.mxu0 0.0
    %2583 = vmatprep.subr.mxu0 0.0
    %2584 = vmatpush1.xpose.msra.mxu0 0.0
    %2585 = vmatprep.subr.mxu0 0.0
    %2586 = vmatpush1.xpose.msra.mxu0 0.0
    %2587 = vmatprep.subr.mxu0 0.0
    %2588 = vmatpush1.xpose.msra.mxu0 0.0
    %2589 = vmatprep.subr.mxu0 0.0
    %2590 = vmatpush1.xpose.msra.mxu0 0.0
    %2591 = vmatprep.subr.mxu0 0.0
    %2592 = vmatpush1.xpose.msra.mxu0 0.0
    %2593 = vmatprep.subr.mxu0 0.0
    %2594 = vmatpush1.xpose.msra.mxu0 0.0
    %2595 = vmatprep.subr.mxu0 0.0
    %2596 = vmatpush1.xpose.msra.mxu0 0.0
    %2597 = vmatprep.subr.mxu0 0.0
    %2598 = vmatpush1.xpose.msra.mxu0 0.0
    %2599 = vmatprep.subr.mxu0 0.0
    %2600 = vmatpush1.xpose.msra.mxu0 0.0
    %2601 = vmatprep.subr.mxu0 0.0
    %2602 = vmatpush1.xpose.msra.mxu0 0.0
    %2603 = vmatprep.subr.mxu0 0.0
    %2604 = vmatpush1.xpose.msra.mxu0 0.0
    %2605 = vmatprep.subr.mxu0 0.0
    %2606 = vmatpush1.xpose.msra.mxu0 0.0
    %2607 = vmatprep.subr.mxu0 0.0
    %2608 = vmatpush1.xpose.msra.mxu0 0.0
    %2609 = vmatprep.mubr.f32.mxu0 0.0
    %2610 = vmatmul.mubr.f32.gmra.mrb[0].mxu0 %v2541
    %v2611 = vpop.f32.mrb[0].mxu0
    %v2612 = vadd.f32 0.0, %v2611
    %v2613 = vpop.f32.mrb[0].mxu0
    %2614 = vdwg.mxu0
    %2615 = vrot.lane.b32.xlu0 %v2082, 96
    %v2616 = vpop.permute.xlu0 %2615
    %v2617 = vsel %vm201, %v2082, 0
    %v2619 = vsel %vm201, %v2616, 0
    %2621 = vmatprep.subr.mxu0 0.0
    %2622 = vmatpush1.xpose.msra.mxu0 %v2619
    %2623 = vmatprep.subr.mxu0 0.0
    %2624 = vmatpush1.xpose.msra.mxu0 0.0
    %2625 = vmatprep.subr.mxu0 0.0
    %2626 = vmatpush1.xpose.msra.mxu0 0.0
    %2627 = vmatprep.subr.mxu0 0.0
    %2628 = vmatpush1.xpose.msra.mxu0 0.0
    %2629 = vmatprep.subr.mxu0 0.0
    %2630 = vmatpush1.xpose.msra.mxu0 0.0
    %2631 = vmatprep.subr.mxu0 0.0
    %2632 = vmatpush1.xpose.msra.mxu0 0.0
    %2633 = vmatprep.subr.mxu0 0.0
    %2634 = vmatpush1.xpose.msra.mxu0 0.0
    %2635 = vmatprep.subr.mxu0 0.0
    %2636 = vmatpush1.xpose.msra.mxu0 0.0
    %2637 = vmatprep.subr.mxu0 0.0
    %2638 = vmatpush1.xpose.msra.mxu0 0.0
    %2639 = vmatprep.subr.mxu0 0.0
    %2640 = vmatpush1.xpose.msra.mxu0 0.0
    %2641 = vmatprep.subr.mxu0 0.0
    %2642 = vmatpush1.xpose.msra.mxu0 0.0
    %2643 = vmatprep.subr.mxu0 0.0
    %2644 = vmatpush1.xpose.msra.mxu0 0.0
    %2645 = vmatprep.subr.mxu0 0.0
    %2646 = vmatpush1.xpose.msra.mxu0 0.0
    %2647 = vmatprep.subr.mxu0 0.0
    %2648 = vmatpush1.xpose.msra.mxu0 0.0
    %2649 = vmatprep.subr.mxu0 0.0
    %2650 = vmatpush1.xpose.msra.mxu0 0.0
    %2651 = vmatprep.subr.mxu0 0.0
    %2652 = vmatpush1.xpose.msra.mxu0 0.0
    %2653 = vmatprep.subr.mxu0 0.0
    %2654 = vmatpush1.xpose.msra.mxu0 0.0
    %2655 = vmatprep.subr.mxu0 0.0
    %2656 = vmatpush1.xpose.msra.mxu0 0.0
    %2657 = vmatprep.subr.mxu0 0.0
    %2658 = vmatpush1.xpose.msra.mxu0 0.0
    %2659 = vmatprep.subr.mxu0 0.0
    %2660 = vmatpush1.xpose.msra.mxu0 0.0
    %2661 = vmatprep.subr.mxu0 0.0
    %2662 = vmatpush1.xpose.msra.mxu0 0.0
    %2663 = vmatprep.subr.mxu0 0.0
    %2664 = vmatpush1.xpose.msra.mxu0 0.0
    %2665 = vmatprep.subr.mxu0 0.0
    %2666 = vmatpush1.xpose.msra.mxu0 0.0
    %2667 = vmatprep.subr.mxu0 0.0
    %2668 = vmatpush1.xpose.msra.mxu0 0.0
    %2669 = vmatprep.subr.mxu0 0.0
    %2670 = vmatpush1.xpose.msra.mxu0 0.0
    %2671 = vmatprep.subr.mxu0 0.0
    %2672 = vmatpush1.xpose.msra.mxu0 0.0
    %2673 = vmatprep.subr.mxu0 0.0
    %2674 = vmatpush1.xpose.msra.mxu0 0.0
    %2675 = vmatprep.subr.mxu0 0.0
    %2676 = vmatpush1.xpose.msra.mxu0 0.0
    %2677 = vmatprep.subr.mxu0 0.0
    %2678 = vmatpush1.xpose.msra.mxu0 0.0
    %2679 = vmatprep.subr.mxu0 0.0
    %2680 = vmatpush1.xpose.msra.mxu0 0.0
    %2681 = vmatprep.subr.mxu0 0.0
    %2682 = vmatpush1.xpose.msra.mxu0 0.0
    %2683 = vmatprep.subr.mxu0 0.0
    %2684 = vmatpush1.xpose.msra.mxu0 0.0
    %2685 = vmatprep.mubr.f32.mxu0 0.0
    %2686 = vmatmul.mubr.f32.gmra.mrb[0].mxu0 %v2617
    %v2687 = vpop.f32.mrb[0].mxu0
    %v2688 = vadd.f32 0.0, %v2687
    %v2689 = vpop.f32.mrb[0].mxu0
    %2690 = vdwg.mxu0
    %v2691 = vmul.f32 %v2156, 0.35355338
    %v2692 = vmul.f32 %v2232, 0.35355338
    %v2693 = vmul.f32 %v2308, 0.35355338
    %v2694 = vmul.f32 %v2384, 0.35355338
    %v2695 = vmul.f32 %v2460, 0.35355338
    %v2696 = vmul.f32 %v2536, 0.35355338
    %v2697 = vmul.f32 %v2612, 0.35355338
    %v2698 = vmul.f32 %v2688, 0.35355338
    %v2699 = vadd.f32 %v2691, %v827
    %v2700 = vadd.f32 %v2692, %v831
    %v2701 = vadd.f32 %v2693, %v835
    %v2702 = vadd.f32 %v2694, %v839
    %v2703 = vadd.f32 %v2695, %v843
    %v2704 = vadd.f32 %v2696, %v847
    %v2705 = vadd.f32 %v2697, %v851
    %v2706 = vadd.f32 %v2698, %v855
    %v2707 = vsel %vm201, %v2699, -inf
    %2708 = vmax.xlane.f32.xlu0 %v2707
    %v2709 = vpop.xlane.xlu0 %2708
    %v2710 = vsel %vm201, %v2700, -inf
    %2711 = vmax.xlane.f32.xlu0 %v2710
    %v2712 = vpop.xlane.xlu0 %2711
    %v2713 = vsel %vm201, %v2701, -inf
    %2714 = vmax.xlane.f32.xlu0 %v2713
    %v2715 = vpop.xlane.xlu0 %2714
    %v2716 = vsel %vm201, %v2702, -inf
    %2717 = vmax.xlane.f32.xlu0 %v2716
    %v2718 = vpop.xlane.xlu0 %2717
    %v2719 = vsel %vm201, %v2703, -inf
    %2720 = vmax.xlane.f32.xlu0 %v2719
    %v2721 = vpop.xlane.xlu0 %2720
    %v2722 = vsel %vm201, %v2704, -inf
    %2723 = vmax.xlane.f32.xlu0 %v2722
    %v2724 = vpop.xlane.xlu0 %2723
    %v2725 = vsel %vm201, %v2705, -inf
    %2726 = vmax.xlane.f32.xlu0 %v2725
    %v2727 = vpop.xlane.xlu0 %2726
    %v2728 = vsel %vm201, %v2706, -inf
    %2729 = vmax.xlane.f32.xlu0 %v2728
    %v2730 = vpop.xlane.xlu0 %2729
    %v2731 = vsub.f32 %v2699, %v2709
    %v2732 = vsub.f32 %v2700, %v2712
    %v2733 = vsub.f32 %v2701, %v2715
    %v2734 = vsub.f32 %v2702, %v2718
    %v2735 = vsub.f32 %v2703, %v2721
    %v2736 = vsub.f32 %v2704, %v2724
    %v2737 = vsub.f32 %v2705, %v2727
    %v2738 = vsub.f32 %v2706, %v2730
    %v2739 = vmul.f32 %v2731, 1.442695
    %v2740 = vpow.pop %v2739
    %v2741 = vmul.f32 %v2732, 1.442695
    %v2742 = vpow.pop %v2741
    %v2743 = vmul.f32 %v2733, 1.442695
    %v2744 = vpow.pop %v2743
    %v2745 = vmul.f32 %v2734, 1.442695
    %v2746 = vpow.pop %v2745
    %v2747 = vmul.f32 %v2735, 1.442695
    %v2748 = vpow.pop %v2747
    %v2749 = vmul.f32 %v2736, 1.442695
    %v2750 = vpow.pop %v2749
    %v2751 = vmul.f32 %v2737, 1.442695
    %v2752 = vpow.pop %v2751
    %v2753 = vmul.f32 %v2738, 1.442695
    %v2754 = vpow.pop %v2753
    %v2755 = vsel %vm201, %v2740, 0.0
    %2756 = vadd.xlane.f32.xlu0 %v2755
    %v2757 = vpop.xlane.xlu0 %2756
    %v2758 = vsel %vm201, %v2742, 0.0
    %2759 = vadd.xlane.f32.xlu0 %v2758
    %v2760 = vpop.xlane.xlu0 %2759
    %v2761 = vsel %vm201, %v2744, 0.0
    %2762 = vadd.xlane.f32.xlu0 %v2761
    %v2763 = vpop.xlane.xlu0 %2762
    %v2764 = vsel %vm201, %v2746, 0.0
    %2765 = vadd.xlane.f32.xlu0 %v2764
    %v2766 = vpop.xlane.xlu0 %2765
    %v2767 = vsel %vm201, %v2748, 0.0
    %2768 = vadd.xlane.f32.xlu0 %v2767
    %v2769 = vpop.xlane.xlu0 %2768
    %v2770 = vsel %vm201, %v2750, 0.0
    %2771 = vadd.xlane.f32.xlu0 %v2770
    %v2772 = vpop.xlane.xlu0 %2771
    %v2773 = vsel %vm201, %v2752, 0.0
    %2774 = vadd.xlane.f32.xlu0 %v2773
    %v2775 = vpop.xlane.xlu0 %2774
    %v2776 = vsel %vm201, %v2754, 0.0
    %2777 = vadd.xlane.f32.xlu0 %v2776
    %v2778 = vpop.xlane.xlu0 %2777
    %v2779 = vrcp.pop %v2757
    %v2780 = vmul.f32 %v2740, %v2779
    %v2781 = vrcp.pop %v2760
    %v2782 = vmul.f32 %v2742, %v2781
    %v2783 = vrcp.pop %v2763
    %v2784 = vmul.f32 %v2744, %v2783
    %v2785 = vrcp.pop %v2766
    %v2786 = vmul.f32 %v2746, %v2785
    %v2787 = vrcp.pop %v2769
    %v2788 = vmul.f32 %v2748, %v2787
    %v2789 = vrcp.pop %v2772
    %v2790 = vmul.f32 %v2750, %v2789
    %v2791 = vrcp.pop %v2775
    %v2792 = vmul.f32 %v2752, %v2791
    %v2793 = vrcp.pop %v2778
    %v2794 = vmul.f32 %v2754, %v2793
    %2795 = vrot.lane.b32.xlu0 %v2061, 64
    %v2796 = vpop.permute.xlu0 %2795
    %v2799 = vsel %vm201, %v2780, 0
    %2801 = vmatprep.subr.mxu0 0.0
    %2802 = vmatpush1.msra.mxu0 %v2796
    %2803 = vmatprep.subr.mxu0 0.0
    %2804 = vmatpush1.msra.mxu0 0.0
    %2805 = vmatprep.subr.mxu0 0.0
    %2806 = vmatpush1.msra.mxu0 0.0
    %2807 = vmatprep.subr.mxu0 0.0
    %2808 = vmatpush1.msra.mxu0 0.0
    %2809 = vmatprep.subr.mxu0 0.0
    %2810 = vmatpush1.msra.mxu0 0.0
    %2811 = vmatprep.subr.mxu0 0.0
    %2812 = vmatpush1.msra.mxu0 0.0
    %2813 = vmatprep.subr.mxu0 0.0
    %2814 = vmatpush1.msra.mxu0 0.0
    %2815 = vmatprep.subr.mxu0 0.0
    %2816 = vmatpush1.msra.mxu0 0.0
    %2817 = vmatprep.subr.mxu0 0.0
    %2818 = vmatpush1.msra.mxu0 0.0
    %2819 = vmatprep.subr.mxu0 0.0
    %2820 = vmatpush1.msra.mxu0 0.0
    %2821 = vmatprep.subr.mxu0 0.0
    %2822 = vmatpush1.msra.mxu0 0.0
    %2823 = vmatprep.subr.mxu0 0.0
    %2824 = vmatpush1.msra.mxu0 0.0
    %2825 = vmatprep.subr.mxu0 0.0
    %2826 = vmatpush1.msra.mxu0 0.0
    %2827 = vmatprep.subr.mxu0 0.0
    %2828 = vmatpush1.msra.mxu0 0.0
    %2829 = vmatprep.subr.mxu0 0.0
    %2830 = vmatpush1.msra.mxu0 0.0
    %2831 = vmatprep.subr.mxu0 0.0
    %2832 = vmatpush1.msra.mxu0 0.0
    %2833 = vmatprep.subr.mxu0 0.0
    %2834 = vmatpush1.msra.mxu0 0.0
    %2835 = vmatprep.subr.mxu0 0.0
    %2836 = vmatpush1.msra.mxu0 0.0
    %2837 = vmatprep.subr.mxu0 0.0
    %2838 = vmatpush1.msra.mxu0 0.0
    %2839 = vmatprep.subr.mxu0 0.0
    %2840 = vmatpush1.msra.mxu0 0.0
    %2841 = vmatprep.subr.mxu0 0.0
    %2842 = vmatpush1.msra.mxu0 0.0
    %2843 = vmatprep.subr.mxu0 0.0
    %2844 = vmatpush1.msra.mxu0 0.0
    %2845 = vmatprep.subr.mxu0 0.0
    %2846 = vmatpush1.msra.mxu0 0.0
    %2847 = vmatprep.subr.mxu0 0.0
    %2848 = vmatpush1.msra.mxu0 0.0
    %2849 = vmatprep.subr.mxu0 0.0
    %2850 = vmatpush1.msra.mxu0 0.0
    %2851 = vmatprep.subr.mxu0 0.0
    %2852 = vmatpush1.msra.mxu0 0.0
    %2853 = vmatprep.subr.mxu0 0.0
    %2854 = vmatpush1.msra.mxu0 0.0
    %2855 = vmatprep.subr.mxu0 0.0
    %2856 = vmatpush1.msra.mxu0 0.0
    %2857 = vmatprep.subr.mxu0 0.0
    %2858 = vmatpush1.msra.mxu0 0.0
    %2859 = vmatprep.subr.mxu0 0.0
    %2860 = vmatpush1.msra.mxu0 0.0
    %2861 = vmatprep.subr.mxu0 0.0
    %2862 = vmatpush1.msra.mxu0 0.0
    %2863 = vmatprep.subr.mxu0 0.0
    %2864 = vmatpush1.msra.mxu0 0.0
    %2865 = vmatprep.mubr.f32.mxu0 0.0
    %2866 = vmatmul.mubr.f32.gmra.mrb[0].mxu0 %v2799
    %v2867 = vpop.f32.mrb[0].mxu0
    %v2868 = vadd.f32 0.0, %v2867
    %v2869 = vpop.f32.mrb[0].mxu0
    %2870 = vdwg.mxu0
    %2871 = vrot.lane.b32.xlu0 %v2066, 64
    %v2872 = vpop.permute.xlu0 %2871
    %v2875 = vsel %vm201, %v2782, 0
    %2877 = vmatprep.subr.mxu0 0.0
    %2878 = vmatpush1.msra.mxu0 %v2872
    %2879 = vmatprep.subr.mxu0 0.0
    %2880 = vmatpush1.msra.mxu0 0.0
    %2881 = vmatprep.subr.mxu0 0.0
    %2882 = vmatpush1.msra.mxu0 0.0
    %2883 = vmatprep.subr.mxu0 0.0
    %2884 = vmatpush1.msra.mxu0 0.0
    %2885 = vmatprep.subr.mxu0 0.0
    %2886 = vmatpush1.msra.mxu0 0.0
    %2887 = vmatprep.subr.mxu0 0.0
    %2888 = vmatpush1.msra.mxu0 0.0
    %2889 = vmatprep.subr.mxu0 0.0
    %2890 = vmatpush1.msra.mxu0 0.0
    %2891 = vmatprep.subr.mxu0 0.0
    %2892 = vmatpush1.msra.mxu0 0.0
    %2893 = vmatprep.subr.mxu0 0.0
    %2894 = vmatpush1.msra.mxu0 0.0
    %2895 = vmatprep.subr.mxu0 0.0
    %2896 = vmatpush1.msra.mxu0 0.0
    %2897 = vmatprep.subr.mxu0 0.0
    %2898 = vmatpush1.msra.mxu0 0.0
    %2899 = vmatprep.subr.mxu0 0.0
    %2900 = vmatpush1.msra.mxu0 0.0
    %2901 = vmatprep.subr.mxu0 0.0
    %2902 = vmatpush1.msra.mxu0 0.0
    %2903 = vmatprep.subr.mxu0 0.0
    %2904 = vmatpush1.msra.mxu0 0.0
    %2905 = vmatprep.subr.mxu0 0.0
    %2906 = vmatpush1.msra.mxu0 0.0
    %2907 = vmatprep.subr.mxu0 0.0
    %2908 = vmatpush1.msra.mxu0 0.0
    %2909 = vmatprep.subr.mxu0 0.0
    %2910 = vmatpush1.msra.mxu0 0.0
    %2911 = vmatprep.subr.mxu0 0.0
    %2912 = vmatpush1.msra.mxu0 0.0
    %2913 = vmatprep.subr.mxu0 0.0
    %2914 = vmatpush1.msra.mxu0 0.0
    %2915 = vmatprep.subr.mxu0 0.0
    %2916 = vmatpush1.msra.mxu0 0.0
    %2917 = vmatprep.subr.mxu0 0.0
    %2918 = vmatpush1.msra.mxu0 0.0
    %2919 = vmatprep.subr.mxu0 0.0
    %2920 = vmatpush1.msra.mxu0 0.0
    %2921 = vmatprep.subr.mxu0 0.0
    %2922 = vmatpush1.msra.mxu0 0.0
    %2923 = vmatprep.subr.mxu0 0.0
    %2924 = vmatpush1.msra.mxu0 0.0
    %2925 = vmatprep.subr.mxu0 0.0
    %2926 = vmatpush1.msra.mxu0 0.0
    %2927 = vmatprep.subr.mxu0 0.0
    %2928 = vmatpush1.msra.mxu0 0.0
    %2929 = vmatprep.subr.mxu0 0.0
    %2930 = vmatpush1.msra.mxu0 0.0
    %2931 = vmatprep.subr.mxu0 0.0
    %2932 = vmatpush1.msra.mxu0 0.0
    %2933 = vmatprep.subr.mxu0 0.0
    %2934 = vmatpush1.msra.mxu0 0.0
    %2935 = vmatprep.subr.mxu0 0.0
    %2936 = vmatpush1.msra.mxu0 0.0
    %2937 = vmatprep.subr.mxu0 0.0
    %2938 = vmatpush1.msra.mxu0 0.0
    %2939 = vmatprep.subr.mxu0 0.0
    %2940 = vmatpush1.msra.mxu0 0.0
    %2941 = vmatprep.mubr.f32.mxu0 0.0
    %2942 = vmatmul.mubr.f32.gmra.mrb[0].mxu0 %v2875
    %v2943 = vpop.f32.mrb[0].mxu0
    %v2944 = vadd.f32 0.0, %v2943
    %v2945 = vpop.f32.mrb[0].mxu0
    %2946 = vdwg.mxu0
    %2947 = vrot.lane.b32.xlu0 %v2072, 64
    %v2948 = vpop.permute.xlu0 %2947
    %v2951 = vsel %vm201, %v2784, 0
    %2953 = vmatprep.subr.mxu0 0.0
    %2954 = vmatpush1.msra.mxu0 %v2948
    %2955 = vmatprep.subr.mxu0 0.0
    %2956 = vmatpush1.msra.mxu0 0.0
    %2957 = vmatprep.subr.mxu0 0.0
    %2958 = vmatpush1.msra.mxu0 0.0
    %2959 = vmatprep.subr.mxu0 0.0
    %2960 = vmatpush1.msra.mxu0 0.0
    %2961 = vmatprep.subr.mxu0 0.0
    %2962 = vmatpush1.msra.mxu0 0.0
    %2963 = vmatprep.subr.mxu0 0.0
    %2964 = vmatpush1.msra.mxu0 0.0
    %2965 = vmatprep.subr.mxu0 0.0
    %2966 = vmatpush1.msra.mxu0 0.0
    %2967 = vmatprep.subr.mxu0 0.0
    %2968 = vmatpush1.msra.mxu0 0.0
    %2969 = vmatprep.subr.mxu0 0.0
    %2970 = vmatpush1.msra.mxu0 0.0
    %2971 = vmatprep.subr.mxu0 0.0
    %2972 = vmatpush1.msra.mxu0 0.0
    %2973 = vmatprep.subr.mxu0 0.0
    %2974 = vmatpush1.msra.mxu0 0.0
    %2975 = vmatprep.subr.mxu0 0.0
    %2976 = vmatpush1.msra.mxu0 0.0
    %2977 = vmatprep.subr.mxu0 0.0
    %2978 = vmatpush1.msra.mxu0 0.0
    %2979 = vmatprep.subr.mxu0 0.0
    %2980 = vmatpush1.msra.mxu0 0.0
    %2981 = vmatprep.subr.mxu0 0.0
    %2982 = vmatpush1.msra.mxu0 0.0
    %2983 = vmatprep.subr.mxu0 0.0
    %2984 = vmatpush1.msra.mxu0 0.0
    %2985 = vmatprep.subr.mxu0 0.0
    %2986 = vmatpush1.msra.mxu0 0.0
    %2987 = vmatprep.subr.mxu0 0.0
    %2988 = vmatpush1.msra.mxu0 0.0
    %2989 = vmatprep.subr.mxu0 0.0
    %2990 = vmatpush1.msra.mxu0 0.0
    %2991 = vmatprep.subr.mxu0 0.0
    %2992 = vmatpush1.msra.mxu0 0.0
    %2993 = vmatprep.subr.mxu0 0.0
    %2994 = vmatpush1.msra.mxu0 0.0
    %2995 = vmatprep.subr.mxu0 0.0
    %2996 = vmatpush1.msra.mxu0 0.0
    %2997 = vmatprep.subr.mxu0 0.0
    %2998 = vmatpush1.msra.mxu0 0.0
    %2999 = vmatprep.subr.mxu0 0.0
    %3000 = vmatpush1.msra.mxu0 0.0
    %3001 = vmatprep.subr.mxu0 0.0
    %3002 = vmatpush1.msra.mxu0 0.0
    %3003 = vmatprep.subr.mxu0 0.0
    %3004 = vmatpush1.msra.mxu0 0.0
    %3005 = vmatprep.subr.mxu0 0.0
    %3006 = vmatpush1.msra.mxu0 0.0
    %3007 = vmatprep.subr.mxu0 0.0
    %3008 = vmatpush1.msra.mxu0 0.0
    %3009 = vmatprep.subr.mxu0 0.0
    %3010 = vmatpush1.msra.mxu0 0.0
    %3011 = vmatprep.subr.mxu0 0.0
    %3012 = vmatpush1.msra.mxu0 0.0
    %3013 = vmatprep.subr.mxu0 0.0
    %3014 = vmatpush1.msra.mxu0 0.0
    %3015 = vmatprep.subr.mxu0 0.0
    %3016 = vmatpush1.msra.mxu0 0.0
    %3017 = vmatprep.mubr.f32.mxu0 0.0
    %3018 = vmatmul.mubr.f32.gmra.mrb[0].mxu0 %v2951
    %v3019 = vpop.f32.mrb[0].mxu0
    %v3020 = vadd.f32 0.0, %v3019
    %v3021 = vpop.f32.mrb[0].mxu0
    %3022 = vdwg.mxu0
    %3023 = vrot.lane.b32.xlu0 %v2074, 64
    %v3024 = vpop.permute.xlu0 %3023
    %v3027 = vsel %vm201, %v2786, 0
    %3029 = vmatprep.subr.mxu0 0.0
    %3030 = vmatpush1.msra.mxu0 %v3024
    %3031 = vmatprep.subr.mxu0 0.0
    %3032 = vmatpush1.msra.mxu0 0.0
    %3033 = vmatprep.subr.mxu0 0.0
    %3034 = vmatpush1.msra.mxu0 0.0
    %3035 = vmatprep.subr.mxu0 0.0
    %3036 = vmatpush1.msra.mxu0 0.0
    %3037 = vmatprep.subr.mxu0 0.0
    %3038 = vmatpush1.msra.mxu0 0.0
    %3039 = vmatprep.subr.mxu0 0.0
    %3040 = vmatpush1.msra.mxu0 0.0
    %3041 = vmatprep.subr.mxu0 0.0
    %3042 = vmatpush1.msra.mxu0 0.0
    %3043 = vmatprep.subr.mxu0 0.0
    %3044 = vmatpush1.msra.mxu0 0.0
    %3045 = vmatprep.subr.mxu0 0.0
    %3046 = vmatpush1.msra.mxu0 0.0
    %3047 = vmatprep.subr.mxu0 0.0
    %3048 = vmatpush1.msra.mxu0 0.0
    %3049 = vmatprep.subr.mxu0 0.0
    %3050 = vmatpush1.msra.mxu0 0.0
    %3051 = vmatprep.subr.mxu0 0.0
    %3052 = vmatpush1.msra.mxu0 0.0
    %3053 = vmatprep.subr.mxu0 0.0
    %3054 = vmatpush1.msra.mxu0 0.0
    %3055 = vmatprep.subr.mxu0 0.0
    %3056 = vmatpush1.msra.mxu0 0.0
    %3057 = vmatprep.subr.mxu0 0.0
    %3058 = vmatpush1.msra.mxu0 0.0
    %3059 = vmatprep.subr.mxu0 0.0
    %3060 = vmatpush1.msra.mxu0 0.0
    %3061 = vmatprep.subr.mxu0 0.0
    %3062 = vmatpush1.msra.mxu0 0.0
    %3063 = vmatprep.subr.mxu0 0.0
    %3064 = vmatpush1.msra.mxu0 0.0
    %3065 = vmatprep.subr.mxu0 0.0
    %3066 = vmatpush1.msra.mxu0 0.0
    %3067 = vmatprep.subr.mxu0 0.0
    %3068 = vmatpush1.msra.mxu0 0.0
    %3069 = vmatprep.subr.mxu0 0.0
    %3070 = vmatpush1.msra.mxu0 0.0
    %3071 = vmatprep.subr.mxu0 0.0
    %3072 = vmatpush1.msra.mxu0 0.0
    %3073 = vmatprep.subr.mxu0 0.0
    %3074 = vmatpush1.msra.mxu0 0.0
    %3075 = vmatprep.subr.mxu0 0.0
    %3076 = vmatpush1.msra.mxu0 0.0
    %3077 = vmatprep.subr.mxu0 0.0
    %3078 = vmatpush1.msra.mxu0 0.0
    %3079 = vmatprep.subr.mxu0 0.0
    %3080 = vmatpush1.msra.mxu0 0.0
    %3081 = vmatprep.subr.mxu0 0.0
    %3082 = vmatpush1.msra.mxu0 0.0
    %3083 = vmatprep.subr.mxu0 0.0
    %3084 = vmatpush1.msra.mxu0 0.0
    %3085 = vmatprep.subr.mxu0 0.0
    %3086 = vmatpush1.msra.mxu0 0.0
    %3087 = vmatprep.subr.mxu0 0.0
    %3088 = vmatpush1.msra.mxu0 0.0
    %3089 = vmatprep.subr.mxu0 0.0
    %3090 = vmatpush1.msra.mxu0 0.0
    %3091 = vmatprep.subr.mxu0 0.0
    %3092 = vmatpush1.msra.mxu0 0.0
    %3093 = vmatprep.mubr.f32.mxu0 0.0
    %3094 = vmatmul.mubr.f32.gmra.mrb[0].mxu0 %v3027
    %v3095 = vpop.f32.mrb[0].mxu0
    %v3096 = vadd.f32 0.0, %v3095
    %v3097 = vpop.f32.mrb[0].mxu0
    %3098 = vdwg.mxu0
    %3099 = vrot.lane.b32.xlu0 %v2076, 64
    %v3100 = vpop.permute.xlu0 %3099
    %v3103 = vsel %vm201, %v2788, 0
    %3105 = vmatprep.subr.mxu0 0.0
    %3106 = vmatpush1.msra.mxu0 %v3100
    %3107 = vmatprep.subr.mxu0 0.0
    %3108 = vmatpush1.msra.mxu0 0.0
    %3109 = vmatprep.subr.mxu0 0.0
    %3110 = vmatpush1.msra.mxu0 0.0
    %3111 = vmatprep.subr.mxu0 0.0
    %3112 = vmatpush1.msra.mxu0 0.0
    %3113 = vmatprep.subr.mxu0 0.0
    %3114 = vmatpush1.msra.mxu0 0.0
    %3115 = vmatprep.subr.mxu0 0.0
    %3116 = vmatpush1.msra.mxu0 0.0
    %3117 = vmatprep.subr.mxu0 0.0
    %3118 = vmatpush1.msra.mxu0 0.0
    %3119 = vmatprep.subr.mxu0 0.0
    %3120 = vmatpush1.msra.mxu0 0.0
    %3121 = vmatprep.subr.mxu0 0.0
    %3122 = vmatpush1.msra.mxu0 0.0
    %3123 = vmatprep.subr.mxu0 0.0
    %3124 = vmatpush1.msra.mxu0 0.0
    %3125 = vmatprep.subr.mxu0 0.0
    %3126 = vmatpush1.msra.mxu0 0.0
    %3127 = vmatprep.subr.mxu0 0.0
    %3128 = vmatpush1.msra.mxu0 0.0
    %3129 = vmatprep.subr.mxu0 0.0
    %3130 = vmatpush1.msra.mxu0 0.0
    %3131 = vmatprep.subr.mxu0 0.0
    %3132 = vmatpush1.msra.mxu0 0.0
    %3133 = vmatprep.subr.mxu0 0.0
    %3134 = vmatpush1.msra.mxu0 0.0
    %3135 = vmatprep.subr.mxu0 0.0
    %3136 = vmatpush1.msra.mxu0 0.0
    %3137 = vmatprep.subr.mxu0 0.0
    %3138 = vmatpush1.msra.mxu0 0.0
    %3139 = vmatprep.subr.mxu0 0.0
    %3140 = vmatpush1.msra.mxu0 0.0
    %3141 = vmatprep.subr.mxu0 0.0
    %3142 = vmatpush1.msra.mxu0 0.0
    %3143 = vmatprep.subr.mxu0 0.0
    %3144 = vmatpush1.msra.mxu0 0.0
    %3145 = vmatprep.subr.mxu0 0.0
    %3146 = vmatpush1.msra.mxu0 0.0
    %3147 = vmatprep.subr.mxu0 0.0
    %3148 = vmatpush1.msra.mxu0 0.0
    %3149 = vmatprep.subr.mxu0 0.0
    %3150 = vmatpush1.msra.mxu0 0.0
    %3151 = vmatprep.subr.mxu0 0.0
    %3152 = vmatpush1.msra.mxu0 0.0
    %3153 = vmatprep.subr.mxu0 0.0
    %3154 = vmatpush1.msra.mxu0 0.0
    %3155 = vmatprep.subr.mxu0 0.0
    %3156 = vmatpush1.msra.mxu0 0.0
    %3157 = vmatprep.subr.mxu0 0.0
    %3158 = vmatpush1.msra.mxu0 0.0
    %3159 = vmatprep.subr.mxu0 0.0
    %3160 = vmatpush1.msra.mxu0 0.0
    %3161 = vmatprep.subr.mxu0 0.0
    %3162 = vmatpush1.msra.mxu0 0.0
    %3163 = vmatprep.subr.mxu0 0.0
    %3164 = vmatpush1.msra.mxu0 0.0
    %3165 = vmatprep.subr.mxu0 0.0
    %3166 = vmatpush1.msra.mxu0 0.0
    %3167 = vmatprep.subr.mxu0 0.0
    %3168 = vmatpush1.msra.mxu0 0.0
    %3169 = vmatprep.mubr.f32.mxu0 0.0
    %3170 = vmatmul.mubr.f32.gmra.mrb[0].mxu0 %v3103
    %v3171 = vpop.f32.mrb[0].mxu0
    %v3172 = vadd.f32 0.0, %v3171
    %v3173 = vpop.f32.mrb[0].mxu0
    %3174 = vdwg.mxu0
    %3175 = vrot.lane.b32.xlu0 %v2078, 64
    %v3176 = vpop.permute.xlu0 %3175
    %v3179 = vsel %vm201, %v2790, 0
    %3181 = vmatprep.subr.mxu0 0.0
    %3182 = vmatpush1.msra.mxu0 %v3176
    %3183 = vmatprep.subr.mxu0 0.0
    %3184 = vmatpush1.msra.mxu0 0.0
    %3185 = vmatprep.subr.mxu0 0.0
    %3186 = vmatpush1.msra.mxu0 0.0
    %3187 = vmatprep.subr.mxu0 0.0
    %3188 = vmatpush1.msra.mxu0 0.0
    %3189 = vmatprep.subr.mxu0 0.0
    %3190 = vmatpush1.msra.mxu0 0.0
    %3191 = vmatprep.subr.mxu0 0.0
    %3192 = vmatpush1.msra.mxu0 0.0
    %3193 = vmatprep.subr.mxu0 0.0
    %3194 = vmatpush1.msra.mxu0 0.0
    %3195 = vmatprep.subr.mxu0 0.0
    %3196 = vmatpush1.msra.mxu0 0.0
    %3197 = vmatprep.subr.mxu0 0.0
    %3198 = vmatpush1.msra.mxu0 0.0
    %3199 = vmatprep.subr.mxu0 0.0
    %3200 = vmatpush1.msra.mxu0 0.0
    %3201 = vmatprep.subr.mxu0 0.0
    %3202 = vmatpush1.msra.mxu0 0.0
    %3203 = vmatprep.subr.mxu0 0.0
    %3204 = vmatpush1.msra.mxu0 0.0
    %3205 = vmatprep.subr.mxu0 0.0
    %3206 = vmatpush1.msra.mxu0 0.0
    %3207 = vmatprep.subr.mxu0 0.0
    %3208 = vmatpush1.msra.mxu0 0.0
    %3209 = vmatprep.subr.mxu0 0.0
    %3210 = vmatpush1.msra.mxu0 0.0
    %3211 = vmatprep.subr.mxu0 0.0
    %3212 = vmatpush1.msra.mxu0 0.0
    %3213 = vmatprep.subr.mxu0 0.0
    %3214 = vmatpush1.msra.mxu0 0.0
    %3215 = vmatprep.subr.mxu0 0.0
    %3216 = vmatpush1.msra.mxu0 0.0
    %3217 = vmatprep.subr.mxu0 0.0
    %3218 = vmatpush1.msra.mxu0 0.0
    %3219 = vmatprep.subr.mxu0 0.0
    %3220 = vmatpush1.msra.mxu0 0.0
    %3221 = vmatprep.subr.mxu0 0.0
    %3222 = vmatpush1.msra.mxu0 0.0
    %3223 = vmatprep.subr.mxu0 0.0
    %3224 = vmatpush1.msra.mxu0 0.0
    %3225 = vmatprep.subr.mxu0 0.0
    %3226 = vmatpush1.msra.mxu0 0.0
    %3227 = vmatprep.subr.mxu0 0.0
    %3228 = vmatpush1.msra.mxu0 0.0
    %3229 = vmatprep.subr.mxu0 0.0
    %3230 = vmatpush1.msra.mxu0 0.0
    %3231 = vmatprep.subr.mxu0 0.0
    %3232 = vmatpush1.msra.mxu0 0.0
    %3233 = vmatprep.subr.mxu0 0.0
    %3234 = vmatpush1.msra.mxu0 0.0
    %3235 = vmatprep.subr.mxu0 0.0
    %3236 = vmatpush1.msra.mxu0 0.0
    %3237 = vmatprep.subr.mxu0 0.0
    %3238 = vmatpush1.msra.mxu0 0.0
    %3239 = vmatprep.subr.mxu0 0.0
    %3240 = vmatpush1.msra.mxu0 0.0
    %3241 = vmatprep.subr.mxu0 0.0
    %3242 = vmatpush1.msra.mxu0 0.0
    %3243 = vmatprep.subr.mxu0 0.0
    %3244 = vmatpush1.msra.mxu0 0.0
    %3245 = vmatprep.mubr.f32.mxu0 0.0
    %3246 = vmatmul.mubr.f32.gmra.mrb[0].mxu0 %v3179
    %v3247 = vpop.f32.mrb[0].mxu0
    %v3248 = vadd.f32 0.0, %v3247
    %v3249 = vpop.f32.mrb[0].mxu0
    %3250 = vdwg.mxu0
    %3251 = vrot.lane.b32.xlu0 %v2080, 64
    %v3252 = vpop.permute.xlu0 %3251
    %v3255 = vsel %vm201, %v2792, 0
    %3257 = vmatprep.subr.mxu0 0.0
    %3258 = vmatpush1.msra.mxu0 %v3252
    %3259 = vmatprep.subr.mxu0 0.0
    %3260 = vmatpush1.msra.mxu0 0.0
    %3261 = vmatprep.subr.mxu0 0.0
    %3262 = vmatpush1.msra.mxu0 0.0
    %3263 = vmatprep.subr.mxu0 0.0
    %3264 = vmatpush1.msra.mxu0 0.0
    %3265 = vmatprep.subr.mxu0 0.0
    %3266 = vmatpush1.msra.mxu0 0.0
    %3267 = vmatprep.subr.mxu0 0.0
    %3268 = vmatpush1.msra.mxu0 0.0
    %3269 = vmatprep.subr.mxu0 0.0
    %3270 = vmatpush1.msra.mxu0 0.0
    %3271 = vmatprep.subr.mxu0 0.0
    %3272 = vmatpush1.msra.mxu0 0.0
    %3273 = vmatprep.subr.mxu0 0.0
    %3274 = vmatpush1.msra.mxu0 0.0
    %3275 = vmatprep.subr.mxu0 0.0
    %3276 = vmatpush1.msra.mxu0 0.0
    %3277 = vmatprep.subr.mxu0 0.0
    %3278 = vmatpush1.msra.mxu0 0.0
    %3279 = vmatprep.subr.mxu0 0.0
    %3280 = vmatpush1.msra.mxu0 0.0
    %3281 = vmatprep.subr.mxu0 0.0
    %3282 = vmatpush1.msra.mxu0 0.0
    %3283 = vmatprep.subr.mxu0 0.0
    %3284 = vmatpush1.msra.mxu0 0.0
    %3285 = vmatprep.subr.mxu0 0.0
    %3286 = vmatpush1.msra.mxu0 0.0
    %3287 = vmatprep.subr.mxu0 0.0
    %3288 = vmatpush1.msra.mxu0 0.0
    %3289 = vmatprep.subr.mxu0 0.0
    %3290 = vmatpush1.msra.mxu0 0.0
    %3291 = vmatprep.subr.mxu0 0.0
    %3292 = vmatpush1.msra.mxu0 0.0
    %3293 = vmatprep.subr.mxu0 0.0
    %3294 = vmatpush1.msra.mxu0 0.0
    %3295 = vmatprep.subr.mxu0 0.0
    %3296 = vmatpush1.msra.mxu0 0.0
    %3297 = vmatprep.subr.mxu0 0.0
    %3298 = vmatpush1.msra.mxu0 0.0
    %3299 = vmatprep.subr.mxu0 0.0
    %3300 = vmatpush1.msra.mxu0 0.0
    %3301 = vmatprep.subr.mxu0 0.0
    %3302 = vmatpush1.msra.mxu0 0.0
    %3303 = vmatprep.subr.mxu0 0.0
    %3304 = vmatpush1.msra.mxu0 0.0
    %3305 = vmatprep.subr.mxu0 0.0
    %3306 = vmatpush1.msra.mxu0 0.0
    %3307 = vmatprep.subr.mxu0 0.0
    %3308 = vmatpush1.msra.mxu0 0.0
    %3309 = vmatprep.subr.mxu0 0.0
    %3310 = vmatpush1.msra.mxu0 0.0
    %3311 = vmatprep.subr.mxu0 0.0
    %3312 = vmatpush1.msra.mxu0 0.0
    %3313 = vmatprep.subr.mxu0 0.0
    %3314 = vmatpush1.msra.mxu0 0.0
    %3315 = vmatprep.subr.mxu0 0.0
    %3316 = vmatpush1.msra.mxu0 0.0
    %3317 = vmatprep.subr.mxu0 0.0
    %3318 = vmatpush1.msra.mxu0 0.0
    %3319 = vmatprep.subr.mxu0 0.0
    %3320 = vmatpush1.msra.mxu0 0.0
    %3321 = vmatprep.mubr.f32.mxu0 0.0
    %3322 = vmatmul.mubr.f32.gmra.mrb[0].mxu0 %v3255
    %v3323 = vpop.f32.mrb[0].mxu0
    %v3324 = vadd.f32 0.0, %v3323
    %v3325 = vpop.f32.mrb[0].mxu0
    %3326 = vdwg.mxu0
    %3327 = vrot.lane.b32.xlu0 %v2082, 64
    %v3328 = vpop.permute.xlu0 %3327
    %v3331 = vsel %vm201, %v2794, 0
    %3333 = vmatprep.subr.mxu0 0.0
    %3334 = vmatpush1.msra.mxu0 %v3328
    %3335 = vmatprep.subr.mxu0 0.0
    %3336 = vmatpush1.msra.mxu0 0.0
    %3337 = vmatprep.subr.mxu0 0.0
    %3338 = vmatpush1.msra.mxu0 0.0
    %3339 = vmatprep.subr.mxu0 0.0
    %3340 = vmatpush1.msra.mxu0 0.0
    %3341 = vmatprep.subr.mxu0 0.0
    %3342 = vmatpush1.msra.mxu0 0.0
    %3343 = vmatprep.subr.mxu0 0.0
    %3344 = vmatpush1.msra.mxu0 0.0
    %3345 = vmatprep.subr.mxu0 0.0
    %3346 = vmatpush1.msra.mxu0 0.0
    %3347 = vmatprep.subr.mxu0 0.0
    %3348 = vmatpush1.msra.mxu0 0.0
    %3349 = vmatprep.subr.mxu0 0.0
    %3350 = vmatpush1.msra.mxu0 0.0
    %3351 = vmatprep.subr.mxu0 0.0
    %3352 = vmatpush1.msra.mxu0 0.0
    %3353 = vmatprep.subr.mxu0 0.0
    %3354 = vmatpush1.msra.mxu0 0.0
    %3355 = vmatprep.subr.mxu0 0.0
    %3356 = vmatpush1.msra.mxu0 0.0
    %3357 = vmatprep.subr.mxu0 0.0
    %3358 = vmatpush1.msra.mxu0 0.0
    %3359 = vmatprep.subr.mxu0 0.0
    %3360 = vmatpush1.msra.mxu0 0.0
    %3361 = vmatprep.subr.mxu0 0.0
    %3362 = vmatpush1.msra.mxu0 0.0
    %3363 = vmatprep.subr.mxu0 0.0
    %3364 = vmatpush1.msra.mxu0 0.0
    %3365 = vmatprep.subr.mxu0 0.0
    %3366 = vmatpush1.msra.mxu0 0.0
    %3367 = vmatprep.subr.mxu0 0.0
    %3368 = vmatpush1.msra.mxu0 0.0
    %3369 = vmatprep.subr.mxu0 0.0
    %3370 = vmatpush1.msra.mxu0 0.0
    %3371 = vmatprep.subr.mxu0 0.0
    %3372 = vmatpush1.msra.mxu0 0.0
    %3373 = vmatprep.subr.mxu0 0.0
    %3374 = vmatpush1.msra.mxu0 0.0
    %3375 = vmatprep.subr.mxu0 0.0
    %3376 = vmatpush1.msra.mxu0 0.0
    %3377 = vmatprep.subr.mxu0 0.0
    %3378 = vmatpush1.msra.mxu0 0.0
    %3379 = vmatprep.subr.mxu0 0.0
    %3380 = vmatpush1.msra.mxu0 0.0
    %3381 = vmatprep.subr.mxu0 0.0
    %3382 = vmatpush1.msra.mxu0 0.0
    %3383 = vmatprep.subr.mxu0 0.0
    %3384 = vmatpush1.msra.mxu0 0.0
    %3385 = vmatprep.subr.mxu0 0.0
    %3386 = vmatpush1.msra.mxu0 0.0
    %3387 = vmatprep.subr.mxu0 0.0
    %3388 = vmatpush1.msra.mxu0 0.0
    %3389 = vmatprep.subr.mxu0 0.0
    %3390 = vmatpush1.msra.mxu0 0.0
    %3391 = vmatprep.subr.mxu0 0.0
    %3392 = vmatpush1.msra.mxu0 0.0
    %3393 = vmatprep.subr.mxu0 0.0
    %3394 = vmatpush1.msra.mxu0 0.0
    %3395 = vmatprep.subr.mxu0 0.0
    %3396 = vmatpush1.msra.mxu0 0.0
    %3397 = vmatprep.mubr.f32.mxu0 0.0
    %3398 = vmatmul.mubr.f32.gmra.mrb[0].mxu0 %v3331
    %v3399 = vpop.f32.mrb[0].mxu0
    %v3400 = vadd.f32 0.0, %v3399
    %v3401 = vpop.f32.mrb[0].mxu0
    %3402 = vdwg.mxu0
    %3405 = vrot.lane.b32.xlu0 %v3020, 8
    %v3406 = vpop.permute.xlu0 %3405
    %3407 = vrot.lane.b32.xlu0 %v3096, 8
    %v3408 = vpop.permute.xlu0 %3407
    %3413 = vrot.lane.b32.xlu0 %v3172, 16
    %v3414 = vpop.permute.xlu0 %3413
    %3415 = vrot.lane.b32.xlu0 %v3248, 16
    %v3416 = vpop.permute.xlu0 %3415
    %3421 = vrot.lane.b32.xlu0 %v3324, 24
    %v3422 = vpop.permute.xlu0 %3421
    %3423 = vrot.lane.b32.xlu0 %v3400, 24
    %v3424 = vpop.permute.xlu0 %3423
    %v3427 = vsel %vm201, %v2868, %v3406
    %v3428 = vsel %vm201, %v2944, %v3408
    %v3429 = vsel %vm1594, %v3427, %v3414
    %v3430 = vsel %vm1594, %v3428, %v3416
    %v3431 = vsel %vm1597, %v3429, %v3422
    %v3432 = vsel %vm1597, %v3430, %v3424
    %s3433 = scalar_lea.vmem %s5, 32
    %v3434 = vld [vmem:[%s3433] sm:$0xff]
    %v3435 = vld [vmem:[%s3433 + $0x8] sm:$0xff]
    %v3436 = vld [vmem:[%s3433 + $0x10] sm:$0xff]
    %v3437 = vld [vmem:[%s3433 + $0x18] sm:$0xff]
    %v3438 = vlaneseq
    %v3439 = vshrl.u32 %v3438, 7
    %v3440 = vsub.s32 0, %v3439
    %v3441 = vrot.slane %v1972, %v3440
    %v3443 = vsel %vm48, %v3431, 0
    %v3446 = vsel %vm48, %v3432, 0
    %3448 = vmatprep.subr.mxu0 0.0
    %3449 = vmatpush1.msra.mxu0 %v3434
    %3450 = vmatprep.subr.mxu0 0.0
    %3451 = vmatpush1.msra.mxu0 %v3435
    %3452 = vmatprep.subr.mxu0 0.0
    %3453 = vmatpush1.msra.mxu0 %v3436
    %3454 = vmatprep.subr.mxu0 0.0
    %3455 = vmatpush1.msra.mxu0 %v3437
    %3456 = vmatprep.subr.mxu0 0.0
    %3457 = vmatpush1.msra.mxu0 0.0
    %3458 = vmatprep.subr.mxu0 0.0
    %3459 = vmatpush1.msra.mxu0 0.0
    %3460 = vmatprep.subr.mxu0 0.0
    %3461 = vmatpush1.msra.mxu0 0.0
    %3462 = vmatprep.subr.mxu0 0.0
    %3463 = vmatpush1.msra.mxu0 0.0
    %3464 = vmatprep.subr.mxu0 0.0
    %3465 = vmatpush1.msra.mxu0 0.0
    %3466 = vmatprep.subr.mxu0 0.0
    %3467 = vmatpush1.msra.mxu0 0.0
    %3468 = vmatprep.subr.mxu0 0.0
    %3469 = vmatpush1.msra.mxu0 0.0
    %3470 = vmatprep.subr.mxu0 0.0
    %3471 = vmatpush1.msra.mxu0 0.0
    %3472 = vmatprep.subr.mxu0 0.0
    %3473 = vmatpush1.msra.mxu0 0.0
    %3474 = vmatprep.subr.mxu0 0.0
    %3475 = vmatpush1.msra.mxu0 0.0
    %3476 = vmatprep.subr.mxu0 0.0
    %3477 = vmatpush1.msra.mxu0 0.0
    %3478 = vmatprep.subr.mxu0 0.0
    %3479 = vmatpush1.msra.mxu0 0.0
    %3480 = vmatprep.subr.mxu0 0.0
    %3481 = vmatpush1.msra.mxu0 0.0
    %3482 = vmatprep.subr.mxu0 0.0
    %3483 = vmatpush1.msra.mxu0 0.0
    %3484 = vmatprep.subr.mxu0 0.0
    %3485 = vmatpush1.msra.mxu0 0.0
    %3486 = vmatprep.subr.mxu0 0.0
    %3487 = vmatpush1.msra.mxu0 0.0
    %3488 = vmatprep.subr.mxu0 0.0
    %3489 = vmatpush1.msra.mxu0 0.0
    %3490 = vmatprep.subr.mxu0 0.0
    %3491 = vmatpush1.msra.mxu0 0.0
    %3492 = vmatprep.subr.mxu0 0.0
    %3493 = vmatpush1.msra.mxu0 0.0
    %3494 = vmatprep.subr.mxu0 0.0
    %3495 = vmatpush1.msra.mxu0 0.0
    %3496 = vmatprep.subr.mxu0 0.0
    %3497 = vmatpush1.msra.mxu0 0.0
    %3498 = vmatprep.subr.mxu0 0.0
    %3499 = vmatpush1.msra.mxu0 0.0
    %3500 = vmatprep.subr.mxu0 0.0
    %3501 = vmatpush1.msra.mxu0 0.0
    %3502 = vmatprep.subr.mxu0 0.0
    %3503 = vmatpush1.msra.mxu0 0.0
    %3504 = vmatprep.subr.mxu0 0.0
    %3505 = vmatpush1.msra.mxu0 0.0
    %3506 = vmatprep.subr.mxu0 0.0
    %3507 = vmatpush1.msra.mxu0 0.0
    %3508 = vmatprep.subr.mxu0 0.0
    %3509 = vmatpush1.msra.mxu0 0.0
    %3510 = vmatprep.subr.mxu0 0.0
    %3511 = vmatpush1.msra.mxu0 0.0
    %3512 = vmatprep.mubr.f32.mxu0 0.0
    %3513 = vmatmul.mubr.f32.gmra.mrb[0].mxu0 %v3443
    %v3514 = vpop.f32.mrb[0].mxu0
    %v3515 = vadd.f32 %v3441, %v3514
    %v3516 = vpop.f32.mrb[0].mxu0
    %3517 = vmatprep.mubr.f32.mxu0 0.0
    %3518 = vmatmul.mubr.f32.gmra.mrb[0].mxu0 %v3446
    %v3519 = vpop.f32.mrb[0].mxu0
    %v3520 = vadd.f32 %v3441, %v3519
    %v3521 = vpop.f32.mrb[0].mxu0
    %3522 = vdwg.mxu0
    %v3523 = vadd.f32 %v3515, %v1968
    %v3524 = vadd.f32 %v3520, %v1969
    %v3525 = vsel %vm48, %v3523, 0.0
    %3526 = vadd.xlane.f32.xlu0 %v3525
    %v3527 = vpop.xlane.xlu0 %3526
    %v3528 = vsel %vm48, %v3524, 0.0
    %3529 = vadd.xlane.f32.xlu0 %v3528
    %v3530 = vpop.xlane.xlu0 %3529
    %v3531 = vmul.f32 %v3527, %v55
    %v3532 = vmul.f32 %v3530, %v55
    %v3533 = vsub.f32 %v3523, %v3531
    %v3534 = vsub.f32 %v3524, %v3532
    %v3535 = vmul.f32 %v3533, %v3533
    %v3536 = vmul.f32 %v3534, %v3534
    %v3537 = vsel %vm48, %v3535, 0.0
    %3538 = vadd.xlane.f32.xlu0 %v3537
    %v3539 = vpop.xlane.xlu0 %3538
    %v3540 = vsel %vm48, %v3536, 0.0
    %3541 = vadd.xlane.f32.xlu0 %v3540
    %v3542 = vpop.xlane.xlu0 %3541
    %v3543 = vmul.f32 %v3539, %v55
    %v3544 = vmul.f32 %v3542, %v55
    %v3545 = vadd.f32 %v3543, 1e-05
    %v3546 = vadd.f32 %v3544, 1e-05
    %v3547 = vrsqrt.pop %v3545
    %v3548 = vrsqrt.pop %v3546
    %v3549 = vmul.f32 %v3533, %v3547
    %v3550 = vmul.f32 %v3534, %v3548
    %v3551 = vlaneseq
    %v3552 = vshrl.u32 %v3551, 7
    %v3553 = vsub.s32 0, %v3552
    %v3554 = vrot.slane %v1973, %v3553
    %v3555 = vmul.f32 %v3549, %v3554
    %v3556 = vmul.f32 %v3550, %v3554
    %v3557 = vlaneseq
    %v3558 = vshrl.u32 %v3557, 7
    %v3559 = vsub.s32 0, %v3558
    %v3560 = vrot.slane %v1974, %v3559
    %v3561 = vadd.f32 %v3555, %v3560
    %v3562 = vadd.f32 %v3556, %v3560
    %s3563 = scalar_lea.vmem %s6, 32
    %v3564 = vld [vmem:[%s3563] sm:$0xff]
    %v3565 = vld [vmem:[%s3563 + $0x8] sm:$0xff]
    %v3566 = vld [vmem:[%s3563 + $0x10] sm:$0xff]
    %v3567 = vld [vmem:[%s3563 + $0x18] sm:$0xff]
    %v3568 = vlaneseq
    %v3569 = vshrl.u32 %v3568, 7
    %v3570 = vsub.s32 0, %v3569
    %v3571 = vrot.slane %v1975, %v3570
    %v3573 = vsel %vm48, %v3561, 0
    %v3576 = vsel %vm48, %v3562, 0
    %3578 = vmatprep.subr.mxu0 0.0
    %3579 = vmatpush1.msra.mxu0 %v3564
    %3580 = vmatprep.subr.mxu0 0.0
    %3581 = vmatpush1.msra.mxu0 %v3565
    %3582 = vmatprep.subr.mxu0 0.0
    %3583 = vmatpush1.msra.mxu0 %v3566
    %3584 = vmatprep.subr.mxu0 0.0
    %3585 = vmatpush1.msra.mxu0 %v3567
    %3586 = vmatprep.subr.mxu0 0.0
    %3587 = vmatpush1.msra.mxu0 0.0
    %3588 = vmatprep.subr.mxu0 0.0
    %3589 = vmatpush1.msra.mxu0 0.0
    %3590 = vmatprep.subr.mxu0 0.0
    %3591 = vmatpush1.msra.mxu0 0.0
    %3592 = vmatprep.subr.mxu0 0.0
    %3593 = vmatpush1.msra.mxu0 0.0
    %3594 = vmatprep.subr.mxu0 0.0
    %3595 = vmatpush1.msra.mxu0 0.0
    %3596 = vmatprep.subr.mxu0 0.0
    %3597 = vmatpush1.msra.mxu0 0.0
    %3598 = vmatprep.subr.mxu0 0.0
    %3599 = vmatpush1.msra.mxu0 0.0
    %3600 = vmatprep.subr.mxu0 0.0
    %3601 = vmatpush1.msra.mxu0 0.0
    %3602 = vmatprep.subr.mxu0 0.0
    %3603 = vmatpush1.msra.mxu0 0.0
    %3604 = vmatprep.subr.mxu0 0.0
    %3605 = vmatpush1.msra.mxu0 0.0
    %3606 = vmatprep.subr.mxu0 0.0
    %3607 = vmatpush1.msra.mxu0 0.0
    %3608 = vmatprep.subr.mxu0 0.0
    %3609 = vmatpush1.msra.mxu0 0.0
    %3610 = vmatprep.subr.mxu0 0.0
    %3611 = vmatpush1.msra.mxu0 0.0
    %3612 = vmatprep.subr.mxu0 0.0
    %3613 = vmatpush1.msra.mxu0 0.0
    %3614 = vmatprep.subr.mxu0 0.0
    %3615 = vmatpush1.msra.mxu0 0.0
    %3616 = vmatprep.subr.mxu0 0.0
    %3617 = vmatpush1.msra.mxu0 0.0
    %3618 = vmatprep.subr.mxu0 0.0
    %3619 = vmatpush1.msra.mxu0 0.0
    %3620 = vmatprep.subr.mxu0 0.0
    %3621 = vmatpush1.msra.mxu0 0.0
    %3622 = vmatprep.subr.mxu0 0.0
    %3623 = vmatpush1.msra.mxu0 0.0
    %3624 = vmatprep.subr.mxu0 0.0
    %3625 = vmatpush1.msra.mxu0 0.0
    %3626 = vmatprep.subr.mxu0 0.0
    %3627 = vmatpush1.msra.mxu0 0.0
    %3628 = vmatprep.subr.mxu0 0.0
    %3629 = vmatpush1.msra.mxu0 0.0
    %3630 = vmatprep.subr.mxu0 0.0
    %3631 = vmatpush1.msra.mxu0 0.0
    %3632 = vmatprep.subr.mxu0 0.0
    %3633 = vmatpush1.msra.mxu0 0.0
    %3634 = vmatprep.subr.mxu0 0.0
    %3635 = vmatpush1.msra.mxu0 0.0
    %3636 = vmatprep.subr.mxu0 0.0
    %3637 = vmatpush1.msra.mxu0 0.0
    %3638 = vmatprep.subr.mxu0 0.0
    %3639 = vmatpush1.msra.mxu0 0.0
    %3640 = vmatprep.subr.mxu0 0.0
    %3641 = vmatpush1.msra.mxu0 0.0
    %3642 = vmatprep.mubr.f32.mxu0 0.0
    %3643 = vmatmul.mubr.f32.gmra.mrb[0].mxu0 %v3573
    %v3644 = vpop.f32.mrb[0].mxu0
    %v3645 = vadd.f32 %v3571, %v3644
    %v3646 = vpop.f32.mrb[0].mxu0
    %3647 = vmatprep.mubr.f32.mxu0 0.0
    %3648 = vmatmul.mubr.f32.gmra.mrb[0].mxu0 %v3576
    %v3649 = vpop.f32.mrb[0].mxu0
    %v3650 = vadd.f32 %v3571, %v3649
    %v3651 = vpop.f32.mrb[0].mxu0
    %3652 = vdwg.mxu0
    %v3653 = vmul.f32 %v3645, %v3645
    %v3654 = vmul.f32 %v3650, %v3650
    %v3655 = vmul.f32 %v3645, %v3653
    %v3656 = vmul.f32 %v3650, %v3654
    %v3657 = vmul.f32 %v3655, 0.044715
    %v3658 = vmul.f32 %v3656, 0.044715
    %v3659 = vadd.f32 %v3645, %v3657
    %v3660 = vadd.f32 %v3650, %v3658
    %v3661 = vmul.f32 %v3659, 0.7978846
    %v3662 = vmul.f32 %v3660, 0.7978846
    %v3663 = vtanh.pop %v3661
    %v3664 = vtanh.pop %v3662
    %v3665 = vadd.f32 %v3663, 1.0
    %v3666 = vadd.f32 %v3664, 1.0
    %v3667 = vmul.f32 %v3665, 0.5
    %v3668 = vmul.f32 %v3666, 0.5
    %v3669 = vmul.f32 %v3645, %v3667
    %v3670 = vmul.f32 %v3650, %v3668
    %s3671 = scalar_lea.vmem %s7, 64
    %v3672 = vld [vmem:[%s3671] sm:$0xff]
    %v3673 = vld [vmem:[%s3671 + $0x8] sm:$0xff]
    %v3674 = vld [vmem:[%s3671 + $0x10] sm:$0xff]
    %v3675 = vld [vmem:[%s3671 + $0x18] sm:$0xff]
    %v3676 = vld [vmem:[%s3671 + $0x20] sm:$0xff]
    %v3677 = vld [vmem:[%s3671 + $0x28] sm:$0xff]
    %v3678 = vld [vmem:[%s3671 + $0x30] sm:$0xff]
    %v3679 = vld [vmem:[%s3671 + $0x38] sm:$0xff]
    %v3680 = vlaneseq
    %v3681 = vshrl.u32 %v3680, 7
    %v3682 = vsub.s32 0, %v3681
    %v3683 = vrot.slane %v1976, %v3682
    %v3685 = vsel %vm1848, %v3669, 0
    %v3688 = vsel %vm1848, %v3670, 0
    %3690 = vmatprep.subr.mxu0 0.0
    %3691 = vmatpush1.msra.mxu0 %v3672
    %3692 = vmatprep.subr.mxu0 0.0
    %3693 = vmatpush1.msra.mxu0 %v3673
    %3694 = vmatprep.subr.mxu0 0.0
    %3695 = vmatpush1.msra.mxu0 %v3674
    %3696 = vmatprep.subr.mxu0 0.0
    %3697 = vmatpush1.msra.mxu0 %v3675
    %3698 = vmatprep.subr.mxu0 0.0
    %3699 = vmatpush1.msra.mxu0 %v3676
    %3700 = vmatprep.subr.mxu0 0.0
    %3701 = vmatpush1.msra.mxu0 %v3677
    %3702 = vmatprep.subr.mxu0 0.0
    %3703 = vmatpush1.msra.mxu0 %v3678
    %3704 = vmatprep.subr.mxu0 0.0
    %3705 = vmatpush1.msra.mxu0 %v3679
    %3706 = vmatprep.subr.mxu0 0.0
    %3707 = vmatpush1.msra.mxu0 0.0
    %3708 = vmatprep.subr.mxu0 0.0
    %3709 = vmatpush1.msra.mxu0 0.0
    %3710 = vmatprep.subr.mxu0 0.0
    %3711 = vmatpush1.msra.mxu0 0.0
    %3712 = vmatprep.subr.mxu0 0.0
    %3713 = vmatpush1.msra.mxu0 0.0
    %3714 = vmatprep.subr.mxu0 0.0
    %3715 = vmatpush1.msra.mxu0 0.0
    %3716 = vmatprep.subr.mxu0 0.0
    %3717 = vmatpush1.msra.mxu0 0.0
    %3718 = vmatprep.subr.mxu0 0.0
    %3719 = vmatpush1.msra.mxu0 0.0
    %3720 = vmatprep.subr.mxu0 0.0
    %3721 = vmatpush1.msra.mxu0 0.0
    %3722 = vmatprep.subr.mxu0 0.0
    %3723 = vmatpush1.msra.mxu0 0.0
    %3724 = vmatprep.subr.mxu0 0.0
    %3725 = vmatpush1.msra.mxu0 0.0
    %3726 = vmatprep.subr.mxu0 0.0
    %3727 = vmatpush1.msra.mxu0 0.0
    %3728 = vmatprep.subr.mxu0 0.0
    %3729 = vmatpush1.msra.mxu0 0.0
    %3730 = vmatprep.subr.mxu0 0.0
    %3731 = vmatpush1.msra.mxu0 0.0
    %3732 = vmatprep.subr.mxu0 0.0
    %3733 = vmatpush1.msra.mxu0 0.0
    %3734 = vmatprep.subr.mxu0 0.0
    %3735 = vmatpush1.msra.mxu0 0.0
    %3736 = vmatprep.subr.mxu0 0.0
    %3737 = vmatpush1.msra.mxu0 0.0
    %3738 = vmatprep.subr.mxu0 0.0
    %3739 = vmatpush1.msra.mxu0 0.0
    %3740 = vmatprep.subr.mxu0 0.0
    %3741 = vmatpush1.msra.mxu0 0.0
    %3742 = vmatprep.subr.mxu0 0.0
    %3743 = vmatpush1.msra.mxu0 0.0
    %3744 = vmatprep.subr.mxu0 0.0
    %3745 = vmatpush1.msra.mxu0 0.0
    %3746 = vmatprep.subr.mxu0 0.0
    %3747 = vmatpush1.msra.mxu0 0.0
    %3748 = vmatprep.subr.mxu0 0.0
    %3749 = vmatpush1.msra.mxu0 0.0
    %3750 = vmatprep.subr.mxu0 0.0
    %3751 = vmatpush1.msra.mxu0 0.0
    %3752 = vmatprep.subr.mxu0 0.0
    %3753 = vmatpush1.msra.mxu0 0.0
    %3754 = vmatprep.mubr.f32.mxu0 0.0
    %3755 = vmatmul.mubr.f32.gmra.mrb[0].mxu0 %v3685
    %v3756 = vpop.f32.mrb[0].mxu0
    %v3757 = vadd.f32 %v3683, %v3756
    %v3758 = vpop.f32.mrb[0].mxu0
    %3759 = vmatprep.mubr.f32.mxu0 0.0
    %3760 = vmatmul.mubr.f32.gmra.mrb[0].mxu0 %v3688
    %v3761 = vpop.f32.mrb[0].mxu0
    %v3762 = vadd.f32 %v3683, %v3761
    %v3763 = vpop.f32.mrb[0].mxu0
    %3764 = vdwg.mxu0
    %v3765 = vadd.f32 %v3757, %v3561
    %v3766 = vadd.f32 %v3762, %v3562
    %v3767 = vsel %vm48, %v3765, 0.0
    %3768 = vadd.xlane.f32.xlu0 %v3767
    %v3769 = vpop.xlane.xlu0 %3768
    %v3770 = vsel %vm48, %v3766, 0.0
    %3771 = vadd.xlane.f32.xlu0 %v3770
    %v3772 = vpop.xlane.xlu0 %3771
    %v3773 = vmul.f32 %v3769, %v55
    %v3774 = vmul.f32 %v3772, %v55
    %v3775 = vsub.f32 %v3765, %v3773
    %v3776 = vsub.f32 %v3766, %v3774
    %v3777 = vmul.f32 %v3775, %v3775
    %v3778 = vmul.f32 %v3776, %v3776
    %v3779 = vsel %vm48, %v3777, 0.0
    %3780 = vadd.xlane.f32.xlu0 %v3779
    %v3781 = vpop.xlane.xlu0 %3780
    %v3782 = vsel %vm48, %v3778, 0.0
    %3783 = vadd.xlane.f32.xlu0 %v3782
    %v3784 = vpop.xlane.xlu0 %3783
    %v3785 = vmul.f32 %v3781, %v55
    %v3786 = vmul.f32 %v3784, %v55
    %v3787 = vadd.f32 %v3785, 1e-05
    %v3788 = vadd.f32 %v3786, 1e-05
    %v3789 = vrsqrt.pop %v3787
    %v3790 = vrsqrt.pop %v3788
    %v3791 = vmul.f32 %v3775, %v3789
    %v3792 = vmul.f32 %v3776, %v3790
    %v3793 = vlaneseq
    %v3794 = vshrl.u32 %v3793, 7
    %v3795 = vsub.s32 0, %v3794
    %v3796 = vrot.slane %v1977, %v3795
    %v3797 = vmul.f32 %v3791, %v3796
    %v3798 = vmul.f32 %v3792, %v3796
    %v3799 = vlaneseq
    %v3800 = vshrl.u32 %v3799, 7
    %v3801 = vsub.s32 0, %v3800
    %v3802 = vrot.slane %v1978, %v3801
    %v3803 = vadd.f32 %v3797, %v3802
    %v3804 = vadd.f32 %v3798, %v3802
    %v3805 = vld [vmem:[%s8] sm:$0xff]
    %v3806 = vld [vmem:[%s8 + $0x8] sm:$0xff]
    %v3807 = vld [vmem:[%s8 + $0x10] sm:$0xff]
    %v3808 = vld [vmem:[%s8 + $0x18] sm:$0xff]
    %v3809 = vld [vmem:[%s2 + $0x2] sm:$0x1]
    %v3810 = vlaneseq
    %v3811 = vshrl.u32 %v3810, 7
    %v3812 = vsub.s32 0, %v3811
    %v3813 = vrot.slane %v3809, %v3812
    %v3816 = vrot.slane %v3804, 7
    %vm3817 = vcmask 1041409
    %v3818 = vsel %vm3817, %v3816, %v3803
    %v3819 = vsel %vm48, %v3818, 0
    %3821 = vmatprep.subr.mxu0 0.0
    %3822 = vmatpush1.msra.mxu0 %v3805
    %3823 = vmatprep.subr.mxu0 0.0
    %3824 = vmatpush1.msra.mxu0 %v3806
    %3825 = vmatprep.subr.mxu0 0.0
    %3826 = vmatpush1.msra.mxu0 %v3807
    %3827 = vmatprep.subr.mxu0 0.0
    %3828 = vmatpush1.msra.mxu0 %v3808
    %3829 = vmatprep.subr.mxu0 0.0
    %3830 = vmatpush1.msra.mxu0 0.0
    %3831 = vmatprep.subr.mxu0 0.0
    %3832 = vmatpush1.msra.mxu0 0.0
    %3833 = vmatprep.subr.mxu0 0.0
    %3834 = vmatpush1.msra.mxu0 0.0
    %3835 = vmatprep.subr.mxu0 0.0
    %3836 = vmatpush1.msra.mxu0 0.0
    %3837 = vmatprep.subr.mxu0 0.0
    %3838 = vmatpush1.msra.mxu0 0.0
    %3839 = vmatprep.subr.mxu0 0.0
    %3840 = vmatpush1.msra.mxu0 0.0
    %3841 = vmatprep.subr.mxu0 0.0
    %3842 = vmatpush1.msra.mxu0 0.0
    %3843 = vmatprep.subr.mxu0 0.0
    %3844 = vmatpush1.msra.mxu0 0.0
    %3845 = vmatprep.subr.mxu0 0.0
    %3846 = vmatpush1.msra.mxu0 0.0
    %3847 = vmatprep.subr.mxu0 0.0
    %3848 = vmatpush1.msra.mxu0 0.0
    %3849 = vmatprep.subr.mxu0 0.0
    %3850 = vmatpush1.msra.mxu0 0.0
    %3851 = vmatprep.subr.mxu0 0.0
    %3852 = vmatpush1.msra.mxu0 0.0
    %3853 = vmatprep.subr.mxu0 0.0
    %3854 = vmatpush1.msra.mxu0 0.0
    %3855 = vmatprep.subr.mxu0 0.0
    %3856 = vmatpush1.msra.mxu0 0.0
    %3857 = vmatprep.subr.mxu0 0.0
    %3858 = vmatpush1.msra.mxu0 0.0
    %3859 = vmatprep.subr.mxu0 0.0
    %3860 = vmatpush1.msra.mxu0 0.0
    %3861 = vmatprep.subr.mxu0 0.0
    %3862 = vmatpush1.msra.mxu0 0.0
    %3863 = vmatprep.subr.mxu0 0.0
    %3864 = vmatpush1.msra.mxu0 0.0
    %3865 = vmatprep.subr.mxu0 0.0
    %3866 = vmatpush1.msra.mxu0 0.0
    %3867 = vmatprep.subr.mxu0 0.0
    %3868 = vmatpush1.msra.mxu0 0.0
    %3869 = vmatprep.subr.mxu0 0.0
    %3870 = vmatpush1.msra.mxu0 0.0
    %3871 = vmatprep.subr.mxu0 0.0
    %3872 = vmatpush1.msra.mxu0 0.0
    %3873 = vmatprep.subr.mxu0 0.0
    %3874 = vmatpush1.msra.mxu0 0.0
    %3875 = vmatprep.subr.mxu0 0.0
    %3876 = vmatpush1.msra.mxu0 0.0
    %3877 = vmatprep.subr.mxu0 0.0
    %3878 = vmatpush1.msra.mxu0 0.0
    %3879 = vmatprep.subr.mxu0 0.0
    %3880 = vmatpush1.msra.mxu0 0.0
    %3881 = vmatprep.subr.mxu0 0.0
    %3882 = vmatpush1.msra.mxu0 0.0
    %3883 = vmatprep.subr.mxu0 0.0
    %3884 = vmatpush1.msra.mxu0 0.0
    %3885 = vmatprep.mubr.f32.mxu0 0.0
    %3886 = vmatmul.mubr.f32.gmra.mrb[0].mxu0 %v3819
    %v3887 = vpop.f32.mrb[0].mxu0
    %v3888 = vadd.f32 %v3813, %v3887
    %v3889 = vpop.f32.mrb[0].mxu0
    %3890 = vdwg.mxu0
    %v3891 = vtanh.pop %v3888
    %v3892 = vld [vmem:[%s9] sm:$0xff]
    %v3893 = vld [vmem:[%s9 + $0x8] sm:$0xff]
    %v3894 = vld [vmem:[%s9 + $0x10] sm:$0xff]
    %v3895 = vld [vmem:[%s9 + $0x18] sm:$0xff]
    %v3896 = vld [vmem:[%s2 + $0x3] sm:$0x1]
    %v3897 = vlaneseq
    %v3898 = vshrl.u32 %v3897, 7
    %v3899 = vsub.s32 0, %v3898
    %v3900 = vrot.slane %v3896, %v3899
    %v3902 = vsel %vm48, %v3891, 0
    %3904 = vmatprep.subr.mxu0 0.0
    %3905 = vmatpush1.msra.mxu0 %v3892
    %3906 = vmatprep.subr.mxu0 0.0
    %3907 = vmatpush1.msra.mxu0 %v3893
    %3908 = vmatprep.subr.mxu0 0.0
    %3909 = vmatpush1.msra.mxu0 %v3894
    %3910 = vmatprep.subr.mxu0 0.0
    %3911 = vmatpush1.msra.mxu0 %v3895
    %3912 = vmatprep.subr.mxu0 0.0
    %3913 = vmatpush1.msra.mxu0 0.0
    %3914 = vmatprep.subr.mxu0 0.0
    %3915 = vmatpush1.msra.mxu0 0.0
    %3916 = vmatprep.subr.mxu0 0.0
    %3917 = vmatpush1.msra.mxu0 0.0
    %3918 = vmatprep.subr.mxu0 0.0
    %3919 = vmatpush1.msra.mxu0 0.0
    %3920 = vmatprep.subr.mxu0 0.0
    %3921 = vmatpush1.msra.mxu0 0.0
    %3922 = vmatprep.subr.mxu0 0.0
    %3923 = vmatpush1.msra.mxu0 0.0
    %3924 = vmatprep.subr.mxu0 0.0
    %3925 = vmatpush1.msra.mxu0 0.0
    %3926 = vmatprep.subr.mxu0 0.0
    %3927 = vmatpush1.msra.mxu0 0.0
    %3928 = vmatprep.subr.mxu0 0.0
    %3929 = vmatpush1.msra.mxu0 0.0
    %3930 = vmatprep.subr.mxu0 0.0
    %3931 = vmatpush1.msra.mxu0 0.0
    %3932 = vmatprep.subr.mxu0 0.0
    %3933 = vmatpush1.msra.mxu0 0.0
    %3934 = vmatprep.subr.mxu0 0.0
    %3935 = vmatpush1.msra.mxu0 0.0
    %3936 = vmatprep.subr.mxu0 0.0
    %3937 = vmatpush1.msra.mxu0 0.0
    %3938 = vmatprep.subr.mxu0 0.0
    %3939 = vmatpush1.msra.mxu0 0.0
    %3940 = vmatprep.subr.mxu0 0.0
    %3941 = vmatpush1.msra.mxu0 0.0
    %3942 = vmatprep.subr.mxu0 0.0
    %3943 = vmatpush1.msra.mxu0 0.0
    %3944 = vmatprep.subr.mxu0 0.0
    %3945 = vmatpush1.msra.mxu0 0.0
    %3946 = vmatprep.subr.mxu0 0.0
    %3947 = vmatpush1.msra.mxu0 0.0
    %3948 = vmatprep.subr.mxu0 0.0
    %3949 = vmatpush1.msra.mxu0 0.0
    %3950 = vmatprep.subr.mxu0 0.0
    %3951 = vmatpush1.msra.mxu0 0.0
    %3952 = vmatprep.subr.mxu0 0.0
    %3953 = vmatpush1.msra.mxu0 0.0
    %3954 = vmatprep.subr.mxu0 0.0
    %3955 = vmatpush1.msra.mxu0 0.0
    %3956 = vmatprep.subr.mxu0 0.0
    %3957 = vmatpush1.msra.mxu0 0.0
    %3958 = vmatprep.subr.mxu0 0.0
    %3959 = vmatpush1.msra.mxu0 0.0
    %3960 = vmatprep.subr.mxu0 0.0
    %3961 = vmatpush1.msra.mxu0 0.0
    %3962 = vmatprep.subr.mxu0 0.0
    %3963 = vmatpush1.msra.mxu0 0.0
    %3964 = vmatprep.subr.mxu0 0.0
    %3965 = vmatpush1.msra.mxu0 0.0
    %3966 = vmatprep.subr.mxu0 0.0
    %3967 = vmatpush1.msra.mxu0 0.0
    %3968 = vmatprep.mubr.f32.mxu0 0.0
    %3969 = vmatmul.mubr.f32.gmra.mrb[0].mxu0 %v3902
    %v3970 = vpop.f32.mrb[0].mxu0
    %v3971 = vadd.f32 %v3900, %v3970
    %v3972 = vpop.f32.mrb[0].mxu0
    %3973 = vdwg.mxu0
    %vm3974 = vcmask 9216
    %3975 = vst.msk [vmem:[#allocation2] sm:$0x3] %vm3974, %v3971
    // Predicated region
    $region42: #{model_forward.1} parent=1 // pred_check
      _
    $region43: #{model_forward.1} parent=1 // pred_check_branch
      %3977 = sbr.rel (0) target = $region45
    $region44: #{model_forward.1} parent=1 // pred_region
      %s3979 = ssub.s32 32, 32
      %3980 = vsyncadd [#allocation3], %s3979
      %s3982 = sshll.u32 [#allocation2], 4
      %s3983 = int_to_ptr.vmem [resolvable:$true] %s3982
      %3985 = dma.vmem_to_hbm [thread:$0]  %s3983, 32, %s10, [#allocation3]
    $region45: #{model_forward.1} parent=1 // pred_fallthru
      _
    // Predicated region
    $region46: #{model_forward.1} parent=1 // pred_check
      _
    $region47: #{model_forward.1} parent=1 // pred_check_branch
      %3987 = sbr.rel (0) target = $region49
    $region48: #{model_forward.1} parent=1 // pred_region
      %3988 = dma.done [#allocation3], 32
    $region49: #{model_forward.1} parent=1 // pred_fallthru
      _
    %3989 = vsyncpa [#allocation3], 1

</llo_original>
